<compile_context>
chip_gen: v7x
topology: tpu7x:2x2x1
jax: 0.10.0
libtpu: 0.0.40
codegen_flags: <defaults>
</compile_context>

<pallas_src>
import jax
import jax.numpy as jnp
from jax import lax
from jax.experimental import pallas as pl
from jax.experimental.pallas import tpu as pltpu

K = 3
STRIDE = 2
PAD = 1
IC = 30
OC = 70
OCP = 128          # OC zero-padded to a full lane tile (lane-dense matmul N / stores)
NPAR = 8           # number of (od%2, oh%2, ow%2) output parity classes
TILE_ROWS = 512    # row (N) tile; >=512 rows ~ 85% of HBM roofline per measured data

_PARITIES = tuple((pd, ph, pw) for pd in (0, 1) for ph in (0, 1) for pw in (0, 1))
_OFFSETS = _PARITIES   # input slab offsets (ad, ah, aw) use the same enumeration


def _convt_silu_kernel(x_ref, w_ref, b_ref, o_ref):
    # x_ref: (tile, 8*IC) bf16   polyphase im2col rows for this tile
    # w_ref: (8*IC, 8*OCP) bf16  block-structured polyphase weights (VMEM-resident)
    # b_ref: (1, 8*OCP)    f32
    # o_ref: (tile, 8*OCP) f32
    v1 = jnp.dot(x_ref[...], w_ref[...],
                 preferred_element_type=jnp.float32) + b_ref[...]
    o_ref[...] = v1 * jax.nn.sigmoid(v1)            # SiLU: v1 * sigmoid(v1)


def prepare_params(weight, bias):
    """weight: (IC, OC, K, K, K) f32; bias: (OC,) f32 -> (w_cat bf16, b_cat f32).

    w_cat[a*IC + ic, p*OCP + oc] holds the flipped ConvTranspose weight of the unique
    kernel tap connecting input-offset slab a = (ad, ah, aw) to output parity class
    p = (pd, ph, pw); zero where that (slab, parity) pair has no tap."""
    # flipped, channel-transposed kernel: w_flip[kd,kh,kw,ic,oc] = weight[ic,oc,K-1-kd,...]
    w_flip = jnp.transpose(weight[:, :, ::-1, ::-1, ::-1], (2, 3, 4, 0, 1))
    w_cat = jnp.zeros((NPAR, IC, NPAR, OCP), jnp.float32)
    for p_idx, (pd, ph, pw) in enumerate(_PARITIES):
        for a_idx, (ad, ah, aw) in enumerate(_OFFSETS):
            # even output positions along an axis only see the centre tap (offset 0)
            if (pd == 0 and ad == 1) or (ph == 0 and ah == 1) or (pw == 0 and aw == 1):
                continue
            kd = 1 if pd == 0 else 2 * ad
            kh = 1 if ph == 0 else 2 * ah
            kw = 1 if pw == 0 else 2 * aw
            w_cat = w_cat.at[a_idx, :, p_idx, :OC].set(w_flip[kd, kh, kw])
    w_cat = w_cat.reshape(NPAR * IC, NPAR * OCP).astype(jnp.bfloat16)
    b_cat = jnp.tile(jnp.pad(bias, (0, OCP - OC)).reshape(1, OCP), (1, NPAR))
    return w_cat, b_cat


@jax.jit
def conv_transpose3d_silu(x, w_cat, b_cat):
    """x: (1, IC, D, H, W) f32 -> (1, OC, 2D-1, 2H-1, 2W-1) f32 (ConvTranspose3d + SiLU)."""
    _, _, d, h, w = x.shape
    n = d * h * w

    # ---- polyphase im2col (plain-JAX glue, bf16): 8 shifted slabs of the raw input ----
    x_cl = jnp.transpose(x[0], (1, 2, 3, 0)).astype(jnp.bfloat16)   # (D, H, W, IC)
    x_hp = jnp.pad(x_cl, ((0, 1), (0, 1), (0, 1), (0, 0)))          # high-pad by 1
    slabs = [x_hp[a:a + d, b:b + h, c:c + w, :].reshape(n, IC)
             for (a, b, c) in _OFFSETS]
    x_cat = jnp.concatenate(slabs, axis=-1)                         # (N, 8*IC) bf16

    # ---- row tiling: pad N up to a multiple of the row tile ----
    tile = min(TILE_ROWS, ((n + 7) // 8) * 8)
    n_pad = pl.cdiv(n, tile) * tile
    if n_pad != n:
        x_cat = jnp.pad(x_cat, ((0, n_pad - n), (0, 0)))

    out = pl.pallas_call(
        _convt_silu_kernel,
        out_shape=jax.ShapeDtypeStruct((n_pad, NPAR * OCP), jnp.float32),
        grid=(n_pad // tile,),
        in_specs=[
            pl.BlockSpec((tile, NPAR * IC), lambda g: (g, 0)),      # row tile (pipelined)
            pl.BlockSpec((NPAR * IC, NPAR * OCP), lambda g: (0, 0)),  # weights: resident
            pl.BlockSpec((1, NPAR * OCP), lambda g: (0, 0)),        # bias: resident
        ],
        out_specs=pl.BlockSpec((tile, NPAR * OCP), lambda g: (g, 0)),
        compiler_params=pltpu.CompilerParams(
            dimension_semantics=("parallel",)),                     # row-sharded on v7x
    )(x_cat, w_cat, b_cat)

    # ---- interleave the 8 parity classes back into the full output grid ----
    o = out[:n].reshape(d, h, w, 2, 2, 2, OCP)                      # (i, j, k, pd, ph, pw, oc)
    o = jnp.transpose(o, (0, 3, 1, 4, 2, 5, 6))                     # (i, pd, j, ph, k, pw, oc)
    o = o.reshape(2 * d, 2 * h, 2 * w, OCP)
    o = o[:2 * d - 1, :2 * h - 1, :2 * w - 1, :OC]                  # (OD, OH, OW, OC)
    return jnp.transpose(o, (3, 0, 1, 2))[None]                     # (1, OC, OD, OH, OW)


def _reference(x, weight, bias):
    """Pure-JAX reference (same math via lax.conv_general_dilated, f32 HIGHEST)."""
    pe = K - 1 - PAD
    w_prep = jnp.transpose(weight[:, :, ::-1, ::-1, ::-1], (2, 3, 4, 0, 1))  # DHWIO
    v1 = lax.conv_general_dilated(
        jnp.transpose(x, (0, 2, 3, 4, 1)),            # NDHWC
        w_prep,
        window_strides=(1, 1, 1),
        padding=[(pe, pe)] * 3,
        lhs_dilation=(STRIDE,) * 3,
        dimension_numbers=("NDHWC", "DHWIO", "NDHWC"),
        precision=lax.Precision.HIGHEST,
    ) + bias
    v3 = v1 * jax.nn.sigmoid(v1)
    return jnp.transpose(v3, (0, 4, 1, 2, 3))          # NCDHW


if __name__ == "__main__":
    key = jax.random.PRNGKey(0)
    kw_, kb_, kx_ = jax.random.split(key, 3)
    # Deterministic synthetic parameters (shapes from nn.ConvTranspose3d(30, 70, 3, stride=2, padding=1)).
    weight = jax.random.normal(kw_, (IC, OC, K, K, K), jnp.float32) * 0.05
    bias = jax.random.normal(kb_, (OC,), jnp.float32) * 0.05
    # Input shape from the original module spec: (1, 30, 2, 28, 35).
    x1 = jax.random.normal(kx_, (1, IC, 2, 28, 35), jnp.float32)

    w_cat, b_cat = prepare_params(weight, bias)        # hoisted out of the per-call path
    out = conv_transpose3d_silu(x1, w_cat, b_cat)
    out = jax.block_until_ready(out)

    ref = jax.block_until_ready(_reference(x1, weight, bias))
    assert out.shape == (1, OC, 3, 55, 69), out.shape
    assert jnp.allclose(out, ref, rtol=5e-2, atol=5e-2), float(jnp.max(jnp.abs(out - ref)))
    print("KERNEL_OK")
</pallas_src>

<mosaic_0001>
module attributes {stable_mosaic.version = 11 : i64} {
  func.func @_convt_silu_kernel(%arg0: i32, %arg1: memref<512x240xbf16, #tpu.memory_space<vmem>>, %arg2: memref<240x1024xbf16, #tpu.memory_space<vmem>>, %arg3: memref<1x1024xf32, #tpu.memory_space<vmem>>, %arg4: memref<512x1024xf32, #tpu.memory_space<vmem>>) attributes {dimension_semantics = [#tpu.dimension_semantics<parallel>], iteration_bounds = array<i64: 4>, scalar_prefetch = 0 : i64, scratch_operands = 0 : i64, tpu.core_type = #tpu.core_type<tc>, window_params = [{transform_indices = @transform_0, window_bounds = array<i64: 512, 240>}, {pipeline_mode = #tpu.pipeline_mode<synchronous>, transform_indices = @transform_1, window_bounds = array<i64: 240, 1024>}, {pipeline_mode = #tpu.pipeline_mode<synchronous>, transform_indices = @transform_2, window_bounds = array<i64: 1, 1024>}, {transform_indices = @transform_3, window_bounds = array<i64: 512, 1024>}]} {
    %c0 = arith.constant 0 : index
    %c0_0 = arith.constant 0 : index
    %0 = vector.load %arg1[%c0, %c0_0] : memref<512x240xbf16, #tpu.memory_space<vmem>>, vector<512x240xbf16>
    %c0_1 = arith.constant 0 : index
    %c0_2 = arith.constant 0 : index
    %1 = vector.load %arg2[%c0_1, %c0_2] : memref<240x1024xbf16, #tpu.memory_space<vmem>>, vector<240x1024xbf16>
    %cst = arith.constant dense<0.000000e+00> : vector<512x1024xf32>
    %2 = tpu.matmul %0, %1, %cst {dimension_numbers = #tpu.dot_dimension_numbers<[1], [0], [0], [1], [0, 0, 1, 1], [], []>} : vector<512x240xbf16>, vector<240x1024xbf16>, vector<512x1024xf32> -> vector<512x1024xf32>
    %c0_3 = arith.constant 0 : index
    %c0_4 = arith.constant 0 : index
    %3 = vector.load %arg3[%c0_3, %c0_4] : memref<1x1024xf32, #tpu.memory_space<vmem>>, vector<1x1024xf32>
    %4 = vector.broadcast %3 : vector<1x1024xf32> to vector<512x1024xf32>
    %5 = arith.addf %2, %4 : vector<512x1024xf32>
    %6 = arith.negf %5 : vector<512x1024xf32>
    %7 = math.exp %6 : vector<512x1024xf32>
    %cst_5 = arith.constant 1.000000e+00 : f32
    %8 = vector.broadcast %cst_5 : f32 to vector<512x1024xf32>
    %9 = arith.addf %8, %7 : vector<512x1024xf32>
    %10 = arith.divf %8, %9 : vector<512x1024xf32>
    %11 = arith.mulf %5, %10 : vector<512x1024xf32>
    %c0_6 = arith.constant 0 : index
    %c0_7 = arith.constant 0 : index
    %12 = vector.load %arg4[%c0_6, %c0_7] : memref<512x1024xf32, #tpu.memory_space<vmem>>, vector<512x1024xf32>
    tpu.vector_store %arg4[%c0_6, %c0_7], %11 {strides = array<i32>} : memref<512x1024xf32, #tpu.memory_space<vmem>>, vector<512x1024xf32>,
    return
  }
  func.func @transform_0(%arg0: i32) -> (i32, i32) {
    %c0_i32 = arith.constant 0 : i32
    %c0_i32_0 = arith.constant 0 : i32
    return %arg0, %c0_i32 : i32, i32
  }
  func.func @transform_1(%arg0: i32) -> (i32, i32) {
    %c0_i32 = arith.constant 0 : i32
    %c0_i32_0 = arith.constant 0 : i32
    %c0_i32_1 = arith.constant 0 : i32
    return %c0_i32, %c0_i32_0 : i32, i32
  }
  func.func @transform_2(%arg0: i32) -> (i32, i32) {
    %c0_i32 = arith.constant 0 : i32
    %c0_i32_0 = arith.constant 0 : i32
    %c0_i32_1 = arith.constant 0 : i32
    return %c0_i32, %c0_i32_0 : i32, i32
  }
  func.func @transform_3(%arg0: i32) -> (i32, i32) {
    %c0_i32 = arith.constant 0 : i32
    %c0_i32_0 = arith.constant 0 : i32
    return %arg0, %c0_i32 : i32, i32
  }
}

</mosaic_0001>

<llo_original>
// kernel: conv_transpose3d_silu.1
$region0: #{conv_transpose3d_silu.1}
  #allocation0 [shape = 'u32[]', space=smem, size = 0x4, offset = 0x4, fixed_abs, tag = 'smem constant byte address 0x4 - core index']
  #allocation1 [shape = 'u32[144,128]{1,0:T(1,128)}', space=vmem, size = 0x12000, scoped, tag = 'internal scratch']
  %s0 = inlined_call_operand.vmem [shape: bf16[2048,240], index: 0, kind: input, shape index: {}]
  %s1 = inlined_call_operand.vmem [shape: bf16[240,1024], index: 1, kind: input, shape index: {}]
  %s2 = inlined_call_operand.vmem [shape: f32[1,1024], index: 2, kind: input, shape index: {}]
  %s3 = inlined_call_operand.vmem [shape: f32[2048,1024], index: 3, kind: output, shape index: {}]
  %s4 = sld [smem:[#allocation0]]
  $region45: #{conv_transpose3d_silu.1} parent=0
    _
  %s6 = ssub.s32 1, %s4
  %s7 = scalar_select 0, %s6, %s4
  loop: start=0, step=1, limit=6
  $region2: #{conv_transpose3d_silu.1} parent=0 // loop_pre_header
    _
  $region3: #{conv_transpose3d_silu.1} parent=0 // loop_header
    %s9 = sphi 0, %s13
    %p10 = scmp.ge.s32.totalorder %s9, 6
    %s19 = sphi 0, %s21
    %s22 = sphi 0, %s19
    %s23 = sphi 0, %s22
    %s39 = sphi 0, %s23
    %s43 = sphi 0, %s43
    %s45 = sphi 0, %s43
    %s46 = sphi 0, %s45
    %s60 = sphi 0, %s46
    %s64 = sphi 0, %s64
    %s66 = sphi 0, %s64
    %s67 = sphi 0, %s66
    %s81 = sphi 0, %s67
    %s87 = sphi 0, %s89
    %s90 = sphi 0, %s87
    %s91 = sphi 0, %s90
    %s107 = sphi 0, %s91
  $region4: #{conv_transpose3d_silu.1} parent=0 // loop_header_branch
    %12 = sbr.rel (%p10) target = $region8
  $region5: #{conv_transpose3d_silu.1} parent=0 // loop_body
    %s14 = ssub.s32 %s9, 1
    %s15 = ssub.s32 %s9, 2
    %s16 = sadd.s32 %s9, 1
    %s17 = ssub.s32 %s9, %s16
    %p18 = scmp.eq.s32.totalorder %s17, 0
    %s20 = sadd.s32 %s19, 1
    %s21 = scalar_select %p18, %s19, %s20
    %p24 = pneg %p18
    %p25 = scmp.eq.s32.totalorder %s9, 3
    %p26 = por %p24, %p25
    %p27 = scmp.ne.s32.totalorder %s19, %s22
    %p28 = scmp.eq.s32.totalorder %s9, 0
    %p29 = por %p27, %p28
    %p30 = scmp.ne.s32.totalorder %s19, %s22
    %p31 = scmp.eq.s32.totalorder %s14, 3
    %p32 = por %p30, %p31
    %p33 = scmp.ne.s32.totalorder %s22, %s23
    %p34 = scmp.eq.s32.totalorder %s14, 0
    %p35 = por %p33, %p34
    %p36 = scmp.ne.s32.totalorder %s22, %s23
    %p37 = scmp.eq.s32.totalorder %s15, 3
    %p38 = por %p36, %p37
    %p40 = scmp.ne.s32.totalorder %s23, %s39
    %p41 = scmp.eq.s32.totalorder %s15, 0
    %p42 = por %p40, %p41
    %s44 = sadd.s32 %s43, 1
    %p47 = scmp.eq.s32.totalorder %s9, 3
    %p48 = scmp.ne.s32.totalorder %s43, %s45
    %p49 = scmp.eq.s32.totalorder %s9, 0
    %p50 = por %p48, %p49
    %p51 = scmp.ne.s32.totalorder %s43, %s45
    %p52 = scmp.eq.s32.totalorder %s14, 3
    %p53 = por %p51, %p52
    %p54 = scmp.ne.s32.totalorder %s45, %s46
    %p55 = scmp.eq.s32.totalorder %s14, 0
    %p56 = por %p54, %p55
    %p57 = scmp.ne.s32.totalorder %s45, %s46
    %p58 = scmp.eq.s32.totalorder %s15, 3
    %p59 = por %p57, %p58
    %p61 = scmp.ne.s32.totalorder %s46, %s60
    %p62 = scmp.eq.s32.totalorder %s15, 0
    %p63 = por %p61, %p62
    %s65 = sadd.s32 %s64, 1
    %p68 = scmp.eq.s32.totalorder %s9, 3
    %p69 = scmp.ne.s32.totalorder %s64, %s66
    %p70 = scmp.eq.s32.totalorder %s9, 0
    %p71 = por %p69, %p70
    %p72 = scmp.ne.s32.totalorder %s64, %s66
    %p73 = scmp.eq.s32.totalorder %s14, 3
    %p74 = por %p72, %p73
    %p75 = scmp.ne.s32.totalorder %s66, %s67
    %p76 = scmp.eq.s32.totalorder %s14, 0
    %p77 = por %p75, %p76
    %p78 = scmp.ne.s32.totalorder %s66, %s67
    %p79 = scmp.eq.s32.totalorder %s15, 3
    %p80 = por %p78, %p79
    %p82 = scmp.ne.s32.totalorder %s67, %s81
    %p83 = scmp.eq.s32.totalorder %s15, 0
    %p84 = por %p82, %p83
    %s85 = ssub.s32 %s9, %s16
    %p86 = scmp.eq.s32.totalorder %s85, 0
    %s88 = sadd.s32 %s87, 1
    %s89 = scalar_select %p86, %s87, %s88
    %p92 = pneg %p86
    %p93 = scmp.eq.s32.totalorder %s9, 3
    %p94 = por %p92, %p93
    %p95 = scmp.ne.s32.totalorder %s87, %s90
    %p96 = scmp.eq.s32.totalorder %s9, 0
    %p97 = por %p95, %p96
    %p98 = scmp.ne.s32.totalorder %s87, %s90
    %p99 = scmp.eq.s32.totalorder %s14, 3
    %p100 = por %p98, %p99
    %p101 = scmp.ne.s32.totalorder %s90, %s91
    %p102 = scmp.eq.s32.totalorder %s14, 0
    %p103 = por %p101, %p102
    %p104 = scmp.ne.s32.totalorder %s90, %s91
    %p105 = scmp.eq.s32.totalorder %s15, 3
    %p106 = por %p104, %p105
    %p108 = scmp.ne.s32.totalorder %s91, %s107
    %p109 = scmp.eq.s32.totalorder %s15, 0
    %p110 = por %p108, %p109
    %p111 = scmp.le.s32.totalorder 1, %s9
    %p112 = scmp.lt.s32.totalorder %s9, 5
    %p113 = pnand %p111, %p112
    %p114 = pneg %p113
    // Predicated region
    $region9: #{conv_transpose3d_silu.1} parent=5 // pred_check
      _
    $region10: #{conv_transpose3d_silu.1} parent=5 // pred_check_branch
      %116 = sbr.rel (%p113) target = $region12
    $region11: #{conv_transpose3d_silu.1} parent=5 // pred_region
      %s117 = ssub.s32 %s9, 1
      // Predicated region
      $region13: #{conv_transpose3d_silu.1} parent=11 // pred_check
        %p118 = pneg %p56
      $region14: #{conv_transpose3d_silu.1} parent=11 // pred_check_branch
        %120 = sbr.rel (%p118) target = $region16
      $region15: #{conv_transpose3d_silu.1} parent=11 // pred_region
        _
      $region16: #{conv_transpose3d_silu.1} parent=11 // pred_fallthru
        _
      // Predicated region
      $region17: #{conv_transpose3d_silu.1} parent=11 // pred_check
        %p121 = pneg %p77
      $region18: #{conv_transpose3d_silu.1} parent=11 // pred_check_branch
        %123 = sbr.rel (%p121) target = $region20
      $region19: #{conv_transpose3d_silu.1} parent=11 // pred_region
        _
      $region20: #{conv_transpose3d_silu.1} parent=11 // pred_fallthru
        _
    $region12: #{conv_transpose3d_silu.1} parent=5 // pred_fallthru
      _
    %p124 = scmp.lt.s32.totalorder %s9, 4
    // Predicated region
    $region21: #{conv_transpose3d_silu.1} parent=5 // pred_check
      %p125 = pneg %p124
    $region22: #{conv_transpose3d_silu.1} parent=5 // pred_check_branch
      %127 = sbr.rel (%p125) target = $region24
    $region23: #{conv_transpose3d_silu.1} parent=5 // pred_region
      // Predicated region
      $region25: #{conv_transpose3d_silu.1} parent=23 // pred_check
        %p128 = pneg %p29
      $region26: #{conv_transpose3d_silu.1} parent=23 // pred_check_branch
        %130 = sbr.rel (%p128) target = $region28
      $region27: #{conv_transpose3d_silu.1} parent=23 // pred_region
        %s131 = smul.u32 64, %s9
        %p132 = scmp.lt.s32.totalorder %s131, 255
        %s133 = scalar_select %p132, %s131, 255
        %s134 = smul.addr %s133, 2
        %s135 = smul.addr %s134, 4
        %s136 = scalar_lea.vmem %s0, %s135
        %s137 = smul.u32 64, %s9
      $region28: #{conv_transpose3d_silu.1} parent=23 // pred_fallthru
        _
    $region24: #{conv_transpose3d_silu.1} parent=5 // pred_fallthru
      _
    %p138 = scmp.le.s32.totalorder 1, %s9
    %p139 = scmp.lt.s32.totalorder %s9, 5
    %p140 = pnand %p138, %p139
    %p141 = pneg %p140
    // Predicated region
    $region29: #{conv_transpose3d_silu.1} parent=5 // pred_check
      _
    $region30: #{conv_transpose3d_silu.1} parent=5 // pred_check_branch
      %143 = sbr.rel (%p140) target = $region32
    $region31: #{conv_transpose3d_silu.1} parent=5 // pred_region
      %s144 = ssub.s32 %s9, 1
      %s145 = smul.u32 64, %s14
      %p146 = scmp.lt.s32.totalorder %s145, 255
      %s147 = scalar_select %p146, %s145, 255
      %s148 = smul.addr %s147, 2
      %s149 = smul.addr %s148, 4
      %s150 = scalar_lea.vmem %s0, %s149
      %p151 = pneg %p35
      %p152 = pneg %p32
      %p153 = pneg %p56
      %p154 = pneg %p53
      %p155 = pneg %p77
      %p156 = pneg %p74
      %p157 = pneg %p103
      %p158 = pneg %p100
      %s159 = smul.u32 64, %s14
      %p160 = scmp.lt.s32.totalorder %s159, 255
      %s161 = scalar_select %p160, %s159, 255
      %s162 = smul.addr %s161, 8
      %s163 = smul.addr %s162, 8
      %s164 = scalar_lea.vmem %s3, %s163
      %s165 = smul.u32 64, %s14
      %p166 = scmp.lt.s32.totalorder %s165, 255
      %s167 = scalar_select %p166, %s165, 255
      %s168 = smul.addr %s167, 2
      %s169 = smul.addr %s168, 4
      %s170 = scalar_lea.vmem %s0, %s169
      %s171 = smul.u32 64, %s14
      %s172 = smul.u32 64, %s14
      %p173 = scmp.lt.s32.totalorder %s172, 255
      %s174 = scalar_select %p173, %s172, 255
      %s175 = smul.addr %s174, 8
      %s176 = smul.addr %s175, 8
      %s177 = scalar_lea.vmem %s3, %s176
      %s178 = smul.u32 64, %s14
      %v180 = vld [vmem:[%s170] sm:$0xff]
      %v181 = vld [vmem:[%s170 + $0x8] sm:$0xff]
      %v182 = vld [vmem:[%s170 + $0x10] sm:$0xff]
      %v183 = vld [vmem:[%s170 + $0x18] sm:$0xff]
      %v184 = vld [vmem:[%s170 + $0x20] sm:$0xff]
      %v185 = vld [vmem:[%s170 + $0x28] sm:$0xff]
      %v186 = vld [vmem:[%s170 + $0x30] sm:$0xff]
      %v187 = vld [vmem:[%s170 + $0x38] sm:$0xff]
      %v188 = vld [vmem:[%s170 + $0x40] sm:$0xff]
      %v189 = vld [vmem:[%s170 + $0x48] sm:$0xff]
      %v190 = vld [vmem:[%s170 + $0x50] sm:$0xff]
      %v191 = vld [vmem:[%s170 + $0x58] sm:$0xff]
      %v192 = vld [vmem:[%s170 + $0x60] sm:$0xff]
      %v193 = vld [vmem:[%s170 + $0x68] sm:$0xff]
      %v194 = vld [vmem:[%s170 + $0x70] sm:$0xff]
      %v195 = vld [vmem:[%s170 + $0x78] sm:$0xff]
      %v196 = vld [vmem:[%s170 + $0x80] sm:$0xff]
      %v197 = vld [vmem:[%s170 + $0x88] sm:$0xff]
      %v198 = vld [vmem:[%s170 + $0x90] sm:$0xff]
      %v199 = vld [vmem:[%s170 + $0x98] sm:$0xff]
      %v200 = vld [vmem:[%s170 + $0xa0] sm:$0xff]
      %v201 = vld [vmem:[%s170 + $0xa8] sm:$0xff]
      %v202 = vld [vmem:[%s170 + $0xb0] sm:$0xff]
      %v203 = vld [vmem:[%s170 + $0xb8] sm:$0xff]
      %v204 = vld [vmem:[%s170 + $0xc0] sm:$0xff]
      %v205 = vld [vmem:[%s170 + $0xc8] sm:$0xff]
      %v206 = vld [vmem:[%s170 + $0xd0] sm:$0xff]
      %v207 = vld [vmem:[%s170 + $0xd8] sm:$0xff]
      %v208 = vld [vmem:[%s170 + $0xe0] sm:$0xff]
      %v209 = vld [vmem:[%s170 + $0xe8] sm:$0xff]
      %v210 = vld [vmem:[%s170 + $0xf0] sm:$0xff]
      %v211 = vld [vmem:[%s170 + $0xf8] sm:$0xff]
      %v212 = vld [vmem:[%s170 + $0x100] sm:$0xff]
      %v213 = vld [vmem:[%s170 + $0x108] sm:$0xff]
      %v214 = vld [vmem:[%s170 + $0x110] sm:$0xff]
      %v215 = vld [vmem:[%s170 + $0x118] sm:$0xff]
      %v216 = vld [vmem:[%s170 + $0x120] sm:$0xff]
      %v217 = vld [vmem:[%s170 + $0x128] sm:$0xff]
      %v218 = vld [vmem:[%s170 + $0x130] sm:$0xff]
      %v219 = vld [vmem:[%s170 + $0x138] sm:$0xff]
      %v220 = vld [vmem:[%s170 + $0x140] sm:$0xff]
      %v221 = vld [vmem:[%s170 + $0x148] sm:$0xff]
      %v222 = vld [vmem:[%s170 + $0x150] sm:$0xff]
      %v223 = vld [vmem:[%s170 + $0x158] sm:$0xff]
      %v224 = vld [vmem:[%s170 + $0x160] sm:$0xff]
      %v225 = vld [vmem:[%s170 + $0x168] sm:$0xff]
      %v226 = vld [vmem:[%s170 + $0x170] sm:$0xff]
      %v227 = vld [vmem:[%s170 + $0x178] sm:$0xff]
      %v228 = vld [vmem:[%s170 + $0x180] sm:$0xff]
      %v229 = vld [vmem:[%s170 + $0x188] sm:$0xff]
      %v230 = vld [vmem:[%s170 + $0x190] sm:$0xff]
      %v231 = vld [vmem:[%s170 + $0x198] sm:$0xff]
      %v232 = vld [vmem:[%s170 + $0x1a0] sm:$0xff]
      %v233 = vld [vmem:[%s170 + $0x1a8] sm:$0xff]
      %v234 = vld [vmem:[%s170 + $0x1b0] sm:$0xff]
      %v235 = vld [vmem:[%s170 + $0x1b8] sm:$0xff]
      %v236 = vld [vmem:[%s170 + $0x1c0] sm:$0xff]
      %v237 = vld [vmem:[%s170 + $0x1c8] sm:$0xff]
      %v238 = vld [vmem:[%s170 + $0x1d0] sm:$0xff]
      %v239 = vld [vmem:[%s170 + $0x1d8] sm:$0xff]
      %v240 = vld [vmem:[%s170 + $0x1e0] sm:$0xff]
      %v241 = vld [vmem:[%s170 + $0x1e8] sm:$0xff]
      %v242 = vld [vmem:[%s170 + $0x1f0] sm:$0xff]
      %v243 = vld [vmem:[%s170 + $0x1f8] sm:$0xff]
      %v244 = vld [vmem:[%s1] sm:$0xff]
      %v245 = vld [vmem:[%s1 + $0x8] sm:$0xff]
      %v246 = vld [vmem:[%s1 + $0x10] sm:$0xff]
      %v247 = vld [vmem:[%s1 + $0x18] sm:$0xff]
      %v248 = vld [vmem:[%s1 + $0x20] sm:$0xff]
      %v249 = vld [vmem:[%s1 + $0x28] sm:$0xff]
      %v250 = vld [vmem:[%s1 + $0x30] sm:$0xff]
      %v251 = vld [vmem:[%s1 + $0x38] sm:$0xff]
      %v252 = vld [vmem:[%s1 + $0x40] sm:$0xff]
      %v253 = vld [vmem:[%s1 + $0x48] sm:$0xff]
      %v254 = vld [vmem:[%s1 + $0x50] sm:$0xff]
      %v255 = vld [vmem:[%s1 + $0x58] sm:$0xff]
      %v256 = vld [vmem:[%s1 + $0x60] sm:$0xff]
      %v257 = vld [vmem:[%s1 + $0x68] sm:$0xff]
      %v258 = vld [vmem:[%s1 + $0x70] sm:$0xff]
      %v259 = vld [vmem:[%s1 + $0x78] sm:$0xff]
      %v260 = vld [vmem:[%s1 + $0x80] sm:$0xff]
      %v261 = vld [vmem:[%s1 + $0x88] sm:$0xff]
      %v262 = vld [vmem:[%s1 + $0x90] sm:$0xff]
      %v263 = vld [vmem:[%s1 + $0x98] sm:$0xff]
      %v264 = vld [vmem:[%s1 + $0xa0] sm:$0xff]
      %v265 = vld [vmem:[%s1 + $0xa8] sm:$0xff]
      %v266 = vld [vmem:[%s1 + $0xb0] sm:$0xff]
      %v267 = vld [vmem:[%s1 + $0xb8] sm:$0xff]
      %v268 = vld [vmem:[%s1 + $0xc0] sm:$0xff]
      %v269 = vld [vmem:[%s1 + $0xc8] sm:$0xff]
      %v270 = vld [vmem:[%s1 + $0xd0] sm:$0xff]
      %v271 = vld [vmem:[%s1 + $0xd8] sm:$0xff]
      %v272 = vld [vmem:[%s1 + $0xe0] sm:$0xff]
      %v273 = vld [vmem:[%s1 + $0xe8] sm:$0xff]
      %v274 = vld [vmem:[%s1 + $0xf0] sm:$0xff]
      %v275 = vld [vmem:[%s1 + $0xf8] sm:$0xff]
      %v276 = vld [vmem:[%s1 + $0x100] sm:$0xff]
      %v277 = vld [vmem:[%s1 + $0x108] sm:$0xff]
      %v278 = vld [vmem:[%s1 + $0x110] sm:$0xff]
      %v279 = vld [vmem:[%s1 + $0x118] sm:$0xff]
      %v280 = vld [vmem:[%s1 + $0x120] sm:$0xff]
      %v281 = vld [vmem:[%s1 + $0x128] sm:$0xff]
      %v282 = vld [vmem:[%s1 + $0x130] sm:$0xff]
      %v283 = vld [vmem:[%s1 + $0x138] sm:$0xff]
      %v284 = vld [vmem:[%s1 + $0x140] sm:$0xff]
      %v285 = vld [vmem:[%s1 + $0x148] sm:$0xff]
      %v286 = vld [vmem:[%s1 + $0x150] sm:$0xff]
      %v287 = vld [vmem:[%s1 + $0x158] sm:$0xff]
      %v288 = vld [vmem:[%s1 + $0x160] sm:$0xff]
      %v289 = vld [vmem:[%s1 + $0x168] sm:$0xff]
      %v290 = vld [vmem:[%s1 + $0x170] sm:$0xff]
      %v291 = vld [vmem:[%s1 + $0x178] sm:$0xff]
      %v292 = vld [vmem:[%s1 + $0x180] sm:$0xff]
      %v293 = vld [vmem:[%s1 + $0x188] sm:$0xff]
      %v294 = vld [vmem:[%s1 + $0x190] sm:$0xff]
      %v295 = vld [vmem:[%s1 + $0x198] sm:$0xff]
      %v296 = vld [vmem:[%s1 + $0x1a0] sm:$0xff]
      %v297 = vld [vmem:[%s1 + $0x1a8] sm:$0xff]
      %v298 = vld [vmem:[%s1 + $0x1b0] sm:$0xff]
      %v299 = vld [vmem:[%s1 + $0x1b8] sm:$0xff]
      %v300 = vld [vmem:[%s1 + $0x1c0] sm:$0xff]
      %v301 = vld [vmem:[%s1 + $0x1c8] sm:$0xff]
      %v302 = vld [vmem:[%s1 + $0x1d0] sm:$0xff]
      %v303 = vld [vmem:[%s1 + $0x1d8] sm:$0xff]
      %v304 = vld [vmem:[%s1 + $0x1e0] sm:$0xff]
      %v305 = vld [vmem:[%s1 + $0x1e8] sm:$0xff]
      %v306 = vld [vmem:[%s1 + $0x1f0] sm:$0xff]
      %v307 = vld [vmem:[%s1 + $0x1f8] sm:$0xff]
      %v308 = vld [vmem:[%s1 + $0x200] sm:$0xff]
      %v309 = vld [vmem:[%s1 + $0x208] sm:$0xff]
      %v310 = vld [vmem:[%s1 + $0x210] sm:$0xff]
      %v311 = vld [vmem:[%s1 + $0x218] sm:$0xff]
      %v312 = vld [vmem:[%s1 + $0x220] sm:$0xff]
      %v313 = vld [vmem:[%s1 + $0x228] sm:$0xff]
      %v314 = vld [vmem:[%s1 + $0x230] sm:$0xff]
      %v315 = vld [vmem:[%s1 + $0x238] sm:$0xff]
      %v316 = vld [vmem:[%s1 + $0x240] sm:$0xff]
      %v317 = vld [vmem:[%s1 + $0x248] sm:$0xff]
      %v318 = vld [vmem:[%s1 + $0x250] sm:$0xff]
      %v319 = vld [vmem:[%s1 + $0x258] sm:$0xff]
      %v320 = vld [vmem:[%s1 + $0x260] sm:$0xff]
      %v321 = vld [vmem:[%s1 + $0x268] sm:$0xff]
      %v322 = vld [vmem:[%s1 + $0x270] sm:$0xff]
      %v323 = vld [vmem:[%s1 + $0x278] sm:$0xff]
      %v324 = vld [vmem:[%s1 + $0x280] sm:$0xff]
      %v325 = vld [vmem:[%s1 + $0x288] sm:$0xff]
      %v326 = vld [vmem:[%s1 + $0x290] sm:$0xff]
      %v327 = vld [vmem:[%s1 + $0x298] sm:$0xff]
      %v328 = vld [vmem:[%s1 + $0x2a0] sm:$0xff]
      %v329 = vld [vmem:[%s1 + $0x2a8] sm:$0xff]
      %v330 = vld [vmem:[%s1 + $0x2b0] sm:$0xff]
      %v331 = vld [vmem:[%s1 + $0x2b8] sm:$0xff]
      %v332 = vld [vmem:[%s1 + $0x2c0] sm:$0xff]
      %v333 = vld [vmem:[%s1 + $0x2c8] sm:$0xff]
      %v334 = vld [vmem:[%s1 + $0x2d0] sm:$0xff]
      %v335 = vld [vmem:[%s1 + $0x2d8] sm:$0xff]
      %v336 = vld [vmem:[%s1 + $0x2e0] sm:$0xff]
      %v337 = vld [vmem:[%s1 + $0x2e8] sm:$0xff]
      %v338 = vld [vmem:[%s1 + $0x2f0] sm:$0xff]
      %v339 = vld [vmem:[%s1 + $0x2f8] sm:$0xff]
      %v340 = vld [vmem:[%s1 + $0x300] sm:$0xff]
      %v341 = vld [vmem:[%s1 + $0x308] sm:$0xff]
      %v342 = vld [vmem:[%s1 + $0x310] sm:$0xff]
      %v343 = vld [vmem:[%s1 + $0x318] sm:$0xff]
      %v344 = vld [vmem:[%s1 + $0x320] sm:$0xff]
      %v345 = vld [vmem:[%s1 + $0x328] sm:$0xff]
      %v346 = vld [vmem:[%s1 + $0x330] sm:$0xff]
      %v347 = vld [vmem:[%s1 + $0x338] sm:$0xff]
      %v348 = vld [vmem:[%s1 + $0x340] sm:$0xff]
      %v349 = vld [vmem:[%s1 + $0x348] sm:$0xff]
      %v350 = vld [vmem:[%s1 + $0x350] sm:$0xff]
      %v351 = vld [vmem:[%s1 + $0x358] sm:$0xff]
      %v352 = vld [vmem:[%s1 + $0x360] sm:$0xff]
      %v353 = vld [vmem:[%s1 + $0x368] sm:$0xff]
      %v354 = vld [vmem:[%s1 + $0x370] sm:$0xff]
      %v355 = vld [vmem:[%s1 + $0x378] sm:$0xff]
      %v356 = vld [vmem:[%s1 + $0x380] sm:$0xff]
      %v357 = vld [vmem:[%s1 + $0x388] sm:$0xff]
      %v358 = vld [vmem:[%s1 + $0x390] sm:$0xff]
      %v359 = vld [vmem:[%s1 + $0x398] sm:$0xff]
      %v360 = vld [vmem:[%s1 + $0x3a0] sm:$0xff]
      %v361 = vld [vmem:[%s1 + $0x3a8] sm:$0xff]
      %v362 = vld [vmem:[%s1 + $0x3b0] sm:$0xff]
      %v363 = vld [vmem:[%s1 + $0x3b8] sm:$0xff]
      %v364 = vld [vmem:[%s2] sm:$0xff]
      %v366 = vlaneseq
      %v367 = vshrl.u32 %v366, 7
      %v368 = vsub.s32 0, %v367
      %v369 = vrot.slane %v364, %v368
      %v370 = vlaneseq
      %v371 = vshrl.u32 %v370, 7
      %v372 = vsub.s32 1, %v371
      %v373 = vrot.slane %v364, %v372
      %v374 = vlaneseq
      %v375 = vshrl.u32 %v374, 7
      %v376 = vsub.s32 2, %v375
      %v377 = vrot.slane %v364, %v376
      %v378 = vlaneseq
      %v379 = vshrl.u32 %v378, 7
      %v380 = vsub.s32 3, %v379
      %v381 = vrot.slane %v364, %v380
      %v382 = vlaneseq
      %v383 = vshrl.u32 %v382, 7
      %v384 = vsub.s32 4, %v383
      %v385 = vrot.slane %v364, %v384
      %v386 = vlaneseq
      %v387 = vshrl.u32 %v386, 7
      %v388 = vsub.s32 5, %v387
      %v389 = vrot.slane %v364, %v388
      %v390 = vlaneseq
      %v391 = vshrl.u32 %v390, 7
      %v392 = vsub.s32 6, %v391
      %v393 = vrot.slane %v364, %v392
      %v394 = vlaneseq
      %v395 = vshrl.u32 %v394, 7
      %v396 = vsub.s32 7, %v395
      %v397 = vrot.slane %v364, %v396
      %v470 = vunpack.c.l.b16 %v180
      %v471 = vunpack.c.h.b16 %v180
      %v472 = vunpack.c.l.b16 %v181
      %v473 = vunpack.c.h.b16 %v181
      %v474 = vunpack.c.l.b16 %v182
      %v475 = vunpack.c.h.b16 %v182
      %v476 = vunpack.c.l.b16 %v183
      %v477 = vunpack.c.h.b16 %v183
      %v478 = vunpack.c.l.b16 %v184
      %v479 = vunpack.c.h.b16 %v184
      %v480 = vunpack.c.l.b16 %v185
      %v481 = vunpack.c.h.b16 %v185
      %v482 = vunpack.c.l.b16 %v186
      %v483 = vunpack.c.h.b16 %v186
      %v484 = vunpack.c.l.b16 %v187
      %v485 = vunpack.c.h.b16 %v187
      %v486 = vunpack.c.l.b16 %v188
      %v487 = vunpack.c.h.b16 %v188
      %v488 = vunpack.c.l.b16 %v189
      %v489 = vunpack.c.h.b16 %v189
      %v490 = vunpack.c.l.b16 %v190
      %v491 = vunpack.c.h.b16 %v190
      %v492 = vunpack.c.l.b16 %v191
      %v493 = vunpack.c.h.b16 %v191
      %v494 = vunpack.c.l.b16 %v192
      %v495 = vunpack.c.h.b16 %v192
      %v496 = vunpack.c.l.b16 %v193
      %v497 = vunpack.c.h.b16 %v193
      %v498 = vunpack.c.l.b16 %v194
      %v499 = vunpack.c.h.b16 %v194
      %v500 = vunpack.c.l.b16 %v195
      %v501 = vunpack.c.h.b16 %v195
      %v502 = vunpack.c.l.b16 %v196
      %v503 = vunpack.c.h.b16 %v196
      %v504 = vunpack.c.l.b16 %v197
      %v505 = vunpack.c.h.b16 %v197
      %v506 = vunpack.c.l.b16 %v198
      %v507 = vunpack.c.h.b16 %v198
      %v508 = vunpack.c.l.b16 %v199
      %v509 = vunpack.c.h.b16 %v199
      %v510 = vunpack.c.l.b16 %v200
      %v511 = vunpack.c.h.b16 %v200
      %v512 = vunpack.c.l.b16 %v201
      %v513 = vunpack.c.h.b16 %v201
      %v514 = vunpack.c.l.b16 %v202
      %v515 = vunpack.c.h.b16 %v202
      %v516 = vunpack.c.l.b16 %v203
      %v517 = vunpack.c.h.b16 %v203
      %v518 = vunpack.c.l.b16 %v204
      %v519 = vunpack.c.h.b16 %v204
      %v520 = vunpack.c.l.b16 %v205
      %v521 = vunpack.c.h.b16 %v205
      %v522 = vunpack.c.l.b16 %v206
      %v523 = vunpack.c.h.b16 %v206
      %v524 = vunpack.c.l.b16 %v207
      %v525 = vunpack.c.h.b16 %v207
      %v526 = vunpack.c.l.b16 %v208
      %v527 = vunpack.c.h.b16 %v208
      %v528 = vunpack.c.l.b16 %v209
      %v529 = vunpack.c.h.b16 %v209
      %v530 = vunpack.c.l.b16 %v210
      %v531 = vunpack.c.h.b16 %v210
      %v532 = vunpack.c.l.b16 %v211
      %v533 = vunpack.c.h.b16 %v211
      %v534 = vunpack.c.l.b16 %v212
      %v535 = vunpack.c.h.b16 %v212
      %v536 = vunpack.c.l.b16 %v213
      %v537 = vunpack.c.h.b16 %v213
      %v538 = vunpack.c.l.b16 %v214
      %v539 = vunpack.c.h.b16 %v214
      %v540 = vunpack.c.l.b16 %v215
      %v541 = vunpack.c.h.b16 %v215
      %v542 = vunpack.c.l.b16 %v216
      %v543 = vunpack.c.h.b16 %v216
      %v544 = vunpack.c.l.b16 %v217
      %v545 = vunpack.c.h.b16 %v217
      %v546 = vunpack.c.l.b16 %v218
      %v547 = vunpack.c.h.b16 %v218
      %v548 = vunpack.c.l.b16 %v219
      %v549 = vunpack.c.h.b16 %v219
      %v550 = vunpack.c.l.b16 %v220
      %v551 = vunpack.c.h.b16 %v220
      %v552 = vunpack.c.l.b16 %v221
      %v553 = vunpack.c.h.b16 %v221
      %v554 = vunpack.c.l.b16 %v222
      %v555 = vunpack.c.h.b16 %v222
      %v556 = vunpack.c.l.b16 %v223
      %v557 = vunpack.c.h.b16 %v223
      %v558 = vunpack.c.l.b16 %v224
      %v559 = vunpack.c.h.b16 %v224
      %v560 = vunpack.c.l.b16 %v225
      %v561 = vunpack.c.h.b16 %v225
      %v562 = vunpack.c.l.b16 %v226
      %v563 = vunpack.c.h.b16 %v226
      %v564 = vunpack.c.l.b16 %v227
      %v565 = vunpack.c.h.b16 %v227
      %v566 = vunpack.c.l.b16 %v228
      %v567 = vunpack.c.h.b16 %v228
      %v568 = vunpack.c.l.b16 %v229
      %v569 = vunpack.c.h.b16 %v229
      %v570 = vunpack.c.l.b16 %v230
      %v571 = vunpack.c.h.b16 %v230
      %v572 = vunpack.c.l.b16 %v231
      %v573 = vunpack.c.h.b16 %v231
      %v574 = vunpack.c.l.b16 %v232
      %v575 = vunpack.c.h.b16 %v232
      %v576 = vunpack.c.l.b16 %v233
      %v577 = vunpack.c.h.b16 %v233
      %v578 = vunpack.c.l.b16 %v234
      %v579 = vunpack.c.h.b16 %v234
      %v580 = vunpack.c.l.b16 %v235
      %v581 = vunpack.c.h.b16 %v235
      %v582 = vunpack.c.l.b16 %v236
      %v583 = vunpack.c.h.b16 %v236
      %v584 = vunpack.c.l.b16 %v237
      %v585 = vunpack.c.h.b16 %v237
      %v586 = vunpack.c.l.b16 %v238
      %v587 = vunpack.c.h.b16 %v238
      %v588 = vunpack.c.l.b16 %v239
      %v589 = vunpack.c.h.b16 %v239
      %v590 = vunpack.c.l.b16 %v240
      %v591 = vunpack.c.h.b16 %v240
      %v592 = vunpack.c.l.b16 %v241
      %v593 = vunpack.c.h.b16 %v241
      %v594 = vunpack.c.l.b16 %v242
      %v595 = vunpack.c.h.b16 %v242
      %v596 = vunpack.c.l.b16 %v243
      %v597 = vunpack.c.h.b16 %v243
      %v598 = vpack.c.b16 %v472, %v470
      %v599 = vpack.c.b16 %v473, %v471
      %v600 = vpack.c.b16 %v476, %v474
      %v601 = vpack.c.b16 %v477, %v475
      %v602 = vpack.c.b16 %v480, %v478
      %v603 = vpack.c.b16 %v481, %v479
      %v604 = vpack.c.b16 %v484, %v482
      %v605 = vpack.c.b16 %v485, %v483
      %v606 = vpack.c.b16 %v488, %v486
      %v607 = vpack.c.b16 %v489, %v487
      %v608 = vpack.c.b16 %v492, %v490
      %v609 = vpack.c.b16 %v493, %v491
      %v610 = vpack.c.b16 %v496, %v494
      %v611 = vpack.c.b16 %v497, %v495
      %v612 = vpack.c.b16 %v500, %v498
      %v613 = vpack.c.b16 %v501, %v499
      %v614 = vpack.c.b16 %v504, %v502
      %v615 = vpack.c.b16 %v505, %v503
      %v616 = vpack.c.b16 %v508, %v506
      %v617 = vpack.c.b16 %v509, %v507
      %v618 = vpack.c.b16 %v512, %v510
      %v619 = vpack.c.b16 %v513, %v511
      %v620 = vpack.c.b16 %v516, %v514
      %v621 = vpack.c.b16 %v517, %v515
      %v622 = vpack.c.b16 %v520, %v518
      %v623 = vpack.c.b16 %v521, %v519
      %v624 = vpack.c.b16 %v524, %v522
      %v625 = vpack.c.b16 %v525, %v523
      %v626 = vpack.c.b16 %v528, %v526
      %v627 = vpack.c.b16 %v529, %v527
      %v628 = vpack.c.b16 %v532, %v530
      %v629 = vpack.c.b16 %v533, %v531
      %v630 = vpack.c.b16 %v536, %v534
      %v631 = vpack.c.b16 %v537, %v535
      %v632 = vpack.c.b16 %v540, %v538
      %v633 = vpack.c.b16 %v541, %v539
      %v634 = vpack.c.b16 %v544, %v542
      %v635 = vpack.c.b16 %v545, %v543
      %v636 = vpack.c.b16 %v548, %v546
      %v637 = vpack.c.b16 %v549, %v547
      %v638 = vpack.c.b16 %v552, %v550
      %v639 = vpack.c.b16 %v553, %v551
      %v640 = vpack.c.b16 %v556, %v554
      %v641 = vpack.c.b16 %v557, %v555
      %v642 = vpack.c.b16 %v560, %v558
      %v643 = vpack.c.b16 %v561, %v559
      %v644 = vpack.c.b16 %v564, %v562
      %v645 = vpack.c.b16 %v565, %v563
      %v646 = vpack.c.b16 %v568, %v566
      %v647 = vpack.c.b16 %v569, %v567
      %v648 = vpack.c.b16 %v572, %v570
      %v649 = vpack.c.b16 %v573, %v571
      %v650 = vpack.c.b16 %v576, %v574
      %v651 = vpack.c.b16 %v577, %v575
      %v652 = vpack.c.b16 %v580, %v578
      %v653 = vpack.c.b16 %v581, %v579
      %v654 = vpack.c.b16 %v584, %v582
      %v655 = vpack.c.b16 %v585, %v583
      %v656 = vpack.c.b16 %v588, %v586
      %v657 = vpack.c.b16 %v589, %v587
      %v658 = vpack.c.b16 %v592, %v590
      %v659 = vpack.c.b16 %v593, %v591
      %v660 = vpack.c.b16 %v596, %v594
      %v661 = vpack.c.b16 %v597, %v595
      %v814 = vunpack.c.l.b16 %v244
      %v815 = vunpack.c.h.b16 %v244
      %v816 = vunpack.c.l.b16 %v245
      %v817 = vunpack.c.h.b16 %v245
      %v818 = vunpack.c.l.b16 %v246
      %v819 = vunpack.c.h.b16 %v246
      %v820 = vunpack.c.l.b16 %v247
      %v821 = vunpack.c.h.b16 %v247
      %v822 = vunpack.c.l.b16 %v248
      %v823 = vunpack.c.h.b16 %v248
      %v824 = vunpack.c.l.b16 %v249
      %v825 = vunpack.c.h.b16 %v249
      %v826 = vunpack.c.l.b16 %v250
      %v827 = vunpack.c.h.b16 %v250
      %v828 = vunpack.c.l.b16 %v251
      %v829 = vunpack.c.h.b16 %v251
      %v830 = vunpack.c.l.b16 %v252
      %v831 = vunpack.c.h.b16 %v252
      %v832 = vunpack.c.l.b16 %v253
      %v833 = vunpack.c.h.b16 %v253
      %v834 = vunpack.c.l.b16 %v254
      %v835 = vunpack.c.h.b16 %v254
      %v836 = vunpack.c.l.b16 %v255
      %v837 = vunpack.c.h.b16 %v255
      %v838 = vunpack.c.l.b16 %v256
      %v839 = vunpack.c.h.b16 %v256
      %v840 = vunpack.c.l.b16 %v257
      %v841 = vunpack.c.h.b16 %v257
      %v842 = vunpack.c.l.b16 %v258
      %v843 = vunpack.c.h.b16 %v258
      %v844 = vunpack.c.l.b16 %v259
      %v845 = vunpack.c.h.b16 %v259
      %v846 = vunpack.c.l.b16 %v260
      %v847 = vunpack.c.h.b16 %v260
      %v848 = vunpack.c.l.b16 %v261
      %v849 = vunpack.c.h.b16 %v261
      %v850 = vunpack.c.l.b16 %v262
      %v851 = vunpack.c.h.b16 %v262
      %v852 = vunpack.c.l.b16 %v263
      %v853 = vunpack.c.h.b16 %v263
      %v854 = vunpack.c.l.b16 %v264
      %v855 = vunpack.c.h.b16 %v264
      %v856 = vunpack.c.l.b16 %v265
      %v857 = vunpack.c.h.b16 %v265
      %v858 = vunpack.c.l.b16 %v266
      %v859 = vunpack.c.h.b16 %v266
      %v860 = vunpack.c.l.b16 %v267
      %v861 = vunpack.c.h.b16 %v267
      %v862 = vunpack.c.l.b16 %v268
      %v863 = vunpack.c.h.b16 %v268
      %v864 = vunpack.c.l.b16 %v269
      %v865 = vunpack.c.h.b16 %v269
      %v866 = vunpack.c.l.b16 %v270
      %v867 = vunpack.c.h.b16 %v270
      %v868 = vunpack.c.l.b16 %v271
      %v869 = vunpack.c.h.b16 %v271
      %v870 = vunpack.c.l.b16 %v272
      %v871 = vunpack.c.h.b16 %v272
      %v872 = vunpack.c.l.b16 %v273
      %v873 = vunpack.c.h.b16 %v273
      %v874 = vunpack.c.l.b16 %v274
      %v875 = vunpack.c.h.b16 %v274
      %v876 = vunpack.c.l.b16 %v275
      %v877 = vunpack.c.h.b16 %v275
      %v878 = vunpack.c.l.b16 %v276
      %v879 = vunpack.c.h.b16 %v276
      %v880 = vunpack.c.l.b16 %v277
      %v881 = vunpack.c.h.b16 %v277
      %v882 = vunpack.c.l.b16 %v278
      %v883 = vunpack.c.h.b16 %v278
      %v884 = vunpack.c.l.b16 %v279
      %v885 = vunpack.c.h.b16 %v279
      %v886 = vunpack.c.l.b16 %v280
      %v887 = vunpack.c.h.b16 %v280
      %v888 = vunpack.c.l.b16 %v281
      %v889 = vunpack.c.h.b16 %v281
      %v890 = vunpack.c.l.b16 %v282
      %v891 = vunpack.c.h.b16 %v282
      %v892 = vunpack.c.l.b16 %v283
      %v893 = vunpack.c.h.b16 %v283
      %v894 = vunpack.c.l.b16 %v284
      %v895 = vunpack.c.h.b16 %v284
      %v896 = vunpack.c.l.b16 %v285
      %v897 = vunpack.c.h.b16 %v285
      %v898 = vunpack.c.l.b16 %v286
      %v899 = vunpack.c.h.b16 %v286
      %v900 = vunpack.c.l.b16 %v287
      %v901 = vunpack.c.h.b16 %v287
      %v902 = vunpack.c.l.b16 %v288
      %v903 = vunpack.c.h.b16 %v288
      %v904 = vunpack.c.l.b16 %v289
      %v905 = vunpack.c.h.b16 %v289
      %v906 = vunpack.c.l.b16 %v290
      %v907 = vunpack.c.h.b16 %v290
      %v908 = vunpack.c.l.b16 %v291
      %v909 = vunpack.c.h.b16 %v291
      %v910 = vunpack.c.l.b16 %v292
      %v911 = vunpack.c.h.b16 %v292
      %v912 = vunpack.c.l.b16 %v293
      %v913 = vunpack.c.h.b16 %v293
      %v914 = vunpack.c.l.b16 %v294
      %v915 = vunpack.c.h.b16 %v294
      %v916 = vunpack.c.l.b16 %v295
      %v917 = vunpack.c.h.b16 %v295
      %v918 = vunpack.c.l.b16 %v296
      %v919 = vunpack.c.h.b16 %v296
      %v920 = vunpack.c.l.b16 %v297
      %v921 = vunpack.c.h.b16 %v297
      %v922 = vunpack.c.l.b16 %v298
      %v923 = vunpack.c.h.b16 %v298
      %v924 = vunpack.c.l.b16 %v299
      %v925 = vunpack.c.h.b16 %v299
      %v926 = vunpack.c.l.b16 %v300
      %v927 = vunpack.c.h.b16 %v300
      %v928 = vunpack.c.l.b16 %v301
      %v929 = vunpack.c.h.b16 %v301
      %v930 = vunpack.c.l.b16 %v302
      %v931 = vunpack.c.h.b16 %v302
      %v932 = vunpack.c.l.b16 %v303
      %v933 = vunpack.c.h.b16 %v303
      %v934 = vunpack.c.l.b16 %v304
      %v935 = vunpack.c.h.b16 %v304
      %v936 = vunpack.c.l.b16 %v305
      %v937 = vunpack.c.h.b16 %v305
      %v938 = vunpack.c.l.b16 %v306
      %v939 = vunpack.c.h.b16 %v306
      %v940 = vunpack.c.l.b16 %v307
      %v941 = vunpack.c.h.b16 %v307
      %v942 = vunpack.c.l.b16 %v308
      %v943 = vunpack.c.h.b16 %v308
      %v944 = vunpack.c.l.b16 %v309
      %v945 = vunpack.c.h.b16 %v309
      %v946 = vunpack.c.l.b16 %v310
      %v947 = vunpack.c.h.b16 %v310
      %v948 = vunpack.c.l.b16 %v311
      %v949 = vunpack.c.h.b16 %v311
      %v950 = vunpack.c.l.b16 %v312
      %v951 = vunpack.c.h.b16 %v312
      %v952 = vunpack.c.l.b16 %v313
      %v953 = vunpack.c.h.b16 %v313
      %v954 = vunpack.c.l.b16 %v314
      %v955 = vunpack.c.h.b16 %v314
      %v956 = vunpack.c.l.b16 %v315
      %v957 = vunpack.c.h.b16 %v315
      %v958 = vunpack.c.l.b16 %v316
      %v959 = vunpack.c.h.b16 %v316
      %v960 = vunpack.c.l.b16 %v317
      %v961 = vunpack.c.h.b16 %v317
      %v962 = vunpack.c.l.b16 %v318
      %v963 = vunpack.c.h.b16 %v318
      %v964 = vunpack.c.l.b16 %v319
      %v965 = vunpack.c.h.b16 %v319
      %v966 = vunpack.c.l.b16 %v320
      %v967 = vunpack.c.h.b16 %v320
      %v968 = vunpack.c.l.b16 %v321
      %v969 = vunpack.c.h.b16 %v321
      %v970 = vunpack.c.l.b16 %v322
      %v971 = vunpack.c.h.b16 %v322
      %v972 = vunpack.c.l.b16 %v323
      %v973 = vunpack.c.h.b16 %v323
      %v974 = vunpack.c.l.b16 %v324
      %v975 = vunpack.c.h.b16 %v324
      %v976 = vunpack.c.l.b16 %v325
      %v977 = vunpack.c.h.b16 %v325
      %v978 = vunpack.c.l.b16 %v326
      %v979 = vunpack.c.h.b16 %v326
      %v980 = vunpack.c.l.b16 %v327
      %v981 = vunpack.c.h.b16 %v327
      %v982 = vunpack.c.l.b16 %v328
      %v983 = vunpack.c.h.b16 %v328
      %v984 = vunpack.c.l.b16 %v329
      %v985 = vunpack.c.h.b16 %v329
      %v986 = vunpack.c.l.b16 %v330
      %v987 = vunpack.c.h.b16 %v330
      %v988 = vunpack.c.l.b16 %v331
      %v989 = vunpack.c.h.b16 %v331
      %v990 = vunpack.c.l.b16 %v332
      %v991 = vunpack.c.h.b16 %v332
      %v992 = vunpack.c.l.b16 %v333
      %v993 = vunpack.c.h.b16 %v333
      %v994 = vunpack.c.l.b16 %v334
      %v995 = vunpack.c.h.b16 %v334
      %v996 = vunpack.c.l.b16 %v335
      %v997 = vunpack.c.h.b16 %v335
      %v998 = vunpack.c.l.b16 %v336
      %v999 = vunpack.c.h.b16 %v336
      %v1000 = vunpack.c.l.b16 %v337
      %v1001 = vunpack.c.h.b16 %v337
      %v1002 = vunpack.c.l.b16 %v338
      %v1003 = vunpack.c.h.b16 %v338
      %v1004 = vunpack.c.l.b16 %v339
      %v1005 = vunpack.c.h.b16 %v339
      %v1006 = vunpack.c.l.b16 %v340
      %v1007 = vunpack.c.h.b16 %v340
      %v1008 = vunpack.c.l.b16 %v341
      %v1009 = vunpack.c.h.b16 %v341
      %v1010 = vunpack.c.l.b16 %v342
      %v1011 = vunpack.c.h.b16 %v342
      %v1012 = vunpack.c.l.b16 %v343
      %v1013 = vunpack.c.h.b16 %v343
      %v1014 = vunpack.c.l.b16 %v344
      %v1015 = vunpack.c.h.b16 %v344
      %v1016 = vunpack.c.l.b16 %v345
      %v1017 = vunpack.c.h.b16 %v345
      %v1018 = vunpack.c.l.b16 %v346
      %v1019 = vunpack.c.h.b16 %v346
      %v1020 = vunpack.c.l.b16 %v347
      %v1021 = vunpack.c.h.b16 %v347
      %v1022 = vunpack.c.l.b16 %v348
      %v1023 = vunpack.c.h.b16 %v348
      %v1024 = vunpack.c.l.b16 %v349
      %v1025 = vunpack.c.h.b16 %v349
      %v1026 = vunpack.c.l.b16 %v350
      %v1027 = vunpack.c.h.b16 %v350
      %v1028 = vunpack.c.l.b16 %v351
      %v1029 = vunpack.c.h.b16 %v351
      %v1030 = vunpack.c.l.b16 %v352
      %v1031 = vunpack.c.h.b16 %v352
      %v1032 = vunpack.c.l.b16 %v353
      %v1033 = vunpack.c.h.b16 %v353
      %v1034 = vunpack.c.l.b16 %v354
      %v1035 = vunpack.c.h.b16 %v354
      %v1036 = vunpack.c.l.b16 %v355
      %v1037 = vunpack.c.h.b16 %v355
      %v1038 = vunpack.c.l.b16 %v356
      %v1039 = vunpack.c.h.b16 %v356
      %v1040 = vunpack.c.l.b16 %v357
      %v1041 = vunpack.c.h.b16 %v357
      %v1042 = vunpack.c.l.b16 %v358
      %v1043 = vunpack.c.h.b16 %v358
      %v1044 = vunpack.c.l.b16 %v359
      %v1045 = vunpack.c.h.b16 %v359
      %v1046 = vunpack.c.l.b16 %v360
      %v1047 = vunpack.c.h.b16 %v360
      %v1048 = vunpack.c.l.b16 %v361
      %v1049 = vunpack.c.h.b16 %v361
      %v1050 = vunpack.c.l.b16 %v362
      %v1051 = vunpack.c.h.b16 %v362
      %v1052 = vunpack.c.l.b16 %v363
      %v1053 = vunpack.c.h.b16 %v363
      %v1054 = vpack.c.b16 %v822, %v814
      %v1055 = vpack.c.b16 %v823, %v815
      %v1056 = vpack.c.b16 %v824, %v816
      %v1057 = vpack.c.b16 %v825, %v817
      %v1058 = vpack.c.b16 %v826, %v818
      %v1059 = vpack.c.b16 %v827, %v819
      %v1060 = vpack.c.b16 %v828, %v820
      %v1061 = vpack.c.b16 %v829, %v821
      %v1062 = vpack.c.b16 %v838, %v830
      %v1063 = vpack.c.b16 %v839, %v831
      %v1064 = vpack.c.b16 %v840, %v832
      %v1065 = vpack.c.b16 %v841, %v833
      %v1066 = vpack.c.b16 %v842, %v834
      %v1067 = vpack.c.b16 %v843, %v835
      %v1068 = vpack.c.b16 %v844, %v836
      %v1069 = vpack.c.b16 %v845, %v837
      %v1070 = vpack.c.b16 %v854, %v846
      %v1071 = vpack.c.b16 %v855, %v847
      %v1072 = vpack.c.b16 %v856, %v848
      %v1073 = vpack.c.b16 %v857, %v849
      %v1074 = vpack.c.b16 %v858, %v850
      %v1075 = vpack.c.b16 %v859, %v851
      %v1076 = vpack.c.b16 %v860, %v852
      %v1077 = vpack.c.b16 %v861, %v853
      %v1078 = vpack.c.b16 %v870, %v862
      %v1079 = vpack.c.b16 %v871, %v863
      %v1080 = vpack.c.b16 %v872, %v864
      %v1081 = vpack.c.b16 %v873, %v865
      %v1082 = vpack.c.b16 %v874, %v866
      %v1083 = vpack.c.b16 %v875, %v867
      %v1084 = vpack.c.b16 %v876, %v868
      %v1085 = vpack.c.b16 %v877, %v869
      %v1086 = vpack.c.b16 %v886, %v878
      %v1087 = vpack.c.b16 %v887, %v879
      %v1088 = vpack.c.b16 %v888, %v880
      %v1089 = vpack.c.b16 %v889, %v881
      %v1090 = vpack.c.b16 %v890, %v882
      %v1091 = vpack.c.b16 %v891, %v883
      %v1092 = vpack.c.b16 %v892, %v884
      %v1093 = vpack.c.b16 %v893, %v885
      %v1094 = vpack.c.b16 %v902, %v894
      %v1095 = vpack.c.b16 %v903, %v895
      %v1096 = vpack.c.b16 %v904, %v896
      %v1097 = vpack.c.b16 %v905, %v897
      %v1098 = vpack.c.b16 %v906, %v898
      %v1099 = vpack.c.b16 %v907, %v899
      %v1100 = vpack.c.b16 %v908, %v900
      %v1101 = vpack.c.b16 %v909, %v901
      %v1102 = vpack.c.b16 %v918, %v910
      %v1103 = vpack.c.b16 %v919, %v911
      %v1104 = vpack.c.b16 %v920, %v912
      %v1105 = vpack.c.b16 %v921, %v913
      %v1106 = vpack.c.b16 %v922, %v914
      %v1107 = vpack.c.b16 %v923, %v915
      %v1108 = vpack.c.b16 %v924, %v916
      %v1109 = vpack.c.b16 %v925, %v917
      %v1110 = vpack.c.b16 %v934, %v926
      %v1111 = vpack.c.b16 %v935, %v927
      %v1112 = vpack.c.b16 %v936, %v928
      %v1113 = vpack.c.b16 %v937, %v929
      %v1114 = vpack.c.b16 %v938, %v930
      %v1115 = vpack.c.b16 %v939, %v931
      %v1116 = vpack.c.b16 %v940, %v932
      %v1117 = vpack.c.b16 %v941, %v933
      %v1118 = vpack.c.b16 %v950, %v942
      %v1119 = vpack.c.b16 %v951, %v943
      %v1120 = vpack.c.b16 %v952, %v944
      %v1121 = vpack.c.b16 %v953, %v945
      %v1122 = vpack.c.b16 %v954, %v946
      %v1123 = vpack.c.b16 %v955, %v947
      %v1124 = vpack.c.b16 %v956, %v948
      %v1125 = vpack.c.b16 %v957, %v949
      %v1126 = vpack.c.b16 %v966, %v958
      %v1127 = vpack.c.b16 %v967, %v959
      %v1128 = vpack.c.b16 %v968, %v960
      %v1129 = vpack.c.b16 %v969, %v961
      %v1130 = vpack.c.b16 %v970, %v962
      %v1131 = vpack.c.b16 %v971, %v963
      %v1132 = vpack.c.b16 %v972, %v964
      %v1133 = vpack.c.b16 %v973, %v965
      %v1134 = vpack.c.b16 %v982, %v974
      %v1135 = vpack.c.b16 %v983, %v975
      %v1136 = vpack.c.b16 %v984, %v976
      %v1137 = vpack.c.b16 %v985, %v977
      %v1138 = vpack.c.b16 %v986, %v978
      %v1139 = vpack.c.b16 %v987, %v979
      %v1140 = vpack.c.b16 %v988, %v980
      %v1141 = vpack.c.b16 %v989, %v981
      %v1142 = vpack.c.b16 %v998, %v990
      %v1143 = vpack.c.b16 %v999, %v991
      %v1144 = vpack.c.b16 %v1000, %v992
      %v1145 = vpack.c.b16 %v1001, %v993
      %v1146 = vpack.c.b16 %v1002, %v994
      %v1147 = vpack.c.b16 %v1003, %v995
      %v1148 = vpack.c.b16 %v1004, %v996
      %v1149 = vpack.c.b16 %v1005, %v997
      %v1150 = vpack.c.b16 %v1014, %v1006
      %v1151 = vpack.c.b16 %v1015, %v1007
      %v1152 = vpack.c.b16 %v1016, %v1008
      %v1153 = vpack.c.b16 %v1017, %v1009
      %v1154 = vpack.c.b16 %v1018, %v1010
      %v1155 = vpack.c.b16 %v1019, %v1011
      %v1156 = vpack.c.b16 %v1020, %v1012
      %v1157 = vpack.c.b16 %v1021, %v1013
      %v1158 = vpack.c.b16 %v1030, %v1022
      %v1159 = vpack.c.b16 %v1031, %v1023
      %v1160 = vpack.c.b16 %v1032, %v1024
      %v1161 = vpack.c.b16 %v1033, %v1025
      %v1162 = vpack.c.b16 %v1034, %v1026
      %v1163 = vpack.c.b16 %v1035, %v1027
      %v1164 = vpack.c.b16 %v1036, %v1028
      %v1165 = vpack.c.b16 %v1037, %v1029
      %v1166 = vpack.c.b16 %v1046, %v1038
      %v1167 = vpack.c.b16 %v1047, %v1039
      %v1168 = vpack.c.b16 %v1048, %v1040
      %v1169 = vpack.c.b16 %v1049, %v1041
      %v1170 = vpack.c.b16 %v1050, %v1042
      %v1171 = vpack.c.b16 %v1051, %v1043
      %v1172 = vpack.c.b16 %v1052, %v1044
      %v1173 = vpack.c.b16 %v1053, %v1045
      %vm1294 = vcmask 916480
      %v1296 = vsel %vm1294, %v599, 0
      %v1299 = vsel %vm1294, %v601, 0
      %v1302 = vsel %vm1294, %v603, 0
      %v1305 = vsel %vm1294, %v605, 0
      %v1308 = vsel %vm1294, %v607, 0
      %v1311 = vsel %vm1294, %v609, 0
      %v1314 = vsel %vm1294, %v611, 0
      %v1317 = vsel %vm1294, %v613, 0
      %v1320 = vsel %vm1294, %v615, 0
      %v1323 = vsel %vm1294, %v617, 0
      %v1326 = vsel %vm1294, %v619, 0
      %v1329 = vsel %vm1294, %v621, 0
      %v1332 = vsel %vm1294, %v623, 0
      %v1335 = vsel %vm1294, %v625, 0
      %v1338 = vsel %vm1294, %v627, 0
      %v1341 = vsel %vm1294, %v629, 0
      %v1344 = vsel %vm1294, %v631, 0
      %v1347 = vsel %vm1294, %v633, 0
      %v1350 = vsel %vm1294, %v635, 0
      %v1353 = vsel %vm1294, %v637, 0
      %v1356 = vsel %vm1294, %v639, 0
      %v1359 = vsel %vm1294, %v641, 0
      %v1362 = vsel %vm1294, %v643, 0
      %v1365 = vsel %vm1294, %v645, 0
      %v1368 = vsel %vm1294, %v647, 0
      %v1371 = vsel %vm1294, %v649, 0
      %v1374 = vsel %vm1294, %v651, 0
      %v1377 = vsel %vm1294, %v653, 0
      %v1380 = vsel %vm1294, %v655, 0
      %v1383 = vsel %vm1294, %v657, 0
      %v1386 = vsel %vm1294, %v659, 0
      %v1389 = vsel %vm1294, %v661, 0
      %1391 = vmatprep.subr.bf16.mxu0 %v1055
      %1392 = vmatpush1.bf16.msra.mxu0 %v1054
      %1393 = vmatprep.subr.bf16.mxu0 %v1063
      %1394 = vmatpush1.bf16.msra.mxu0 %v1062
      %1395 = vmatprep.subr.bf16.mxu0 %v1071
      %1396 = vmatpush1.bf16.msra.mxu0 %v1070
      %1397 = vmatprep.subr.bf16.mxu0 %v1079
      %1398 = vmatpush1.bf16.msra.mxu0 %v1078
      %1399 = vmatprep.subr.bf16.mxu0 %v1087
      %1400 = vmatpush1.bf16.msra.mxu0 %v1086
      %1401 = vmatprep.subr.bf16.mxu0 %v1095
      %1402 = vmatpush1.bf16.msra.mxu0 %v1094
      %1403 = vmatprep.subr.bf16.mxu0 %v1103
      %1404 = vmatpush1.bf16.msra.mxu0 %v1102
      %1405 = vmatprep.subr.bf16.mxu0 %v1111
      %1406 = vmatpush1.bf16.msra.mxu0 %v1110
      %1407 = vmatprep.subr.bf16.mxu0 %v1119
      %1408 = vmatpush1.bf16.msra.mxu0 %v1118
      %1409 = vmatprep.subr.bf16.mxu0 %v1127
      %1410 = vmatpush1.bf16.msra.mxu0 %v1126
      %1411 = vmatprep.subr.bf16.mxu0 %v1135
      %1412 = vmatpush1.bf16.msra.mxu0 %v1134
      %1413 = vmatprep.subr.bf16.mxu0 %v1143
      %1414 = vmatpush1.bf16.msra.mxu0 %v1142
      %1415 = vmatprep.subr.bf16.mxu0 %v1151
      %1416 = vmatpush1.bf16.msra.mxu0 %v1150
      %1417 = vmatprep.subr.bf16.mxu0 %v1159
      %1418 = vmatpush1.bf16.msra.mxu0 %v1158
      %1419 = vmatprep.subr.bf16.mxu0 %v1167
      %1420 = vmatpush1.bf16.msra.mxu0 %v1166
      %1421 = vmatprep.subr.bf16.mxu0 0
      %1422 = vmatpush1.bf16.msra.mxu0 0
      %1423 = vmatprep.mubr.bf16.mxu0 %v1296
      %1424 = vmatmul.mubr.bf16.gmra.mrb[0].mxu0 %v598
      %v1425 = vpop.f32.mrb[0].mxu0
      %v1426 = vadd.f32 %v369, %v1425
      %v1427 = vpop.f32.mrb[0].mxu0
      %v1428 = vadd.f32 %v373, %v1427
      %v1429 = vpop.f32.mrb[0].mxu0
      %v1430 = vadd.f32 %v369, %v1429
      %v1431 = vpop.f32.mrb[0].mxu0
      %v1432 = vadd.f32 %v373, %v1431
      %1433 = vmatprep.mubr.bf16.mxu0 %v1299
      %1434 = vmatmul.mubr.bf16.gmra.mrb[0].mxu0 %v600
      %v1435 = vpop.f32.mrb[0].mxu0
      %v1436 = vadd.f32 %v369, %v1435
      %v1437 = vpop.f32.mrb[0].mxu0
      %v1438 = vadd.f32 %v373, %v1437
      %v1439 = vpop.f32.mrb[0].mxu0
      %v1440 = vadd.f32 %v369, %v1439
      %v1441 = vpop.f32.mrb[0].mxu0
      %v1442 = vadd.f32 %v373, %v1441
      %1443 = vmatprep.mubr.bf16.mxu0 %v1302
      %1444 = vmatmul.mubr.bf16.gmra.mrb[0].mxu0 %v602
      %v1445 = vpop.f32.mrb[0].mxu0
      %v1446 = vadd.f32 %v369, %v1445
      %v1447 = vpop.f32.mrb[0].mxu0
      %v1448 = vadd.f32 %v373, %v1447
      %v1449 = vpop.f32.mrb[0].mxu0
      %v1450 = vadd.f32 %v369, %v1449
      %v1451 = vpop.f32.mrb[0].mxu0
      %v1452 = vadd.f32 %v373, %v1451
      %1453 = vmatprep.mubr.bf16.mxu0 %v1305
      %1454 = vmatmul.mubr.bf16.gmra.mrb[0].mxu0 %v604
      %v1455 = vpop.f32.mrb[0].mxu0
      %v1456 = vadd.f32 %v369, %v1455
      %v1457 = vpop.f32.mrb[0].mxu0
      %v1458 = vadd.f32 %v373, %v1457
      %v1459 = vpop.f32.mrb[0].mxu0
      %v1460 = vadd.f32 %v369, %v1459
      %v1461 = vpop.f32.mrb[0].mxu0
      %v1462 = vadd.f32 %v373, %v1461
      %1463 = vmatprep.mubr.bf16.mxu0 %v1308
      %1464 = vmatmul.mubr.bf16.gmra.mrb[0].mxu0 %v606
      %v1465 = vpop.f32.mrb[0].mxu0
      %v1466 = vadd.f32 %v369, %v1465
      %v1467 = vpop.f32.mrb[0].mxu0
      %v1468 = vadd.f32 %v373, %v1467
      %v1469 = vpop.f32.mrb[0].mxu0
      %v1470 = vadd.f32 %v369, %v1469
      %v1471 = vpop.f32.mrb[0].mxu0
      %v1472 = vadd.f32 %v373, %v1471
      %1473 = vmatprep.mubr.bf16.mxu0 %v1311
      %1474 = vmatmul.mubr.bf16.gmra.mrb[0].mxu0 %v608
      %v1475 = vpop.f32.mrb[0].mxu0
      %v1476 = vadd.f32 %v369, %v1475
      %v1477 = vpop.f32.mrb[0].mxu0
      %v1478 = vadd.f32 %v373, %v1477
      %v1479 = vpop.f32.mrb[0].mxu0
      %v1480 = vadd.f32 %v369, %v1479
      %v1481 = vpop.f32.mrb[0].mxu0
      %v1482 = vadd.f32 %v373, %v1481
      %1483 = vmatprep.mubr.bf16.mxu0 %v1314
      %1484 = vmatmul.mubr.bf16.gmra.mrb[0].mxu0 %v610
      %v1485 = vpop.f32.mrb[0].mxu0
      %v1486 = vadd.f32 %v369, %v1485
      %v1487 = vpop.f32.mrb[0].mxu0
      %v1488 = vadd.f32 %v373, %v1487
      %v1489 = vpop.f32.mrb[0].mxu0
      %v1490 = vadd.f32 %v369, %v1489
      %v1491 = vpop.f32.mrb[0].mxu0
      %v1492 = vadd.f32 %v373, %v1491
      %1493 = vmatprep.mubr.bf16.mxu0 %v1317
      %1494 = vmatmul.mubr.bf16.gmra.mrb[0].mxu0 %v612
      %v1495 = vpop.f32.mrb[0].mxu0
      %v1496 = vadd.f32 %v369, %v1495
      %v1497 = vpop.f32.mrb[0].mxu0
      %v1498 = vadd.f32 %v373, %v1497
      %v1499 = vpop.f32.mrb[0].mxu0
      %v1500 = vadd.f32 %v369, %v1499
      %v1501 = vpop.f32.mrb[0].mxu0
      %v1502 = vadd.f32 %v373, %v1501
      %1503 = vmatprep.mubr.bf16.mxu0 %v1320
      %1504 = vmatmul.mubr.bf16.gmra.mrb[0].mxu0 %v614
      %v1505 = vpop.f32.mrb[0].mxu0
      %v1506 = vadd.f32 %v369, %v1505
      %v1507 = vpop.f32.mrb[0].mxu0
      %v1508 = vadd.f32 %v373, %v1507
      %v1509 = vpop.f32.mrb[0].mxu0
      %v1510 = vadd.f32 %v369, %v1509
      %v1511 = vpop.f32.mrb[0].mxu0
      %v1512 = vadd.f32 %v373, %v1511
      %1513 = vmatprep.mubr.bf16.mxu0 %v1323
      %1514 = vmatmul.mubr.bf16.gmra.mrb[0].mxu0 %v616
      %v1515 = vpop.f32.mrb[0].mxu0
      %v1516 = vadd.f32 %v369, %v1515
      %v1517 = vpop.f32.mrb[0].mxu0
      %v1518 = vadd.f32 %v373, %v1517
      %v1519 = vpop.f32.mrb[0].mxu0
      %v1520 = vadd.f32 %v369, %v1519
      %v1521 = vpop.f32.mrb[0].mxu0
      %v1522 = vadd.f32 %v373, %v1521
      %1523 = vmatprep.mubr.bf16.mxu0 %v1326
      %1524 = vmatmul.mubr.bf16.gmra.mrb[0].mxu0 %v618
      %v1525 = vpop.f32.mrb[0].mxu0
      %v1526 = vadd.f32 %v369, %v1525
      %v1527 = vpop.f32.mrb[0].mxu0
      %v1528 = vadd.f32 %v373, %v1527
      %v1529 = vpop.f32.mrb[0].mxu0
      %v1530 = vadd.f32 %v369, %v1529
      %v1531 = vpop.f32.mrb[0].mxu0
      %v1532 = vadd.f32 %v373, %v1531
      %1533 = vmatprep.mubr.bf16.mxu0 %v1329
      %1534 = vmatmul.mubr.bf16.gmra.mrb[0].mxu0 %v620
      %v1535 = vpop.f32.mrb[0].mxu0
      %v1536 = vadd.f32 %v369, %v1535
      %v1537 = vpop.f32.mrb[0].mxu0
      %v1538 = vadd.f32 %v373, %v1537
      %v1539 = vpop.f32.mrb[0].mxu0
      %v1540 = vadd.f32 %v369, %v1539
      %v1541 = vpop.f32.mrb[0].mxu0
      %v1542 = vadd.f32 %v373, %v1541
      %1543 = vmatprep.mubr.bf16.mxu0 %v1332
      %1544 = vmatmul.mubr.bf16.gmra.mrb[0].mxu0 %v622
      %v1545 = vpop.f32.mrb[0].mxu0
      %v1546 = vadd.f32 %v369, %v1545
      %v1547 = vpop.f32.mrb[0].mxu0
      %v1548 = vadd.f32 %v373, %v1547
      %v1549 = vpop.f32.mrb[0].mxu0
      %v1550 = vadd.f32 %v369, %v1549
      %v1551 = vpop.f32.mrb[0].mxu0
      %v1552 = vadd.f32 %v373, %v1551
      %1553 = vmatprep.mubr.bf16.mxu0 %v1335
      %1554 = vmatmul.mubr.bf16.gmra.mrb[0].mxu0 %v624
      %v1555 = vpop.f32.mrb[0].mxu0
      %v1556 = vadd.f32 %v369, %v1555
      %v1557 = vpop.f32.mrb[0].mxu0
      %v1558 = vadd.f32 %v373, %v1557
      %v1559 = vpop.f32.mrb[0].mxu0
      %v1560 = vadd.f32 %v369, %v1559
      %v1561 = vpop.f32.mrb[0].mxu0
      %v1562 = vadd.f32 %v373, %v1561
      %1563 = vmatprep.mubr.bf16.mxu0 %v1338
      %1564 = vmatmul.mubr.bf16.gmra.mrb[0].mxu0 %v626
      %v1565 = vpop.f32.mrb[0].mxu0
      %v1566 = vadd.f32 %v369, %v1565
      %v1567 = vpop.f32.mrb[0].mxu0
      %v1568 = vadd.f32 %v373, %v1567
      %v1569 = vpop.f32.mrb[0].mxu0
      %v1570 = vadd.f32 %v369, %v1569
      %v1571 = vpop.f32.mrb[0].mxu0
      %v1572 = vadd.f32 %v373, %v1571
      %1573 = vmatprep.mubr.bf16.mxu0 %v1341
      %1574 = vmatmul.mubr.bf16.gmra.mrb[0].mxu0 %v628
      %v1575 = vpop.f32.mrb[0].mxu0
      %v1576 = vadd.f32 %v369, %v1575
      %v1577 = vpop.f32.mrb[0].mxu0
      %v1578 = vadd.f32 %v373, %v1577
      %v1579 = vpop.f32.mrb[0].mxu0
      %v1580 = vadd.f32 %v369, %v1579
      %v1581 = vpop.f32.mrb[0].mxu0
      %v1582 = vadd.f32 %v373, %v1581
      %1583 = vmatprep.mubr.bf16.mxu0 %v1344
      %1584 = vmatmul.mubr.bf16.gmra.mrb[0].mxu0 %v630
      %v1585 = vpop.f32.mrb[0].mxu0
      %v1586 = vadd.f32 %v369, %v1585
      %v1587 = vpop.f32.mrb[0].mxu0
      %v1588 = vadd.f32 %v373, %v1587
      %v1589 = vpop.f32.mrb[0].mxu0
      %v1590 = vadd.f32 %v369, %v1589
      %v1591 = vpop.f32.mrb[0].mxu0
      %v1592 = vadd.f32 %v373, %v1591
      %1593 = vmatprep.mubr.bf16.mxu0 %v1347
      %1594 = vmatmul.mubr.bf16.gmra.mrb[0].mxu0 %v632
      %v1595 = vpop.f32.mrb[0].mxu0
      %v1596 = vadd.f32 %v369, %v1595
      %v1597 = vpop.f32.mrb[0].mxu0
      %v1598 = vadd.f32 %v373, %v1597
      %v1599 = vpop.f32.mrb[0].mxu0
      %v1600 = vadd.f32 %v369, %v1599
      %v1601 = vpop.f32.mrb[0].mxu0
      %v1602 = vadd.f32 %v373, %v1601
      %1603 = vmatprep.mubr.bf16.mxu0 %v1350
      %1604 = vmatmul.mubr.bf16.gmra.mrb[0].mxu0 %v634
      %v1605 = vpop.f32.mrb[0].mxu0
      %v1606 = vadd.f32 %v369, %v1605
      %v1607 = vpop.f32.mrb[0].mxu0
      %v1608 = vadd.f32 %v373, %v1607
      %v1609 = vpop.f32.mrb[0].mxu0
      %v1610 = vadd.f32 %v369, %v1609
      %v1611 = vpop.f32.mrb[0].mxu0
      %v1612 = vadd.f32 %v373, %v1611
      %1613 = vmatprep.mubr.bf16.mxu0 %v1353
      %1614 = vmatmul.mubr.bf16.gmra.mrb[0].mxu0 %v636
      %v1615 = vpop.f32.mrb[0].mxu0
      %v1616 = vadd.f32 %v369, %v1615
      %v1617 = vpop.f32.mrb[0].mxu0
      %v1618 = vadd.f32 %v373, %v1617
      %v1619 = vpop.f32.mrb[0].mxu0
      %v1620 = vadd.f32 %v369, %v1619
      %v1621 = vpop.f32.mrb[0].mxu0
      %v1622 = vadd.f32 %v373, %v1621
      %1623 = vmatprep.mubr.bf16.mxu0 %v1356
      %1624 = vmatmul.mubr.bf16.gmra.mrb[0].mxu0 %v638
      %v1625 = vpop.f32.mrb[0].mxu0
      %v1626 = vadd.f32 %v369, %v1625
      %v1627 = vpop.f32.mrb[0].mxu0
      %v1628 = vadd.f32 %v373, %v1627
      %v1629 = vpop.f32.mrb[0].mxu0
      %v1630 = vadd.f32 %v369, %v1629
      %v1631 = vpop.f32.mrb[0].mxu0
      %v1632 = vadd.f32 %v373, %v1631
      %1633 = vmatprep.mubr.bf16.mxu0 %v1359
      %1634 = vmatmul.mubr.bf16.gmra.mrb[0].mxu0 %v640
      %v1635 = vpop.f32.mrb[0].mxu0
      %v1636 = vadd.f32 %v369, %v1635
      %v1637 = vpop.f32.mrb[0].mxu0
      %v1638 = vadd.f32 %v373, %v1637
      %v1639 = vpop.f32.mrb[0].mxu0
      %v1640 = vadd.f32 %v369, %v1639
      %v1641 = vpop.f32.mrb[0].mxu0
      %v1642 = vadd.f32 %v373, %v1641
      %1643 = vmatprep.mubr.bf16.mxu0 %v1362
      %1644 = vmatmul.mubr.bf16.gmra.mrb[0].mxu0 %v642
      %v1645 = vpop.f32.mrb[0].mxu0
      %v1646 = vadd.f32 %v369, %v1645
      %v1647 = vpop.f32.mrb[0].mxu0
      %v1648 = vadd.f32 %v373, %v1647
      %v1649 = vpop.f32.mrb[0].mxu0
      %v1650 = vadd.f32 %v369, %v1649
      %v1651 = vpop.f32.mrb[0].mxu0
      %v1652 = vadd.f32 %v373, %v1651
      %1653 = vmatprep.mubr.bf16.mxu0 %v1365
      %1654 = vmatmul.mubr.bf16.gmra.mrb[0].mxu0 %v644
      %v1655 = vpop.f32.mrb[0].mxu0
      %v1656 = vadd.f32 %v369, %v1655
      %v1657 = vpop.f32.mrb[0].mxu0
      %v1658 = vadd.f32 %v373, %v1657
      %v1659 = vpop.f32.mrb[0].mxu0
      %v1660 = vadd.f32 %v369, %v1659
      %v1661 = vpop.f32.mrb[0].mxu0
      %v1662 = vadd.f32 %v373, %v1661
      %1663 = vmatprep.mubr.bf16.mxu0 %v1368
      %1664 = vmatmul.mubr.bf16.gmra.mrb[0].mxu0 %v646
      %v1665 = vpop.f32.mrb[0].mxu0
      %v1666 = vadd.f32 %v369, %v1665
      %v1667 = vpop.f32.mrb[0].mxu0
      %v1668 = vadd.f32 %v373, %v1667
      %v1669 = vpop.f32.mrb[0].mxu0
      %v1670 = vadd.f32 %v369, %v1669
      %v1671 = vpop.f32.mrb[0].mxu0
      %v1672 = vadd.f32 %v373, %v1671
      %1673 = vmatprep.mubr.bf16.mxu0 %v1371
      %1674 = vmatmul.mubr.bf16.gmra.mrb[0].mxu0 %v648
      %v1675 = vpop.f32.mrb[0].mxu0
      %v1676 = vadd.f32 %v369, %v1675
      %v1677 = vpop.f32.mrb[0].mxu0
      %v1678 = vadd.f32 %v373, %v1677
      %v1679 = vpop.f32.mrb[0].mxu0
      %v1680 = vadd.f32 %v369, %v1679
      %v1681 = vpop.f32.mrb[0].mxu0
      %v1682 = vadd.f32 %v373, %v1681
      %1683 = vmatprep.mubr.bf16.mxu0 %v1374
      %1684 = vmatmul.mubr.bf16.gmra.mrb[0].mxu0 %v650
      %v1685 = vpop.f32.mrb[0].mxu0
      %v1686 = vadd.f32 %v369, %v1685
      %v1687 = vpop.f32.mrb[0].mxu0
      %v1688 = vadd.f32 %v373, %v1687
      %v1689 = vpop.f32.mrb[0].mxu0
      %v1690 = vadd.f32 %v369, %v1689
      %v1691 = vpop.f32.mrb[0].mxu0
      %v1692 = vadd.f32 %v373, %v1691
      %1693 = vmatprep.mubr.bf16.mxu0 %v1377
      %1694 = vmatmul.mubr.bf16.gmra.mrb[0].mxu0 %v652
      %v1695 = vpop.f32.mrb[0].mxu0
      %v1696 = vadd.f32 %v369, %v1695
      %v1697 = vpop.f32.mrb[0].mxu0
      %v1698 = vadd.f32 %v373, %v1697
      %v1699 = vpop.f32.mrb[0].mxu0
      %v1700 = vadd.f32 %v369, %v1699
      %v1701 = vpop.f32.mrb[0].mxu0
      %v1702 = vadd.f32 %v373, %v1701
      %1703 = vmatprep.mubr.bf16.mxu0 %v1380
      %1704 = vmatmul.mubr.bf16.gmra.mrb[0].mxu0 %v654
      %v1705 = vpop.f32.mrb[0].mxu0
      %v1706 = vadd.f32 %v369, %v1705
      %v1707 = vpop.f32.mrb[0].mxu0
      %v1708 = vadd.f32 %v373, %v1707
      %v1709 = vpop.f32.mrb[0].mxu0
      %v1710 = vadd.f32 %v369, %v1709
      %v1711 = vpop.f32.mrb[0].mxu0
      %v1712 = vadd.f32 %v373, %v1711
      %1713 = vmatprep.mubr.bf16.mxu0 %v1383
      %1714 = vmatmul.mubr.bf16.gmra.mrb[0].mxu0 %v656
      %v1715 = vpop.f32.mrb[0].mxu0
      %v1716 = vadd.f32 %v369, %v1715
      %v1717 = vpop.f32.mrb[0].mxu0
      %v1718 = vadd.f32 %v373, %v1717
      %v1719 = vpop.f32.mrb[0].mxu0
      %v1720 = vadd.f32 %v369, %v1719
      %v1721 = vpop.f32.mrb[0].mxu0
      %v1722 = vadd.f32 %v373, %v1721
      %1723 = vmatprep.mubr.bf16.mxu0 %v1386
      %1724 = vmatmul.mubr.bf16.gmra.mrb[0].mxu0 %v658
      %v1725 = vpop.f32.mrb[0].mxu0
      %v1726 = vadd.f32 %v369, %v1725
      %v1727 = vpop.f32.mrb[0].mxu0
      %v1728 = vadd.f32 %v373, %v1727
      %v1729 = vpop.f32.mrb[0].mxu0
      %v1730 = vadd.f32 %v369, %v1729
      %v1731 = vpop.f32.mrb[0].mxu0
      %v1732 = vadd.f32 %v373, %v1731
      %1733 = vmatprep.mubr.bf16.mxu0 %v1389
      %1734 = vmatmul.mubr.bf16.gmra.mrb[0].mxu0 %v660
      %v1735 = vpop.f32.mrb[0].mxu0
      %v1736 = vadd.f32 %v369, %v1735
      %v1737 = vpop.f32.mrb[0].mxu0
      %v1738 = vadd.f32 %v373, %v1737
      %v1739 = vpop.f32.mrb[0].mxu0
      %v1740 = vadd.f32 %v369, %v1739
      %v1741 = vpop.f32.mrb[0].mxu0
      %v1742 = vadd.f32 %v373, %v1741
      %1743 = vdwg.mxu0
      %1744 = vmatprep.subr.bf16.mxu0 %v1057
      %1745 = vmatpush1.bf16.msra.mxu0 %v1056
      %1746 = vmatprep.subr.bf16.mxu0 %v1065
      %1747 = vmatpush1.bf16.msra.mxu0 %v1064
      %1748 = vmatprep.subr.bf16.mxu0 %v1073
      %1749 = vmatpush1.bf16.msra.mxu0 %v1072
      %1750 = vmatprep.subr.bf16.mxu0 %v1081
      %1751 = vmatpush1.bf16.msra.mxu0 %v1080
      %1752 = vmatprep.subr.bf16.mxu0 %v1089
      %1753 = vmatpush1.bf16.msra.mxu0 %v1088
      %1754 = vmatprep.subr.bf16.mxu0 %v1097
      %1755 = vmatpush1.bf16.msra.mxu0 %v1096
      %1756 = vmatprep.subr.bf16.mxu0 %v1105
      %1757 = vmatpush1.bf16.msra.mxu0 %v1104
      %1758 = vmatprep.subr.bf16.mxu0 %v1113
      %1759 = vmatpush1.bf16.msra.mxu0 %v1112
      %1760 = vmatprep.subr.bf16.mxu0 %v1121
      %1761 = vmatpush1.bf16.msra.mxu0 %v1120
      %1762 = vmatprep.subr.bf16.mxu0 %v1129
      %1763 = vmatpush1.bf16.msra.mxu0 %v1128
      %1764 = vmatprep.subr.bf16.mxu0 %v1137
      %1765 = vmatpush1.bf16.msra.mxu0 %v1136
      %1766 = vmatprep.subr.bf16.mxu0 %v1145
      %1767 = vmatpush1.bf16.msra.mxu0 %v1144
      %1768 = vmatprep.subr.bf16.mxu0 %v1153
      %1769 = vmatpush1.bf16.msra.mxu0 %v1152
      %1770 = vmatprep.subr.bf16.mxu0 %v1161
      %1771 = vmatpush1.bf16.msra.mxu0 %v1160
      %1772 = vmatprep.subr.bf16.mxu0 %v1169
      %1773 = vmatpush1.bf16.msra.mxu0 %v1168
      %1774 = vmatprep.subr.bf16.mxu0 0
      %1775 = vmatpush1.bf16.msra.mxu0 0
      %1776 = vmatprep.mubr.bf16.mxu0 %v1296
      %1777 = vmatmul.mubr.bf16.gmra.mrb[0].mxu0 %v598
      %v1778 = vpop.f32.mrb[0].mxu0
      %v1779 = vadd.f32 %v377, %v1778
      %v1780 = vpop.f32.mrb[0].mxu0
      %v1781 = vadd.f32 %v381, %v1780
      %v1782 = vpop.f32.mrb[0].mxu0
      %v1783 = vadd.f32 %v377, %v1782
      %v1784 = vpop.f32.mrb[0].mxu0
      %v1785 = vadd.f32 %v381, %v1784
      %1786 = vmatprep.mubr.bf16.mxu0 %v1299
      %1787 = vmatmul.mubr.bf16.gmra.mrb[0].mxu0 %v600
      %v1788 = vpop.f32.mrb[0].mxu0
      %v1789 = vadd.f32 %v377, %v1788
      %v1790 = vpop.f32.mrb[0].mxu0
      %v1791 = vadd.f32 %v381, %v1790
      %v1792 = vpop.f32.mrb[0].mxu0
      %v1793 = vadd.f32 %v377, %v1792
      %v1794 = vpop.f32.mrb[0].mxu0
      %v1795 = vadd.f32 %v381, %v1794
      %1796 = vmatprep.mubr.bf16.mxu0 %v1302
      %1797 = vmatmul.mubr.bf16.gmra.mrb[0].mxu0 %v602
      %v1798 = vpop.f32.mrb[0].mxu0
      %v1799 = vadd.f32 %v377, %v1798
      %v1800 = vpop.f32.mrb[0].mxu0
      %v1801 = vadd.f32 %v381, %v1800
      %v1802 = vpop.f32.mrb[0].mxu0
      %v1803 = vadd.f32 %v377, %v1802
      %v1804 = vpop.f32.mrb[0].mxu0
      %v1805 = vadd.f32 %v381, %v1804
      %1806 = vmatprep.mubr.bf16.mxu0 %v1305
      %1807 = vmatmul.mubr.bf16.gmra.mrb[0].mxu0 %v604
      %v1808 = vpop.f32.mrb[0].mxu0
      %v1809 = vadd.f32 %v377, %v1808
      %v1810 = vpop.f32.mrb[0].mxu0
      %v1811 = vadd.f32 %v381, %v1810
      %v1812 = vpop.f32.mrb[0].mxu0
      %v1813 = vadd.f32 %v377, %v1812
      %v1814 = vpop.f32.mrb[0].mxu0
      %v1815 = vadd.f32 %v381, %v1814
      %1816 = vmatprep.mubr.bf16.mxu0 %v1308
      %1817 = vmatmul.mubr.bf16.gmra.mrb[0].mxu0 %v606
      %v1818 = vpop.f32.mrb[0].mxu0
      %v1819 = vadd.f32 %v377, %v1818
      %v1820 = vpop.f32.mrb[0].mxu0
      %v1821 = vadd.f32 %v381, %v1820
      %v1822 = vpop.f32.mrb[0].mxu0
      %v1823 = vadd.f32 %v377, %v1822
      %v1824 = vpop.f32.mrb[0].mxu0
      %v1825 = vadd.f32 %v381, %v1824
      %1826 = vmatprep.mubr.bf16.mxu0 %v1311
      %1827 = vmatmul.mubr.bf16.gmra.mrb[0].mxu0 %v608
      %v1828 = vpop.f32.mrb[0].mxu0
      %v1829 = vadd.f32 %v377, %v1828
      %v1830 = vpop.f32.mrb[0].mxu0
      %v1831 = vadd.f32 %v381, %v1830
      %v1832 = vpop.f32.mrb[0].mxu0
      %v1833 = vadd.f32 %v377, %v1832
      %v1834 = vpop.f32.mrb[0].mxu0
      %v1835 = vadd.f32 %v381, %v1834
      %1836 = vmatprep.mubr.bf16.mxu0 %v1314
      %1837 = vmatmul.mubr.bf16.gmra.mrb[0].mxu0 %v610
      %v1838 = vpop.f32.mrb[0].mxu0
      %v1839 = vadd.f32 %v377, %v1838
      %v1840 = vpop.f32.mrb[0].mxu0
      %v1841 = vadd.f32 %v381, %v1840
      %v1842 = vpop.f32.mrb[0].mxu0
      %v1843 = vadd.f32 %v377, %v1842
      %v1844 = vpop.f32.mrb[0].mxu0
      %v1845 = vadd.f32 %v381, %v1844
      %1846 = vmatprep.mubr.bf16.mxu0 %v1317
      %1847 = vmatmul.mubr.bf16.gmra.mrb[0].mxu0 %v612
      %v1848 = vpop.f32.mrb[0].mxu0
      %v1849 = vadd.f32 %v377, %v1848
      %v1850 = vpop.f32.mrb[0].mxu0
      %v1851 = vadd.f32 %v381, %v1850
      %v1852 = vpop.f32.mrb[0].mxu0
      %v1853 = vadd.f32 %v377, %v1852
      %v1854 = vpop.f32.mrb[0].mxu0
      %v1855 = vadd.f32 %v381, %v1854
      %1856 = vmatprep.mubr.bf16.mxu0 %v1320
      %1857 = vmatmul.mubr.bf16.gmra.mrb[0].mxu0 %v614
      %v1858 = vpop.f32.mrb[0].mxu0
      %v1859 = vadd.f32 %v377, %v1858
      %v1860 = vpop.f32.mrb[0].mxu0
      %v1861 = vadd.f32 %v381, %v1860
      %v1862 = vpop.f32.mrb[0].mxu0
      %v1863 = vadd.f32 %v377, %v1862
      %v1864 = vpop.f32.mrb[0].mxu0
      %v1865 = vadd.f32 %v381, %v1864
      %1866 = vmatprep.mubr.bf16.mxu0 %v1323
      %1867 = vmatmul.mubr.bf16.gmra.mrb[0].mxu0 %v616
      %v1868 = vpop.f32.mrb[0].mxu0
      %v1869 = vadd.f32 %v377, %v1868
      %v1870 = vpop.f32.mrb[0].mxu0
      %v1871 = vadd.f32 %v381, %v1870
      %v1872 = vpop.f32.mrb[0].mxu0
      %v1873 = vadd.f32 %v377, %v1872
      %v1874 = vpop.f32.mrb[0].mxu0
      %v1875 = vadd.f32 %v381, %v1874
      %1876 = vmatprep.mubr.bf16.mxu0 %v1326
      %1877 = vmatmul.mubr.bf16.gmra.mrb[0].mxu0 %v618
      %v1878 = vpop.f32.mrb[0].mxu0
      %v1879 = vadd.f32 %v377, %v1878
      %v1880 = vpop.f32.mrb[0].mxu0
      %v1881 = vadd.f32 %v381, %v1880
      %v1882 = vpop.f32.mrb[0].mxu0
      %v1883 = vadd.f32 %v377, %v1882
      %v1884 = vpop.f32.mrb[0].mxu0
      %v1885 = vadd.f32 %v381, %v1884
      %1886 = vmatprep.mubr.bf16.mxu0 %v1329
      %1887 = vmatmul.mubr.bf16.gmra.mrb[0].mxu0 %v620
      %v1888 = vpop.f32.mrb[0].mxu0
      %v1889 = vadd.f32 %v377, %v1888
      %v1890 = vpop.f32.mrb[0].mxu0
      %v1891 = vadd.f32 %v381, %v1890
      %v1892 = vpop.f32.mrb[0].mxu0
      %v1893 = vadd.f32 %v377, %v1892
      %v1894 = vpop.f32.mrb[0].mxu0
      %v1895 = vadd.f32 %v381, %v1894
      %1896 = vmatprep.mubr.bf16.mxu0 %v1332
      %1897 = vmatmul.mubr.bf16.gmra.mrb[0].mxu0 %v622
      %v1898 = vpop.f32.mrb[0].mxu0
      %v1899 = vadd.f32 %v377, %v1898
      %v1900 = vpop.f32.mrb[0].mxu0
      %v1901 = vadd.f32 %v381, %v1900
      %v1902 = vpop.f32.mrb[0].mxu0
      %v1903 = vadd.f32 %v377, %v1902
      %v1904 = vpop.f32.mrb[0].mxu0
      %v1905 = vadd.f32 %v381, %v1904
      %1906 = vmatprep.mubr.bf16.mxu0 %v1335
      %1907 = vmatmul.mubr.bf16.gmra.mrb[0].mxu0 %v624
      %v1908 = vpop.f32.mrb[0].mxu0
      %v1909 = vadd.f32 %v377, %v1908
      %v1910 = vpop.f32.mrb[0].mxu0
      %v1911 = vadd.f32 %v381, %v1910
      %v1912 = vpop.f32.mrb[0].mxu0
      %v1913 = vadd.f32 %v377, %v1912
      %v1914 = vpop.f32.mrb[0].mxu0
      %v1915 = vadd.f32 %v381, %v1914
      %1916 = vmatprep.mubr.bf16.mxu0 %v1338
      %1917 = vmatmul.mubr.bf16.gmra.mrb[0].mxu0 %v626
      %v1918 = vpop.f32.mrb[0].mxu0
      %v1919 = vadd.f32 %v377, %v1918
      %v1920 = vpop.f32.mrb[0].mxu0
      %v1921 = vadd.f32 %v381, %v1920
      %v1922 = vpop.f32.mrb[0].mxu0
      %v1923 = vadd.f32 %v377, %v1922
      %v1924 = vpop.f32.mrb[0].mxu0
      %v1925 = vadd.f32 %v381, %v1924
      %1926 = vmatprep.mubr.bf16.mxu0 %v1341
      %1927 = vmatmul.mubr.bf16.gmra.mrb[0].mxu0 %v628
      %v1928 = vpop.f32.mrb[0].mxu0
      %v1929 = vadd.f32 %v377, %v1928
      %v1930 = vpop.f32.mrb[0].mxu0
      %v1931 = vadd.f32 %v381, %v1930
      %v1932 = vpop.f32.mrb[0].mxu0
      %v1933 = vadd.f32 %v377, %v1932
      %v1934 = vpop.f32.mrb[0].mxu0
      %v1935 = vadd.f32 %v381, %v1934
      %1936 = vmatprep.mubr.bf16.mxu0 %v1344
      %1937 = vmatmul.mubr.bf16.gmra.mrb[0].mxu0 %v630
      %v1938 = vpop.f32.mrb[0].mxu0
      %v1939 = vadd.f32 %v377, %v1938
      %v1940 = vpop.f32.mrb[0].mxu0
      %v1941 = vadd.f32 %v381, %v1940
      %v1942 = vpop.f32.mrb[0].mxu0
      %v1943 = vadd.f32 %v377, %v1942
      %v1944 = vpop.f32.mrb[0].mxu0
      %v1945 = vadd.f32 %v381, %v1944
      %1946 = vmatprep.mubr.bf16.mxu0 %v1347
      %1947 = vmatmul.mubr.bf16.gmra.mrb[0].mxu0 %v632
      %v1948 = vpop.f32.mrb[0].mxu0
      %v1949 = vadd.f32 %v377, %v1948
      %v1950 = vpop.f32.mrb[0].mxu0
      %v1951 = vadd.f32 %v381, %v1950
      %v1952 = vpop.f32.mrb[0].mxu0
      %v1953 = vadd.f32 %v377, %v1952
      %v1954 = vpop.f32.mrb[0].mxu0
      %v1955 = vadd.f32 %v381, %v1954
      %1956 = vmatprep.mubr.bf16.mxu0 %v1350
      %1957 = vmatmul.mubr.bf16.gmra.mrb[0].mxu0 %v634
      %v1958 = vpop.f32.mrb[0].mxu0
      %v1959 = vadd.f32 %v377, %v1958
      %v1960 = vpop.f32.mrb[0].mxu0
      %v1961 = vadd.f32 %v381, %v1960
      %v1962 = vpop.f32.mrb[0].mxu0
      %v1963 = vadd.f32 %v377, %v1962
      %v1964 = vpop.f32.mrb[0].mxu0
      %v1965 = vadd.f32 %v381, %v1964
      %1966 = vmatprep.mubr.bf16.mxu0 %v1353
      %1967 = vmatmul.mubr.bf16.gmra.mrb[0].mxu0 %v636
      %v1968 = vpop.f32.mrb[0].mxu0
      %v1969 = vadd.f32 %v377, %v1968
      %v1970 = vpop.f32.mrb[0].mxu0
      %v1971 = vadd.f32 %v381, %v1970
      %v1972 = vpop.f32.mrb[0].mxu0
      %v1973 = vadd.f32 %v377, %v1972
      %v1974 = vpop.f32.mrb[0].mxu0
      %v1975 = vadd.f32 %v381, %v1974
      %1976 = vmatprep.mubr.bf16.mxu0 %v1356
      %1977 = vmatmul.mubr.bf16.gmra.mrb[0].mxu0 %v638
      %v1978 = vpop.f32.mrb[0].mxu0
      %v1979 = vadd.f32 %v377, %v1978
      %v1980 = vpop.f32.mrb[0].mxu0
      %v1981 = vadd.f32 %v381, %v1980
      %v1982 = vpop.f32.mrb[0].mxu0
      %v1983 = vadd.f32 %v377, %v1982
      %v1984 = vpop.f32.mrb[0].mxu0
      %v1985 = vadd.f32 %v381, %v1984
      %1986 = vmatprep.mubr.bf16.mxu0 %v1359
      %1987 = vmatmul.mubr.bf16.gmra.mrb[0].mxu0 %v640
      %v1988 = vpop.f32.mrb[0].mxu0
      %v1989 = vadd.f32 %v377, %v1988
      %v1990 = vpop.f32.mrb[0].mxu0
      %v1991 = vadd.f32 %v381, %v1990
      %v1992 = vpop.f32.mrb[0].mxu0
      %v1993 = vadd.f32 %v377, %v1992
      %v1994 = vpop.f32.mrb[0].mxu0
      %v1995 = vadd.f32 %v381, %v1994
      %1996 = vmatprep.mubr.bf16.mxu0 %v1362
      %1997 = vmatmul.mubr.bf16.gmra.mrb[0].mxu0 %v642
      %v1998 = vpop.f32.mrb[0].mxu0
      %v1999 = vadd.f32 %v377, %v1998
      %v2000 = vpop.f32.mrb[0].mxu0
      %v2001 = vadd.f32 %v381, %v2000
      %v2002 = vpop.f32.mrb[0].mxu0
      %v2003 = vadd.f32 %v377, %v2002
      %v2004 = vpop.f32.mrb[0].mxu0
      %v2005 = vadd.f32 %v381, %v2004
      %2006 = vmatprep.mubr.bf16.mxu0 %v1365
      %2007 = vmatmul.mubr.bf16.gmra.mrb[0].mxu0 %v644
      %v2008 = vpop.f32.mrb[0].mxu0
      %v2009 = vadd.f32 %v377, %v2008
      %v2010 = vpop.f32.mrb[0].mxu0
      %v2011 = vadd.f32 %v381, %v2010
      %v2012 = vpop.f32.mrb[0].mxu0
      %v2013 = vadd.f32 %v377, %v2012
      %v2014 = vpop.f32.mrb[0].mxu0
      %v2015 = vadd.f32 %v381, %v2014
      %2016 = vmatprep.mubr.bf16.mxu0 %v1368
      %2017 = vmatmul.mubr.bf16.gmra.mrb[0].mxu0 %v646
      %v2018 = vpop.f32.mrb[0].mxu0
      %v2019 = vadd.f32 %v377, %v2018
      %v2020 = vpop.f32.mrb[0].mxu0
      %v2021 = vadd.f32 %v381, %v2020
      %v2022 = vpop.f32.mrb[0].mxu0
      %v2023 = vadd.f32 %v377, %v2022
      %v2024 = vpop.f32.mrb[0].mxu0
      %v2025 = vadd.f32 %v381, %v2024
      %2026 = vmatprep.mubr.bf16.mxu0 %v1371
      %2027 = vmatmul.mubr.bf16.gmra.mrb[0].mxu0 %v648
      %v2028 = vpop.f32.mrb[0].mxu0
      %v2029 = vadd.f32 %v377, %v2028
      %v2030 = vpop.f32.mrb[0].mxu0
      %v2031 = vadd.f32 %v381, %v2030
      %v2032 = vpop.f32.mrb[0].mxu0
      %v2033 = vadd.f32 %v377, %v2032
      %v2034 = vpop.f32.mrb[0].mxu0
      %v2035 = vadd.f32 %v381, %v2034
      %2036 = vmatprep.mubr.bf16.mxu0 %v1374
      %2037 = vmatmul.mubr.bf16.gmra.mrb[0].mxu0 %v650
      %v2038 = vpop.f32.mrb[0].mxu0
      %v2039 = vadd.f32 %v377, %v2038
      %v2040 = vpop.f32.mrb[0].mxu0
      %v2041 = vadd.f32 %v381, %v2040
      %v2042 = vpop.f32.mrb[0].mxu0
      %v2043 = vadd.f32 %v377, %v2042
      %v2044 = vpop.f32.mrb[0].mxu0
      %v2045 = vadd.f32 %v381, %v2044
      %2046 = vmatprep.mubr.bf16.mxu0 %v1377
      %2047 = vmatmul.mubr.bf16.gmra.mrb[0].mxu0 %v652
      %v2048 = vpop.f32.mrb[0].mxu0
      %v2049 = vadd.f32 %v377, %v2048
      %v2050 = vpop.f32.mrb[0].mxu0
      %v2051 = vadd.f32 %v381, %v2050
      %v2052 = vpop.f32.mrb[0].mxu0
      %v2053 = vadd.f32 %v377, %v2052
      %v2054 = vpop.f32.mrb[0].mxu0
      %v2055 = vadd.f32 %v381, %v2054
      %2056 = vmatprep.mubr.bf16.mxu0 %v1380
      %2057 = vmatmul.mubr.bf16.gmra.mrb[0].mxu0 %v654
      %v2058 = vpop.f32.mrb[0].mxu0
      %v2059 = vadd.f32 %v377, %v2058
      %v2060 = vpop.f32.mrb[0].mxu0
      %v2061 = vadd.f32 %v381, %v2060
      %v2062 = vpop.f32.mrb[0].mxu0
      %v2063 = vadd.f32 %v377, %v2062
      %v2064 = vpop.f32.mrb[0].mxu0
      %v2065 = vadd.f32 %v381, %v2064
      %2066 = vmatprep.mubr.bf16.mxu0 %v1383
      %2067 = vmatmul.mubr.bf16.gmra.mrb[0].mxu0 %v656
      %v2068 = vpop.f32.mrb[0].mxu0
      %v2069 = vadd.f32 %v377, %v2068
      %v2070 = vpop.f32.mrb[0].mxu0
      %v2071 = vadd.f32 %v381, %v2070
      %v2072 = vpop.f32.mrb[0].mxu0
      %v2073 = vadd.f32 %v377, %v2072
      %v2074 = vpop.f32.mrb[0].mxu0
      %v2075 = vadd.f32 %v381, %v2074
      %2076 = vmatprep.mubr.bf16.mxu0 %v1386
      %2077 = vmatmul.mubr.bf16.gmra.mrb[0].mxu0 %v658
      %v2078 = vpop.f32.mrb[0].mxu0
      %v2079 = vadd.f32 %v377, %v2078
      %v2080 = vpop.f32.mrb[0].mxu0
      %v2081 = vadd.f32 %v381, %v2080
      %v2082 = vpop.f32.mrb[0].mxu0
      %v2083 = vadd.f32 %v377, %v2082
      %v2084 = vpop.f32.mrb[0].mxu0
      %v2085 = vadd.f32 %v381, %v2084
      %2086 = vmatprep.mubr.bf16.mxu0 %v1389
      %2087 = vmatmul.mubr.bf16.gmra.mrb[0].mxu0 %v660
      %v2088 = vpop.f32.mrb[0].mxu0
      %v2089 = vadd.f32 %v377, %v2088
      %v2090 = vpop.f32.mrb[0].mxu0
      %v2091 = vadd.f32 %v381, %v2090
      %v2092 = vpop.f32.mrb[0].mxu0
      %v2093 = vadd.f32 %v377, %v2092
      %v2094 = vpop.f32.mrb[0].mxu0
      %v2095 = vadd.f32 %v381, %v2094
      %2096 = vdwg.mxu0
      %2097 = vmatprep.subr.bf16.mxu0 %v1059
      %2098 = vmatpush1.bf16.msra.mxu0 %v1058
      %2099 = vmatprep.subr.bf16.mxu0 %v1067
      %2100 = vmatpush1.bf16.msra.mxu0 %v1066
      %2101 = vmatprep.subr.bf16.mxu0 %v1075
      %2102 = vmatpush1.bf16.msra.mxu0 %v1074
      %2103 = vmatprep.subr.bf16.mxu0 %v1083
      %2104 = vmatpush1.bf16.msra.mxu0 %v1082
      %2105 = vmatprep.subr.bf16.mxu0 %v1091
      %2106 = vmatpush1.bf16.msra.mxu0 %v1090
      %2107 = vmatprep.subr.bf16.mxu0 %v1099
      %2108 = vmatpush1.bf16.msra.mxu0 %v1098
      %2109 = vmatprep.subr.bf16.mxu0 %v1107
      %2110 = vmatpush1.bf16.msra.mxu0 %v1106
      %2111 = vmatprep.subr.bf16.mxu0 %v1115
      %2112 = vmatpush1.bf16.msra.mxu0 %v1114
      %2113 = vmatprep.subr.bf16.mxu0 %v1123
      %2114 = vmatpush1.bf16.msra.mxu0 %v1122
      %2115 = vmatprep.subr.bf16.mxu0 %v1131
      %2116 = vmatpush1.bf16.msra.mxu0 %v1130
      %2117 = vmatprep.subr.bf16.mxu0 %v1139
      %2118 = vmatpush1.bf16.msra.mxu0 %v1138
      %2119 = vmatprep.subr.bf16.mxu0 %v1147
      %2120 = vmatpush1.bf16.msra.mxu0 %v1146
      %2121 = vmatprep.subr.bf16.mxu0 %v1155
      %2122 = vmatpush1.bf16.msra.mxu0 %v1154
      %2123 = vmatprep.subr.bf16.mxu0 %v1163
      %2124 = vmatpush1.bf16.msra.mxu0 %v1162
      %2125 = vmatprep.subr.bf16.mxu0 %v1171
      %2126 = vmatpush1.bf16.msra.mxu0 %v1170
      %2127 = vmatprep.subr.bf16.mxu0 0
      %2128 = vmatpush1.bf16.msra.mxu0 0
      %2129 = vmatprep.mubr.bf16.mxu0 %v1296
      %2130 = vmatmul.mubr.bf16.gmra.mrb[0].mxu0 %v598
      %v2131 = vpop.f32.mrb[0].mxu0
      %v2132 = vadd.f32 %v385, %v2131
      %v2133 = vpop.f32.mrb[0].mxu0
      %v2134 = vadd.f32 %v389, %v2133
      %v2135 = vpop.f32.mrb[0].mxu0
      %v2136 = vadd.f32 %v385, %v2135
      %v2137 = vpop.f32.mrb[0].mxu0
      %v2138 = vadd.f32 %v389, %v2137
      %2139 = vmatprep.mubr.bf16.mxu0 %v1299
      %2140 = vmatmul.mubr.bf16.gmra.mrb[0].mxu0 %v600
      %v2141 = vpop.f32.mrb[0].mxu0
      %v2142 = vadd.f32 %v385, %v2141
      %v2143 = vpop.f32.mrb[0].mxu0
      %v2144 = vadd.f32 %v389, %v2143
      %v2145 = vpop.f32.mrb[0].mxu0
      %v2146 = vadd.f32 %v385, %v2145
      %v2147 = vpop.f32.mrb[0].mxu0
      %v2148 = vadd.f32 %v389, %v2147
      %2149 = vmatprep.mubr.bf16.mxu0 %v1302
      %2150 = vmatmul.mubr.bf16.gmra.mrb[0].mxu0 %v602
      %v2151 = vpop.f32.mrb[0].mxu0
      %v2152 = vadd.f32 %v385, %v2151
      %v2153 = vpop.f32.mrb[0].mxu0
      %v2154 = vadd.f32 %v389, %v2153
      %v2155 = vpop.f32.mrb[0].mxu0
      %v2156 = vadd.f32 %v385, %v2155
      %v2157 = vpop.f32.mrb[0].mxu0
      %v2158 = vadd.f32 %v389, %v2157
      %2159 = vmatprep.mubr.bf16.mxu0 %v1305
      %2160 = vmatmul.mubr.bf16.gmra.mrb[0].mxu0 %v604
      %v2161 = vpop.f32.mrb[0].mxu0
      %v2162 = vadd.f32 %v385, %v2161
      %v2163 = vpop.f32.mrb[0].mxu0
      %v2164 = vadd.f32 %v389, %v2163
      %v2165 = vpop.f32.mrb[0].mxu0
      %v2166 = vadd.f32 %v385, %v2165
      %v2167 = vpop.f32.mrb[0].mxu0
      %v2168 = vadd.f32 %v389, %v2167
      %2169 = vmatprep.mubr.bf16.mxu0 %v1308
      %2170 = vmatmul.mubr.bf16.gmra.mrb[0].mxu0 %v606
      %v2171 = vpop.f32.mrb[0].mxu0
      %v2172 = vadd.f32 %v385, %v2171
      %v2173 = vpop.f32.mrb[0].mxu0
      %v2174 = vadd.f32 %v389, %v2173
      %v2175 = vpop.f32.mrb[0].mxu0
      %v2176 = vadd.f32 %v385, %v2175
      %v2177 = vpop.f32.mrb[0].mxu0
      %v2178 = vadd.f32 %v389, %v2177
      %2179 = vmatprep.mubr.bf16.mxu0 %v1311
      %2180 = vmatmul.mubr.bf16.gmra.mrb[0].mxu0 %v608
      %v2181 = vpop.f32.mrb[0].mxu0
      %v2182 = vadd.f32 %v385, %v2181
      %v2183 = vpop.f32.mrb[0].mxu0
      %v2184 = vadd.f32 %v389, %v2183
      %v2185 = vpop.f32.mrb[0].mxu0
      %v2186 = vadd.f32 %v385, %v2185
      %v2187 = vpop.f32.mrb[0].mxu0
      %v2188 = vadd.f32 %v389, %v2187
      %2189 = vmatprep.mubr.bf16.mxu0 %v1314
      %2190 = vmatmul.mubr.bf16.gmra.mrb[0].mxu0 %v610
      %v2191 = vpop.f32.mrb[0].mxu0
      %v2192 = vadd.f32 %v385, %v2191
      %v2193 = vpop.f32.mrb[0].mxu0
      %v2194 = vadd.f32 %v389, %v2193
      %v2195 = vpop.f32.mrb[0].mxu0
      %v2196 = vadd.f32 %v385, %v2195
      %v2197 = vpop.f32.mrb[0].mxu0
      %v2198 = vadd.f32 %v389, %v2197
      %2199 = vmatprep.mubr.bf16.mxu0 %v1317
      %2200 = vmatmul.mubr.bf16.gmra.mrb[0].mxu0 %v612
      %v2201 = vpop.f32.mrb[0].mxu0
      %v2202 = vadd.f32 %v385, %v2201
      %v2203 = vpop.f32.mrb[0].mxu0
      %v2204 = vadd.f32 %v389, %v2203
      %v2205 = vpop.f32.mrb[0].mxu0
      %v2206 = vadd.f32 %v385, %v2205
      %v2207 = vpop.f32.mrb[0].mxu0
      %v2208 = vadd.f32 %v389, %v2207
      %2209 = vmatprep.mubr.bf16.mxu0 %v1320
      %2210 = vmatmul.mubr.bf16.gmra.mrb[0].mxu0 %v614
      %v2211 = vpop.f32.mrb[0].mxu0
      %v2212 = vadd.f32 %v385, %v2211
      %v2213 = vpop.f32.mrb[0].mxu0
      %v2214 = vadd.f32 %v389, %v2213
      %v2215 = vpop.f32.mrb[0].mxu0
      %v2216 = vadd.f32 %v385, %v2215
      %v2217 = vpop.f32.mrb[0].mxu0
      %v2218 = vadd.f32 %v389, %v2217
      %2219 = vmatprep.mubr.bf16.mxu0 %v1323
      %2220 = vmatmul.mubr.bf16.gmra.mrb[0].mxu0 %v616
      %v2221 = vpop.f32.mrb[0].mxu0
      %v2222 = vadd.f32 %v385, %v2221
      %v2223 = vpop.f32.mrb[0].mxu0
      %v2224 = vadd.f32 %v389, %v2223
      %v2225 = vpop.f32.mrb[0].mxu0
      %v2226 = vadd.f32 %v385, %v2225
      %v2227 = vpop.f32.mrb[0].mxu0
      %v2228 = vadd.f32 %v389, %v2227
      %2229 = vmatprep.mubr.bf16.mxu0 %v1326
      %2230 = vmatmul.mubr.bf16.gmra.mrb[0].mxu0 %v618
      %v2231 = vpop.f32.mrb[0].mxu0
      %v2232 = vadd.f32 %v385, %v2231
      %v2233 = vpop.f32.mrb[0].mxu0
      %v2234 = vadd.f32 %v389, %v2233
      %v2235 = vpop.f32.mrb[0].mxu0
      %v2236 = vadd.f32 %v385, %v2235
      %v2237 = vpop.f32.mrb[0].mxu0
      %v2238 = vadd.f32 %v389, %v2237
      %2239 = vmatprep.mubr.bf16.mxu0 %v1329
      %2240 = vmatmul.mubr.bf16.gmra.mrb[0].mxu0 %v620
      %v2241 = vpop.f32.mrb[0].mxu0
      %v2242 = vadd.f32 %v385, %v2241
      %v2243 = vpop.f32.mrb[0].mxu0
      %v2244 = vadd.f32 %v389, %v2243
      %v2245 = vpop.f32.mrb[0].mxu0
      %v2246 = vadd.f32 %v385, %v2245
      %v2247 = vpop.f32.mrb[0].mxu0
      %v2248 = vadd.f32 %v389, %v2247
      %2249 = vmatprep.mubr.bf16.mxu0 %v1332
      %2250 = vmatmul.mubr.bf16.gmra.mrb[0].mxu0 %v622
      %v2251 = vpop.f32.mrb[0].mxu0
      %v2252 = vadd.f32 %v385, %v2251
      %v2253 = vpop.f32.mrb[0].mxu0
      %v2254 = vadd.f32 %v389, %v2253
      %v2255 = vpop.f32.mrb[0].mxu0
      %v2256 = vadd.f32 %v385, %v2255
      %v2257 = vpop.f32.mrb[0].mxu0
      %v2258 = vadd.f32 %v389, %v2257
      %2259 = vmatprep.mubr.bf16.mxu0 %v1335
      %2260 = vmatmul.mubr.bf16.gmra.mrb[0].mxu0 %v624
      %v2261 = vpop.f32.mrb[0].mxu0
      %v2262 = vadd.f32 %v385, %v2261
      %v2263 = vpop.f32.mrb[0].mxu0
      %v2264 = vadd.f32 %v389, %v2263
      %v2265 = vpop.f32.mrb[0].mxu0
      %v2266 = vadd.f32 %v385, %v2265
      %v2267 = vpop.f32.mrb[0].mxu0
      %v2268 = vadd.f32 %v389, %v2267
      %2269 = vmatprep.mubr.bf16.mxu0 %v1338
      %2270 = vmatmul.mubr.bf16.gmra.mrb[0].mxu0 %v626
      %v2271 = vpop.f32.mrb[0].mxu0
      %v2272 = vadd.f32 %v385, %v2271
      %v2273 = vpop.f32.mrb[0].mxu0
      %v2274 = vadd.f32 %v389, %v2273
      %v2275 = vpop.f32.mrb[0].mxu0
      %v2276 = vadd.f32 %v385, %v2275
      %v2277 = vpop.f32.mrb[0].mxu0
      %v2278 = vadd.f32 %v389, %v2277
      %2279 = vmatprep.mubr.bf16.mxu0 %v1341
      %2280 = vmatmul.mubr.bf16.gmra.mrb[0].mxu0 %v628
      %v2281 = vpop.f32.mrb[0].mxu0
      %v2282 = vadd.f32 %v385, %v2281
      %v2283 = vpop.f32.mrb[0].mxu0
      %v2284 = vadd.f32 %v389, %v2283
      %v2285 = vpop.f32.mrb[0].mxu0
      %v2286 = vadd.f32 %v385, %v2285
      %v2287 = vpop.f32.mrb[0].mxu0
      %v2288 = vadd.f32 %v389, %v2287
      %2289 = vmatprep.mubr.bf16.mxu0 %v1344
      %2290 = vmatmul.mubr.bf16.gmra.mrb[0].mxu0 %v630
      %v2291 = vpop.f32.mrb[0].mxu0
      %v2292 = vadd.f32 %v385, %v2291
      %v2293 = vpop.f32.mrb[0].mxu0
      %v2294 = vadd.f32 %v389, %v2293
      %v2295 = vpop.f32.mrb[0].mxu0
      %v2296 = vadd.f32 %v385, %v2295
      %v2297 = vpop.f32.mrb[0].mxu0
      %v2298 = vadd.f32 %v389, %v2297
      %2299 = vmatprep.mubr.bf16.mxu0 %v1347
      %2300 = vmatmul.mubr.bf16.gmra.mrb[0].mxu0 %v632
      %v2301 = vpop.f32.mrb[0].mxu0
      %v2302 = vadd.f32 %v385, %v2301
      %v2303 = vpop.f32.mrb[0].mxu0
      %v2304 = vadd.f32 %v389, %v2303
      %v2305 = vpop.f32.mrb[0].mxu0
      %v2306 = vadd.f32 %v385, %v2305
      %v2307 = vpop.f32.mrb[0].mxu0
      %v2308 = vadd.f32 %v389, %v2307
      %2309 = vmatprep.mubr.bf16.mxu0 %v1350
      %2310 = vmatmul.mubr.bf16.gmra.mrb[0].mxu0 %v634
      %v2311 = vpop.f32.mrb[0].mxu0
      %v2312 = vadd.f32 %v385, %v2311
      %v2313 = vpop.f32.mrb[0].mxu0
      %v2314 = vadd.f32 %v389, %v2313
      %v2315 = vpop.f32.mrb[0].mxu0
      %v2316 = vadd.f32 %v385, %v2315
      %v2317 = vpop.f32.mrb[0].mxu0
      %v2318 = vadd.f32 %v389, %v2317
      %2319 = vmatprep.mubr.bf16.mxu0 %v1353
      %2320 = vmatmul.mubr.bf16.gmra.mrb[0].mxu0 %v636
      %v2321 = vpop.f32.mrb[0].mxu0
      %v2322 = vadd.f32 %v385, %v2321
      %v2323 = vpop.f32.mrb[0].mxu0
      %v2324 = vadd.f32 %v389, %v2323
      %v2325 = vpop.f32.mrb[0].mxu0
      %v2326 = vadd.f32 %v385, %v2325
      %v2327 = vpop.f32.mrb[0].mxu0
      %v2328 = vadd.f32 %v389, %v2327
      %2329 = vmatprep.mubr.bf16.mxu0 %v1356
      %2330 = vmatmul.mubr.bf16.gmra.mrb[0].mxu0 %v638
      %v2331 = vpop.f32.mrb[0].mxu0
      %v2332 = vadd.f32 %v385, %v2331
      %v2333 = vpop.f32.mrb[0].mxu0
      %v2334 = vadd.f32 %v389, %v2333
      %v2335 = vpop.f32.mrb[0].mxu0
      %v2336 = vadd.f32 %v385, %v2335
      %v2337 = vpop.f32.mrb[0].mxu0
      %v2338 = vadd.f32 %v389, %v2337
      %2339 = vmatprep.mubr.bf16.mxu0 %v1359
      %2340 = vmatmul.mubr.bf16.gmra.mrb[0].mxu0 %v640
      %v2341 = vpop.f32.mrb[0].mxu0
      %v2342 = vadd.f32 %v385, %v2341
      %v2343 = vpop.f32.mrb[0].mxu0
      %v2344 = vadd.f32 %v389, %v2343
      %v2345 = vpop.f32.mrb[0].mxu0
      %v2346 = vadd.f32 %v385, %v2345
      %v2347 = vpop.f32.mrb[0].mxu0
      %v2348 = vadd.f32 %v389, %v2347
      %2349 = vmatprep.mubr.bf16.mxu0 %v1362
      %2350 = vmatmul.mubr.bf16.gmra.mrb[0].mxu0 %v642
      %v2351 = vpop.f32.mrb[0].mxu0
      %v2352 = vadd.f32 %v385, %v2351
      %v2353 = vpop.f32.mrb[0].mxu0
      %v2354 = vadd.f32 %v389, %v2353
      %v2355 = vpop.f32.mrb[0].mxu0
      %v2356 = vadd.f32 %v385, %v2355
      %v2357 = vpop.f32.mrb[0].mxu0
      %v2358 = vadd.f32 %v389, %v2357
      %2359 = vmatprep.mubr.bf16.mxu0 %v1365
      %2360 = vmatmul.mubr.bf16.gmra.mrb[0].mxu0 %v644
      %v2361 = vpop.f32.mrb[0].mxu0
      %v2362 = vadd.f32 %v385, %v2361
      %v2363 = vpop.f32.mrb[0].mxu0
      %v2364 = vadd.f32 %v389, %v2363
      %v2365 = vpop.f32.mrb[0].mxu0
      %v2366 = vadd.f32 %v385, %v2365
      %v2367 = vpop.f32.mrb[0].mxu0
      %v2368 = vadd.f32 %v389, %v2367
      %2369 = vmatprep.mubr.bf16.mxu0 %v1368
      %2370 = vmatmul.mubr.bf16.gmra.mrb[0].mxu0 %v646
      %v2371 = vpop.f32.mrb[0].mxu0
      %v2372 = vadd.f32 %v385, %v2371
      %v2373 = vpop.f32.mrb[0].mxu0
      %v2374 = vadd.f32 %v389, %v2373
      %v2375 = vpop.f32.mrb[0].mxu0
      %v2376 = vadd.f32 %v385, %v2375
      %v2377 = vpop.f32.mrb[0].mxu0
      %v2378 = vadd.f32 %v389, %v2377
      %2379 = vmatprep.mubr.bf16.mxu0 %v1371
      %2380 = vmatmul.mubr.bf16.gmra.mrb[0].mxu0 %v648
      %v2381 = vpop.f32.mrb[0].mxu0
      %v2382 = vadd.f32 %v385, %v2381
      %v2383 = vpop.f32.mrb[0].mxu0
      %v2384 = vadd.f32 %v389, %v2383
      %v2385 = vpop.f32.mrb[0].mxu0
      %v2386 = vadd.f32 %v385, %v2385
      %v2387 = vpop.f32.mrb[0].mxu0
      %v2388 = vadd.f32 %v389, %v2387
      %2389 = vmatprep.mubr.bf16.mxu0 %v1374
      %2390 = vmatmul.mubr.bf16.gmra.mrb[0].mxu0 %v650
      %v2391 = vpop.f32.mrb[0].mxu0
      %v2392 = vadd.f32 %v385, %v2391
      %v2393 = vpop.f32.mrb[0].mxu0
      %v2394 = vadd.f32 %v389, %v2393
      %v2395 = vpop.f32.mrb[0].mxu0
      %v2396 = vadd.f32 %v385, %v2395
      %v2397 = vpop.f32.mrb[0].mxu0
      %v2398 = vadd.f32 %v389, %v2397
      %2399 = vmatprep.mubr.bf16.mxu0 %v1377
      %2400 = vmatmul.mubr.bf16.gmra.mrb[0].mxu0 %v652
      %v2401 = vpop.f32.mrb[0].mxu0
      %v2402 = vadd.f32 %v385, %v2401
      %v2403 = vpop.f32.mrb[0].mxu0
      %v2404 = vadd.f32 %v389, %v2403
      %v2405 = vpop.f32.mrb[0].mxu0
      %v2406 = vadd.f32 %v385, %v2405
      %v2407 = vpop.f32.mrb[0].mxu0
      %v2408 = vadd.f32 %v389, %v2407
      %2409 = vmatprep.mubr.bf16.mxu0 %v1380
      %2410 = vmatmul.mubr.bf16.gmra.mrb[0].mxu0 %v654
      %v2411 = vpop.f32.mrb[0].mxu0
      %v2412 = vadd.f32 %v385, %v2411
      %v2413 = vpop.f32.mrb[0].mxu0
      %v2414 = vadd.f32 %v389, %v2413
      %v2415 = vpop.f32.mrb[0].mxu0
      %v2416 = vadd.f32 %v385, %v2415
      %v2417 = vpop.f32.mrb[0].mxu0
      %v2418 = vadd.f32 %v389, %v2417
      %2419 = vmatprep.mubr.bf16.mxu0 %v1383
      %2420 = vmatmul.mubr.bf16.gmra.mrb[0].mxu0 %v656
      %v2421 = vpop.f32.mrb[0].mxu0
      %v2422 = vadd.f32 %v385, %v2421
      %v2423 = vpop.f32.mrb[0].mxu0
      %v2424 = vadd.f32 %v389, %v2423
      %v2425 = vpop.f32.mrb[0].mxu0
      %v2426 = vadd.f32 %v385, %v2425
      %v2427 = vpop.f32.mrb[0].mxu0
      %v2428 = vadd.f32 %v389, %v2427
      %2429 = vmatprep.mubr.bf16.mxu0 %v1386
      %2430 = vmatmul.mubr.bf16.gmra.mrb[0].mxu0 %v658
      %v2431 = vpop.f32.mrb[0].mxu0
      %v2432 = vadd.f32 %v385, %v2431
      %v2433 = vpop.f32.mrb[0].mxu0
      %v2434 = vadd.f32 %v389, %v2433
      %v2435 = vpop.f32.mrb[0].mxu0
      %v2436 = vadd.f32 %v385, %v2435
      %v2437 = vpop.f32.mrb[0].mxu0
      %v2438 = vadd.f32 %v389, %v2437
      %2439 = vmatprep.mubr.bf16.mxu0 %v1389
      %2440 = vmatmul.mubr.bf16.gmra.mrb[0].mxu0 %v660
      %v2441 = vpop.f32.mrb[0].mxu0
      %v2442 = vadd.f32 %v385, %v2441
      %v2443 = vpop.f32.mrb[0].mxu0
      %v2444 = vadd.f32 %v389, %v2443
      %v2445 = vpop.f32.mrb[0].mxu0
      %v2446 = vadd.f32 %v385, %v2445
      %v2447 = vpop.f32.mrb[0].mxu0
      %v2448 = vadd.f32 %v389, %v2447
      %2449 = vdwg.mxu0
      %2450 = vmatprep.subr.bf16.mxu0 %v1061
      %2451 = vmatpush1.bf16.msra.mxu0 %v1060
      %2452 = vmatprep.subr.bf16.mxu0 %v1069
      %2453 = vmatpush1.bf16.msra.mxu0 %v1068
      %2454 = vmatprep.subr.bf16.mxu0 %v1077
      %2455 = vmatpush1.bf16.msra.mxu0 %v1076
      %2456 = vmatprep.subr.bf16.mxu0 %v1085
      %2457 = vmatpush1.bf16.msra.mxu0 %v1084
      %2458 = vmatprep.subr.bf16.mxu0 %v1093
      %2459 = vmatpush1.bf16.msra.mxu0 %v1092
      %2460 = vmatprep.subr.bf16.mxu0 %v1101
      %2461 = vmatpush1.bf16.msra.mxu0 %v1100
      %2462 = vmatprep.subr.bf16.mxu0 %v1109
      %2463 = vmatpush1.bf16.msra.mxu0 %v1108
      %2464 = vmatprep.subr.bf16.mxu0 %v1117
      %2465 = vmatpush1.bf16.msra.mxu0 %v1116
      %2466 = vmatprep.subr.bf16.mxu0 %v1125
      %2467 = vmatpush1.bf16.msra.mxu0 %v1124
      %2468 = vmatprep.subr.bf16.mxu0 %v1133
      %2469 = vmatpush1.bf16.msra.mxu0 %v1132
      %2470 = vmatprep.subr.bf16.mxu0 %v1141
      %2471 = vmatpush1.bf16.msra.mxu0 %v1140
      %2472 = vmatprep.subr.bf16.mxu0 %v1149
      %2473 = vmatpush1.bf16.msra.mxu0 %v1148
      %2474 = vmatprep.subr.bf16.mxu0 %v1157
      %2475 = vmatpush1.bf16.msra.mxu0 %v1156
      %2476 = vmatprep.subr.bf16.mxu0 %v1165
      %2477 = vmatpush1.bf16.msra.mxu0 %v1164
      %2478 = vmatprep.subr.bf16.mxu0 %v1173
      %2479 = vmatpush1.bf16.msra.mxu0 %v1172
      %2480 = vmatprep.subr.bf16.mxu0 0
      %2481 = vmatpush1.bf16.msra.mxu0 0
      %2482 = vmatprep.mubr.bf16.mxu0 %v1296
      %2483 = vmatmul.mubr.bf16.gmra.mrb[0].mxu0 %v598
      %v2484 = vpop.f32.mrb[0].mxu0
      %v2485 = vadd.f32 %v393, %v2484
      %v2486 = vpop.f32.mrb[0].mxu0
      %v2487 = vadd.f32 %v397, %v2486
      %v2488 = vpop.f32.mrb[0].mxu0
      %v2489 = vadd.f32 %v393, %v2488
      %v2490 = vpop.f32.mrb[0].mxu0
      %v2491 = vadd.f32 %v397, %v2490
      %2492 = vmatprep.mubr.bf16.mxu0 %v1299
      %2493 = vmatmul.mubr.bf16.gmra.mrb[0].mxu0 %v600
      %v2494 = vpop.f32.mrb[0].mxu0
      %v2495 = vadd.f32 %v393, %v2494
      %v2496 = vpop.f32.mrb[0].mxu0
      %v2497 = vadd.f32 %v397, %v2496
      %v2498 = vpop.f32.mrb[0].mxu0
      %v2499 = vadd.f32 %v393, %v2498
      %v2500 = vpop.f32.mrb[0].mxu0
      %v2501 = vadd.f32 %v397, %v2500
      %2502 = vmatprep.mubr.bf16.mxu0 %v1302
      %2503 = vmatmul.mubr.bf16.gmra.mrb[0].mxu0 %v602
      %v2504 = vpop.f32.mrb[0].mxu0
      %v2505 = vadd.f32 %v393, %v2504
      %v2506 = vpop.f32.mrb[0].mxu0
      %v2507 = vadd.f32 %v397, %v2506
      %v2508 = vpop.f32.mrb[0].mxu0
      %v2509 = vadd.f32 %v393, %v2508
      %v2510 = vpop.f32.mrb[0].mxu0
      %v2511 = vadd.f32 %v397, %v2510
      %2512 = vmatprep.mubr.bf16.mxu0 %v1305
      %2513 = vmatmul.mubr.bf16.gmra.mrb[0].mxu0 %v604
      %v2514 = vpop.f32.mrb[0].mxu0
      %v2515 = vadd.f32 %v393, %v2514
      %v2516 = vpop.f32.mrb[0].mxu0
      %v2517 = vadd.f32 %v397, %v2516
      %v2518 = vpop.f32.mrb[0].mxu0
      %v2519 = vadd.f32 %v393, %v2518
      %v2520 = vpop.f32.mrb[0].mxu0
      %v2521 = vadd.f32 %v397, %v2520
      %2522 = vmatprep.mubr.bf16.mxu0 %v1308
      %2523 = vmatmul.mubr.bf16.gmra.mrb[0].mxu0 %v606
      %v2524 = vpop.f32.mrb[0].mxu0
      %v2525 = vadd.f32 %v393, %v2524
      %v2526 = vpop.f32.mrb[0].mxu0
      %v2527 = vadd.f32 %v397, %v2526
      %v2528 = vpop.f32.mrb[0].mxu0
      %v2529 = vadd.f32 %v393, %v2528
      %v2530 = vpop.f32.mrb[0].mxu0
      %v2531 = vadd.f32 %v397, %v2530
      %2532 = vmatprep.mubr.bf16.mxu0 %v1311
      %2533 = vmatmul.mubr.bf16.gmra.mrb[0].mxu0 %v608
      %v2534 = vpop.f32.mrb[0].mxu0
      %v2535 = vadd.f32 %v393, %v2534
      %v2536 = vpop.f32.mrb[0].mxu0
      %v2537 = vadd.f32 %v397, %v2536
      %v2538 = vpop.f32.mrb[0].mxu0
      %v2539 = vadd.f32 %v393, %v2538
      %v2540 = vpop.f32.mrb[0].mxu0
      %v2541 = vadd.f32 %v397, %v2540
      %2542 = vmatprep.mubr.bf16.mxu0 %v1314
      %2543 = vmatmul.mubr.bf16.gmra.mrb[0].mxu0 %v610
      %v2544 = vpop.f32.mrb[0].mxu0
      %v2545 = vadd.f32 %v393, %v2544
      %v2546 = vpop.f32.mrb[0].mxu0
      %v2547 = vadd.f32 %v397, %v2546
      %v2548 = vpop.f32.mrb[0].mxu0
      %v2549 = vadd.f32 %v393, %v2548
      %v2550 = vpop.f32.mrb[0].mxu0
      %v2551 = vadd.f32 %v397, %v2550
      %2552 = vmatprep.mubr.bf16.mxu0 %v1317
      %2553 = vmatmul.mubr.bf16.gmra.mrb[0].mxu0 %v612
      %v2554 = vpop.f32.mrb[0].mxu0
      %v2555 = vadd.f32 %v393, %v2554
      %v2556 = vpop.f32.mrb[0].mxu0
      %v2557 = vadd.f32 %v397, %v2556
      %v2558 = vpop.f32.mrb[0].mxu0
      %v2559 = vadd.f32 %v393, %v2558
      %v2560 = vpop.f32.mrb[0].mxu0
      %v2561 = vadd.f32 %v397, %v2560
      %2562 = vmatprep.mubr.bf16.mxu0 %v1320
      %2563 = vmatmul.mubr.bf16.gmra.mrb[0].mxu0 %v614
      %v2564 = vpop.f32.mrb[0].mxu0
      %v2565 = vadd.f32 %v393, %v2564
      %v2566 = vpop.f32.mrb[0].mxu0
      %v2567 = vadd.f32 %v397, %v2566
      %v2568 = vpop.f32.mrb[0].mxu0
      %v2569 = vadd.f32 %v393, %v2568
      %v2570 = vpop.f32.mrb[0].mxu0
      %v2571 = vadd.f32 %v397, %v2570
      %2572 = vmatprep.mubr.bf16.mxu0 %v1323
      %2573 = vmatmul.mubr.bf16.gmra.mrb[0].mxu0 %v616
      %v2574 = vpop.f32.mrb[0].mxu0
      %v2575 = vadd.f32 %v393, %v2574
      %v2576 = vpop.f32.mrb[0].mxu0
      %v2577 = vadd.f32 %v397, %v2576
      %v2578 = vpop.f32.mrb[0].mxu0
      %v2579 = vadd.f32 %v393, %v2578
      %v2580 = vpop.f32.mrb[0].mxu0
      %v2581 = vadd.f32 %v397, %v2580
      %2582 = vmatprep.mubr.bf16.mxu0 %v1326
      %2583 = vmatmul.mubr.bf16.gmra.mrb[0].mxu0 %v618
      %v2584 = vpop.f32.mrb[0].mxu0
      %v2585 = vadd.f32 %v393, %v2584
      %v2586 = vpop.f32.mrb[0].mxu0
      %v2587 = vadd.f32 %v397, %v2586
      %v2588 = vpop.f32.mrb[0].mxu0
      %v2589 = vadd.f32 %v393, %v2588
      %v2590 = vpop.f32.mrb[0].mxu0
      %v2591 = vadd.f32 %v397, %v2590
      %2592 = vmatprep.mubr.bf16.mxu0 %v1329
      %2593 = vmatmul.mubr.bf16.gmra.mrb[0].mxu0 %v620
      %v2594 = vpop.f32.mrb[0].mxu0
      %v2595 = vadd.f32 %v393, %v2594
      %v2596 = vpop.f32.mrb[0].mxu0
      %v2597 = vadd.f32 %v397, %v2596
      %v2598 = vpop.f32.mrb[0].mxu0
      %v2599 = vadd.f32 %v393, %v2598
      %v2600 = vpop.f32.mrb[0].mxu0
      %v2601 = vadd.f32 %v397, %v2600
      %2602 = vmatprep.mubr.bf16.mxu0 %v1332
      %2603 = vmatmul.mubr.bf16.gmra.mrb[0].mxu0 %v622
      %v2604 = vpop.f32.mrb[0].mxu0
      %v2605 = vadd.f32 %v393, %v2604
      %v2606 = vpop.f32.mrb[0].mxu0
      %v2607 = vadd.f32 %v397, %v2606
      %v2608 = vpop.f32.mrb[0].mxu0
      %v2609 = vadd.f32 %v393, %v2608
      %v2610 = vpop.f32.mrb[0].mxu0
      %v2611 = vadd.f32 %v397, %v2610
      %2612 = vmatprep.mubr.bf16.mxu0 %v1335
      %2613 = vmatmul.mubr.bf16.gmra.mrb[0].mxu0 %v624
      %v2614 = vpop.f32.mrb[0].mxu0
      %v2615 = vadd.f32 %v393, %v2614
      %v2616 = vpop.f32.mrb[0].mxu0
      %v2617 = vadd.f32 %v397, %v2616
      %v2618 = vpop.f32.mrb[0].mxu0
      %v2619 = vadd.f32 %v393, %v2618
      %v2620 = vpop.f32.mrb[0].mxu0
      %v2621 = vadd.f32 %v397, %v2620
      %2622 = vmatprep.mubr.bf16.mxu0 %v1338
      %2623 = vmatmul.mubr.bf16.gmra.mrb[0].mxu0 %v626
      %v2624 = vpop.f32.mrb[0].mxu0
      %v2625 = vadd.f32 %v393, %v2624
      %v2626 = vpop.f32.mrb[0].mxu0
      %v2627 = vadd.f32 %v397, %v2626
      %v2628 = vpop.f32.mrb[0].mxu0
      %v2629 = vadd.f32 %v393, %v2628
      %v2630 = vpop.f32.mrb[0].mxu0
      %v2631 = vadd.f32 %v397, %v2630
      %2632 = vmatprep.mubr.bf16.mxu0 %v1341
      %2633 = vmatmul.mubr.bf16.gmra.mrb[0].mxu0 %v628
      %v2634 = vpop.f32.mrb[0].mxu0
      %v2635 = vadd.f32 %v393, %v2634
      %v2636 = vpop.f32.mrb[0].mxu0
      %v2637 = vadd.f32 %v397, %v2636
      %v2638 = vpop.f32.mrb[0].mxu0
      %v2639 = vadd.f32 %v393, %v2638
      %v2640 = vpop.f32.mrb[0].mxu0
      %v2641 = vadd.f32 %v397, %v2640
      %2642 = vmatprep.mubr.bf16.mxu0 %v1344
      %2643 = vmatmul.mubr.bf16.gmra.mrb[0].mxu0 %v630
      %v2644 = vpop.f32.mrb[0].mxu0
      %v2645 = vadd.f32 %v393, %v2644
      %v2646 = vpop.f32.mrb[0].mxu0
      %v2647 = vadd.f32 %v397, %v2646
      %v2648 = vpop.f32.mrb[0].mxu0
      %v2649 = vadd.f32 %v393, %v2648
      %v2650 = vpop.f32.mrb[0].mxu0
      %v2651 = vadd.f32 %v397, %v2650
      %2652 = vmatprep.mubr.bf16.mxu0 %v1347
      %2653 = vmatmul.mubr.bf16.gmra.mrb[0].mxu0 %v632
      %v2654 = vpop.f32.mrb[0].mxu0
      %v2655 = vadd.f32 %v393, %v2654
      %v2656 = vpop.f32.mrb[0].mxu0
      %v2657 = vadd.f32 %v397, %v2656
      %v2658 = vpop.f32.mrb[0].mxu0
      %v2659 = vadd.f32 %v393, %v2658
      %v2660 = vpop.f32.mrb[0].mxu0
      %v2661 = vadd.f32 %v397, %v2660
      %2662 = vmatprep.mubr.bf16.mxu0 %v1350
      %2663 = vmatmul.mubr.bf16.gmra.mrb[0].mxu0 %v634
      %v2664 = vpop.f32.mrb[0].mxu0
      %v2665 = vadd.f32 %v393, %v2664
      %v2666 = vpop.f32.mrb[0].mxu0
      %v2667 = vadd.f32 %v397, %v2666
      %v2668 = vpop.f32.mrb[0].mxu0
      %v2669 = vadd.f32 %v393, %v2668
      %v2670 = vpop.f32.mrb[0].mxu0
      %v2671 = vadd.f32 %v397, %v2670
      %2672 = vmatprep.mubr.bf16.mxu0 %v1353
      %2673 = vmatmul.mubr.bf16.gmra.mrb[0].mxu0 %v636
      %v2674 = vpop.f32.mrb[0].mxu0
      %v2675 = vadd.f32 %v393, %v2674
      %v2676 = vpop.f32.mrb[0].mxu0
      %v2677 = vadd.f32 %v397, %v2676
      %v2678 = vpop.f32.mrb[0].mxu0
      %v2679 = vadd.f32 %v393, %v2678
      %v2680 = vpop.f32.mrb[0].mxu0
      %v2681 = vadd.f32 %v397, %v2680
      %2682 = vmatprep.mubr.bf16.mxu0 %v1356
      %2683 = vmatmul.mubr.bf16.gmra.mrb[0].mxu0 %v638
      %v2684 = vpop.f32.mrb[0].mxu0
      %v2685 = vadd.f32 %v393, %v2684
      %v2686 = vpop.f32.mrb[0].mxu0
      %v2687 = vadd.f32 %v397, %v2686
      %v2688 = vpop.f32.mrb[0].mxu0
      %v2689 = vadd.f32 %v393, %v2688
      %v2690 = vpop.f32.mrb[0].mxu0
      %v2691 = vadd.f32 %v397, %v2690
      %2692 = vmatprep.mubr.bf16.mxu0 %v1359
      %2693 = vmatmul.mubr.bf16.gmra.mrb[0].mxu0 %v640
      %v2694 = vpop.f32.mrb[0].mxu0
      %v2695 = vadd.f32 %v393, %v2694
      %v2696 = vpop.f32.mrb[0].mxu0
      %v2697 = vadd.f32 %v397, %v2696
      %v2698 = vpop.f32.mrb[0].mxu0
      %v2699 = vadd.f32 %v393, %v2698
      %v2700 = vpop.f32.mrb[0].mxu0
      %v2701 = vadd.f32 %v397, %v2700
      %2702 = vmatprep.mubr.bf16.mxu0 %v1362
      %2703 = vmatmul.mubr.bf16.gmra.mrb[0].mxu0 %v642
      %v2704 = vpop.f32.mrb[0].mxu0
      %v2705 = vadd.f32 %v393, %v2704
      %v2706 = vpop.f32.mrb[0].mxu0
      %v2707 = vadd.f32 %v397, %v2706
      %v2708 = vpop.f32.mrb[0].mxu0
      %v2709 = vadd.f32 %v393, %v2708
      %v2710 = vpop.f32.mrb[0].mxu0
      %v2711 = vadd.f32 %v397, %v2710
      %2712 = vmatprep.mubr.bf16.mxu0 %v1365
      %2713 = vmatmul.mubr.bf16.gmra.mrb[0].mxu0 %v644
      %v2714 = vpop.f32.mrb[0].mxu0
      %v2715 = vadd.f32 %v393, %v2714
      %v2716 = vpop.f32.mrb[0].mxu0
      %v2717 = vadd.f32 %v397, %v2716
      %v2718 = vpop.f32.mrb[0].mxu0
      %v2719 = vadd.f32 %v393, %v2718
      %v2720 = vpop.f32.mrb[0].mxu0
      %v2721 = vadd.f32 %v397, %v2720
      %2722 = vmatprep.mubr.bf16.mxu0 %v1368
      %2723 = vmatmul.mubr.bf16.gmra.mrb[0].mxu0 %v646
      %v2724 = vpop.f32.mrb[0].mxu0
      %v2725 = vadd.f32 %v393, %v2724
      %v2726 = vpop.f32.mrb[0].mxu0
      %v2727 = vadd.f32 %v397, %v2726
      %v2728 = vpop.f32.mrb[0].mxu0
      %v2729 = vadd.f32 %v393, %v2728
      %v2730 = vpop.f32.mrb[0].mxu0
      %v2731 = vadd.f32 %v397, %v2730
      %2732 = vmatprep.mubr.bf16.mxu0 %v1371
      %2733 = vmatmul.mubr.bf16.gmra.mrb[0].mxu0 %v648
      %v2734 = vpop.f32.mrb[0].mxu0
      %v2735 = vadd.f32 %v393, %v2734
      %v2736 = vpop.f32.mrb[0].mxu0
      %v2737 = vadd.f32 %v397, %v2736
      %v2738 = vpop.f32.mrb[0].mxu0
      %v2739 = vadd.f32 %v393, %v2738
      %v2740 = vpop.f32.mrb[0].mxu0
      %v2741 = vadd.f32 %v397, %v2740
      %2742 = vmatprep.mubr.bf16.mxu0 %v1374
      %2743 = vmatmul.mubr.bf16.gmra.mrb[0].mxu0 %v650
      %v2744 = vpop.f32.mrb[0].mxu0
      %v2745 = vadd.f32 %v393, %v2744
      %v2746 = vpop.f32.mrb[0].mxu0
      %v2747 = vadd.f32 %v397, %v2746
      %v2748 = vpop.f32.mrb[0].mxu0
      %v2749 = vadd.f32 %v393, %v2748
      %v2750 = vpop.f32.mrb[0].mxu0
      %v2751 = vadd.f32 %v397, %v2750
      %2752 = vmatprep.mubr.bf16.mxu0 %v1377
      %2753 = vmatmul.mubr.bf16.gmra.mrb[0].mxu0 %v652
      %v2754 = vpop.f32.mrb[0].mxu0
      %v2755 = vadd.f32 %v393, %v2754
      %v2756 = vpop.f32.mrb[0].mxu0
      %v2757 = vadd.f32 %v397, %v2756
      %v2758 = vpop.f32.mrb[0].mxu0
      %v2759 = vadd.f32 %v393, %v2758
      %v2760 = vpop.f32.mrb[0].mxu0
      %v2761 = vadd.f32 %v397, %v2760
      %2762 = vmatprep.mubr.bf16.mxu0 %v1380
      %2763 = vmatmul.mubr.bf16.gmra.mrb[0].mxu0 %v654
      %v2764 = vpop.f32.mrb[0].mxu0
      %v2765 = vadd.f32 %v393, %v2764
      %v2766 = vpop.f32.mrb[0].mxu0
      %v2767 = vadd.f32 %v397, %v2766
      %v2768 = vpop.f32.mrb[0].mxu0
      %v2769 = vadd.f32 %v393, %v2768
      %v2770 = vpop.f32.mrb[0].mxu0
      %v2771 = vadd.f32 %v397, %v2770
      %2772 = vmatprep.mubr.bf16.mxu0 %v1383
      %2773 = vmatmul.mubr.bf16.gmra.mrb[0].mxu0 %v656
      %v2774 = vpop.f32.mrb[0].mxu0
      %v2775 = vadd.f32 %v393, %v2774
      %v2776 = vpop.f32.mrb[0].mxu0
      %v2777 = vadd.f32 %v397, %v2776
      %v2778 = vpop.f32.mrb[0].mxu0
      %v2779 = vadd.f32 %v393, %v2778
      %v2780 = vpop.f32.mrb[0].mxu0
      %v2781 = vadd.f32 %v397, %v2780
      %2782 = vmatprep.mubr.bf16.mxu0 %v1386
      %2783 = vmatmul.mubr.bf16.gmra.mrb[0].mxu0 %v658
      %v2784 = vpop.f32.mrb[0].mxu0
      %v2785 = vadd.f32 %v393, %v2784
      %v2786 = vpop.f32.mrb[0].mxu0
      %v2787 = vadd.f32 %v397, %v2786
      %v2788 = vpop.f32.mrb[0].mxu0
      %v2789 = vadd.f32 %v393, %v2788
      %v2790 = vpop.f32.mrb[0].mxu0
      %v2791 = vadd.f32 %v397, %v2790
      %2792 = vmatprep.mubr.bf16.mxu0 %v1389
      %2793 = vmatmul.mubr.bf16.gmra.mrb[0].mxu0 %v660
      %v2794 = vpop.f32.mrb[0].mxu0
      %v2795 = vadd.f32 %v393, %v2794
      %v2796 = vpop.f32.mrb[0].mxu0
      %v2797 = vadd.f32 %v397, %v2796
      %v2798 = vpop.f32.mrb[0].mxu0
      %v2799 = vadd.f32 %v393, %v2798
      %v2800 = vpop.f32.mrb[0].mxu0
      %v2801 = vadd.f32 %v397, %v2800
      %2802 = vdwg.mxu0
      %v2803 = vxor.u32 %v1426, 2147483648
      %v2804 = vxor.u32 %v1428, 2147483648
      %v2805 = vxor.u32 %v1779, 2147483648
      %v2806 = vxor.u32 %v1781, 2147483648
      %v2807 = vxor.u32 %v2132, 2147483648
      %v2808 = vxor.u32 %v2134, 2147483648
      %v2809 = vxor.u32 %v2485, 2147483648
      %v2810 = vxor.u32 %v2487, 2147483648
      %v2811 = vxor.u32 %v1430, 2147483648
      %v2812 = vxor.u32 %v1432, 2147483648
      %v2813 = vxor.u32 %v1783, 2147483648
      %v2814 = vxor.u32 %v1785, 2147483648
      %v2815 = vxor.u32 %v2136, 2147483648
      %v2816 = vxor.u32 %v2138, 2147483648
      %v2817 = vxor.u32 %v2489, 2147483648
      %v2818 = vxor.u32 %v2491, 2147483648
      %v2819 = vxor.u32 %v1436, 2147483648
      %v2820 = vxor.u32 %v1438, 2147483648
      %v2821 = vxor.u32 %v1789, 2147483648
      %v2822 = vxor.u32 %v1791, 2147483648
      %v2823 = vxor.u32 %v2142, 2147483648
      %v2824 = vxor.u32 %v2144, 2147483648
      %v2825 = vxor.u32 %v2495, 2147483648
      %v2826 = vxor.u32 %v2497, 2147483648
      %v2827 = vxor.u32 %v1440, 2147483648
      %v2828 = vxor.u32 %v1442, 2147483648
      %v2829 = vxor.u32 %v1793, 2147483648
      %v2830 = vxor.u32 %v1795, 2147483648
      %v2831 = vxor.u32 %v2146, 2147483648
      %v2832 = vxor.u32 %v2148, 2147483648
      %v2833 = vxor.u32 %v2499, 2147483648
      %v2834 = vxor.u32 %v2501, 2147483648
      %v2835 = vxor.u32 %v1446, 2147483648
      %v2836 = vxor.u32 %v1448, 2147483648
      %v2837 = vxor.u32 %v1799, 2147483648
      %v2838 = vxor.u32 %v1801, 2147483648
      %v2839 = vxor.u32 %v2152, 2147483648
      %v2840 = vxor.u32 %v2154, 2147483648
      %v2841 = vxor.u32 %v2505, 2147483648
      %v2842 = vxor.u32 %v2507, 2147483648
      %v2843 = vxor.u32 %v1450, 2147483648
      %v2844 = vxor.u32 %v1452, 2147483648
      %v2845 = vxor.u32 %v1803, 2147483648
      %v2846 = vxor.u32 %v1805, 2147483648
      %v2847 = vxor.u32 %v2156, 2147483648
      %v2848 = vxor.u32 %v2158, 2147483648
      %v2849 = vxor.u32 %v2509, 2147483648
      %v2850 = vxor.u32 %v2511, 2147483648
      %v2851 = vxor.u32 %v1456, 2147483648
      %v2852 = vxor.u32 %v1458, 2147483648
      %v2853 = vxor.u32 %v1809, 2147483648
      %v2854 = vxor.u32 %v1811, 2147483648
      %v2855 = vxor.u32 %v2162, 2147483648
      %v2856 = vxor.u32 %v2164, 2147483648
      %v2857 = vxor.u32 %v2515, 2147483648
      %v2858 = vxor.u32 %v2517, 2147483648
      %v2859 = vxor.u32 %v1460, 2147483648
      %v2860 = vxor.u32 %v1462, 2147483648
      %v2861 = vxor.u32 %v1813, 2147483648
      %v2862 = vxor.u32 %v1815, 2147483648
      %v2863 = vxor.u32 %v2166, 2147483648
      %v2864 = vxor.u32 %v2168, 2147483648
      %v2865 = vxor.u32 %v2519, 2147483648
      %v2866 = vxor.u32 %v2521, 2147483648
      %v2867 = vxor.u32 %v1466, 2147483648
      %v2868 = vxor.u32 %v1468, 2147483648
      %v2869 = vxor.u32 %v1819, 2147483648
      %v2870 = vxor.u32 %v1821, 2147483648
      %v2871 = vxor.u32 %v2172, 2147483648
      %v2872 = vxor.u32 %v2174, 2147483648
      %v2873 = vxor.u32 %v2525, 2147483648
      %v2874 = vxor.u32 %v2527, 2147483648
      %v2875 = vxor.u32 %v1470, 2147483648
      %v2876 = vxor.u32 %v1472, 2147483648
      %v2877 = vxor.u32 %v1823, 2147483648
      %v2878 = vxor.u32 %v1825, 2147483648
      %v2879 = vxor.u32 %v2176, 2147483648
      %v2880 = vxor.u32 %v2178, 2147483648
      %v2881 = vxor.u32 %v2529, 2147483648
      %v2882 = vxor.u32 %v2531, 2147483648
      %v2883 = vxor.u32 %v1476, 2147483648
      %v2884 = vxor.u32 %v1478, 2147483648
      %v2885 = vxor.u32 %v1829, 2147483648
      %v2886 = vxor.u32 %v1831, 2147483648
      %v2887 = vxor.u32 %v2182, 2147483648
      %v2888 = vxor.u32 %v2184, 2147483648
      %v2889 = vxor.u32 %v2535, 2147483648
      %v2890 = vxor.u32 %v2537, 2147483648
      %v2891 = vxor.u32 %v1480, 2147483648
      %v2892 = vxor.u32 %v1482, 2147483648
      %v2893 = vxor.u32 %v1833, 2147483648
      %v2894 = vxor.u32 %v1835, 2147483648
      %v2895 = vxor.u32 %v2186, 2147483648
      %v2896 = vxor.u32 %v2188, 2147483648
      %v2897 = vxor.u32 %v2539, 2147483648
      %v2898 = vxor.u32 %v2541, 2147483648
      %v2899 = vxor.u32 %v1486, 2147483648
      %v2900 = vxor.u32 %v1488, 2147483648
      %v2901 = vxor.u32 %v1839, 2147483648
      %v2902 = vxor.u32 %v1841, 2147483648
      %v2903 = vxor.u32 %v2192, 2147483648
      %v2904 = vxor.u32 %v2194, 2147483648
      %v2905 = vxor.u32 %v2545, 2147483648
      %v2906 = vxor.u32 %v2547, 2147483648
      %v2907 = vxor.u32 %v1490, 2147483648
      %v2908 = vxor.u32 %v1492, 2147483648
      %v2909 = vxor.u32 %v1843, 2147483648
      %v2910 = vxor.u32 %v1845, 2147483648
      %v2911 = vxor.u32 %v2196, 2147483648
      %v2912 = vxor.u32 %v2198, 2147483648
      %v2913 = vxor.u32 %v2549, 2147483648
      %v2914 = vxor.u32 %v2551, 2147483648
      %v2915 = vxor.u32 %v1496, 2147483648
      %v2916 = vxor.u32 %v1498, 2147483648
      %v2917 = vxor.u32 %v1849, 2147483648
      %v2918 = vxor.u32 %v1851, 2147483648
      %v2919 = vxor.u32 %v2202, 2147483648
      %v2920 = vxor.u32 %v2204, 2147483648
      %v2921 = vxor.u32 %v2555, 2147483648
      %v2922 = vxor.u32 %v2557, 2147483648
      %v2923 = vxor.u32 %v1500, 2147483648
      %v2924 = vxor.u32 %v1502, 2147483648
      %v2925 = vxor.u32 %v1853, 2147483648
      %v2926 = vxor.u32 %v1855, 2147483648
      %v2927 = vxor.u32 %v2206, 2147483648
      %v2928 = vxor.u32 %v2208, 2147483648
      %v2929 = vxor.u32 %v2559, 2147483648
      %v2930 = vxor.u32 %v2561, 2147483648
      %v2931 = vxor.u32 %v1506, 2147483648
      %v2932 = vxor.u32 %v1508, 2147483648
      %v2933 = vxor.u32 %v1859, 2147483648
      %v2934 = vxor.u32 %v1861, 2147483648
      %v2935 = vxor.u32 %v2212, 2147483648
      %v2936 = vxor.u32 %v2214, 2147483648
      %v2937 = vxor.u32 %v2565, 2147483648
      %v2938 = vxor.u32 %v2567, 2147483648
      %v2939 = vxor.u32 %v1510, 2147483648
      %v2940 = vxor.u32 %v1512, 2147483648
      %v2941 = vxor.u32 %v1863, 2147483648
      %v2942 = vxor.u32 %v1865, 2147483648
      %v2943 = vxor.u32 %v2216, 2147483648
      %v2944 = vxor.u32 %v2218, 2147483648
      %v2945 = vxor.u32 %v2569, 2147483648
      %v2946 = vxor.u32 %v2571, 2147483648
      %v2947 = vxor.u32 %v1516, 2147483648
      %v2948 = vxor.u32 %v1518, 2147483648
      %v2949 = vxor.u32 %v1869, 2147483648
      %v2950 = vxor.u32 %v1871, 2147483648
      %v2951 = vxor.u32 %v2222, 2147483648
      %v2952 = vxor.u32 %v2224, 2147483648
      %v2953 = vxor.u32 %v2575, 2147483648
      %v2954 = vxor.u32 %v2577, 2147483648
      %v2955 = vxor.u32 %v1520, 2147483648
      %v2956 = vxor.u32 %v1522, 2147483648
      %v2957 = vxor.u32 %v1873, 2147483648
      %v2958 = vxor.u32 %v1875, 2147483648
      %v2959 = vxor.u32 %v2226, 2147483648
      %v2960 = vxor.u32 %v2228, 2147483648
      %v2961 = vxor.u32 %v2579, 2147483648
      %v2962 = vxor.u32 %v2581, 2147483648
      %v2963 = vxor.u32 %v1526, 2147483648
      %v2964 = vxor.u32 %v1528, 2147483648
      %v2965 = vxor.u32 %v1879, 2147483648
      %v2966 = vxor.u32 %v1881, 2147483648
      %v2967 = vxor.u32 %v2232, 2147483648
      %v2968 = vxor.u32 %v2234, 2147483648
      %v2969 = vxor.u32 %v2585, 2147483648
      %v2970 = vxor.u32 %v2587, 2147483648
      %v2971 = vxor.u32 %v1530, 2147483648
      %v2972 = vxor.u32 %v1532, 2147483648
      %v2973 = vxor.u32 %v1883, 2147483648
      %v2974 = vxor.u32 %v1885, 2147483648
      %v2975 = vxor.u32 %v2236, 2147483648
      %v2976 = vxor.u32 %v2238, 2147483648
      %v2977 = vxor.u32 %v2589, 2147483648
      %v2978 = vxor.u32 %v2591, 2147483648
      %v2979 = vxor.u32 %v1536, 2147483648
      %v2980 = vxor.u32 %v1538, 2147483648
      %v2981 = vxor.u32 %v1889, 2147483648
      %v2982 = vxor.u32 %v1891, 2147483648
      %v2983 = vxor.u32 %v2242, 2147483648
      %v2984 = vxor.u32 %v2244, 2147483648
      %v2985 = vxor.u32 %v2595, 2147483648
      %v2986 = vxor.u32 %v2597, 2147483648
      %v2987 = vxor.u32 %v1540, 2147483648
      %v2988 = vxor.u32 %v1542, 2147483648
      %v2989 = vxor.u32 %v1893, 2147483648
      %v2990 = vxor.u32 %v1895, 2147483648
      %v2991 = vxor.u32 %v2246, 2147483648
      %v2992 = vxor.u32 %v2248, 2147483648
      %v2993 = vxor.u32 %v2599, 2147483648
      %v2994 = vxor.u32 %v2601, 2147483648
      %v2995 = vxor.u32 %v1546, 2147483648
      %v2996 = vxor.u32 %v1548, 2147483648
      %v2997 = vxor.u32 %v1899, 2147483648
      %v2998 = vxor.u32 %v1901, 2147483648
      %v2999 = vxor.u32 %v2252, 2147483648
      %v3000 = vxor.u32 %v2254, 2147483648
      %v3001 = vxor.u32 %v2605, 2147483648
      %v3002 = vxor.u32 %v2607, 2147483648
      %v3003 = vxor.u32 %v1550, 2147483648
      %v3004 = vxor.u32 %v1552, 2147483648
      %v3005 = vxor.u32 %v1903, 2147483648
      %v3006 = vxor.u32 %v1905, 2147483648
      %v3007 = vxor.u32 %v2256, 2147483648
      %v3008 = vxor.u32 %v2258, 2147483648
      %v3009 = vxor.u32 %v2609, 2147483648
      %v3010 = vxor.u32 %v2611, 2147483648
      %v3011 = vxor.u32 %v1556, 2147483648
      %v3012 = vxor.u32 %v1558, 2147483648
      %v3013 = vxor.u32 %v1909, 2147483648
      %v3014 = vxor.u32 %v1911, 2147483648
      %v3015 = vxor.u32 %v2262, 2147483648
      %v3016 = vxor.u32 %v2264, 2147483648
      %v3017 = vxor.u32 %v2615, 2147483648
      %v3018 = vxor.u32 %v2617, 2147483648
      %v3019 = vxor.u32 %v1560, 2147483648
      %v3020 = vxor.u32 %v1562, 2147483648
      %v3021 = vxor.u32 %v1913, 2147483648
      %v3022 = vxor.u32 %v1915, 2147483648
      %v3023 = vxor.u32 %v2266, 2147483648
      %v3024 = vxor.u32 %v2268, 2147483648
      %v3025 = vxor.u32 %v2619, 2147483648
      %v3026 = vxor.u32 %v2621, 2147483648
      %v3027 = vxor.u32 %v1566, 2147483648
      %v3028 = vxor.u32 %v1568, 2147483648
      %v3029 = vxor.u32 %v1919, 2147483648
      %v3030 = vxor.u32 %v1921, 2147483648
      %v3031 = vxor.u32 %v2272, 2147483648
      %v3032 = vxor.u32 %v2274, 2147483648
      %v3033 = vxor.u32 %v2625, 2147483648
      %v3034 = vxor.u32 %v2627, 2147483648
      %v3035 = vxor.u32 %v1570, 2147483648
      %v3036 = vxor.u32 %v1572, 2147483648
      %v3037 = vxor.u32 %v1923, 2147483648
      %v3038 = vxor.u32 %v1925, 2147483648
      %v3039 = vxor.u32 %v2276, 2147483648
      %v3040 = vxor.u32 %v2278, 2147483648
      %v3041 = vxor.u32 %v2629, 2147483648
      %v3042 = vxor.u32 %v2631, 2147483648
      %v3043 = vxor.u32 %v1576, 2147483648
      %v3044 = vxor.u32 %v1578, 2147483648
      %v3045 = vxor.u32 %v1929, 2147483648
      %v3046 = vxor.u32 %v1931, 2147483648
      %v3047 = vxor.u32 %v2282, 2147483648
      %v3048 = vxor.u32 %v2284, 2147483648
      %v3049 = vxor.u32 %v2635, 2147483648
      %v3050 = vxor.u32 %v2637, 2147483648
      %v3051 = vxor.u32 %v1580, 2147483648
      %v3052 = vxor.u32 %v1582, 2147483648
      %v3053 = vxor.u32 %v1933, 2147483648
      %v3054 = vxor.u32 %v1935, 2147483648
      %v3055 = vxor.u32 %v2286, 2147483648
      %v3056 = vxor.u32 %v2288, 2147483648
      %v3057 = vxor.u32 %v2639, 2147483648
      %v3058 = vxor.u32 %v2641, 2147483648
      %v3059 = vxor.u32 %v1586, 2147483648
      %v3060 = vxor.u32 %v1588, 2147483648
      %v3061 = vxor.u32 %v1939, 2147483648
      %v3062 = vxor.u32 %v1941, 2147483648
      %v3063 = vxor.u32 %v2292, 2147483648
      %v3064 = vxor.u32 %v2294, 2147483648
      %v3065 = vxor.u32 %v2645, 2147483648
      %v3066 = vxor.u32 %v2647, 2147483648
      %v3067 = vxor.u32 %v1590, 2147483648
      %v3068 = vxor.u32 %v1592, 2147483648
      %v3069 = vxor.u32 %v1943, 2147483648
      %v3070 = vxor.u32 %v1945, 2147483648
      %v3071 = vxor.u32 %v2296, 2147483648
      %v3072 = vxor.u32 %v2298, 2147483648
      %v3073 = vxor.u32 %v2649, 2147483648
      %v3074 = vxor.u32 %v2651, 2147483648
      %v3075 = vxor.u32 %v1596, 2147483648
      %v3076 = vxor.u32 %v1598, 2147483648
      %v3077 = vxor.u32 %v1949, 2147483648
      %v3078 = vxor.u32 %v1951, 2147483648
      %v3079 = vxor.u32 %v2302, 2147483648
      %v3080 = vxor.u32 %v2304, 2147483648
      %v3081 = vxor.u32 %v2655, 2147483648
      %v3082 = vxor.u32 %v2657, 2147483648
      %v3083 = vxor.u32 %v1600, 2147483648
      %v3084 = vxor.u32 %v1602, 2147483648
      %v3085 = vxor.u32 %v1953, 2147483648
      %v3086 = vxor.u32 %v1955, 2147483648
      %v3087 = vxor.u32 %v2306, 2147483648
      %v3088 = vxor.u32 %v2308, 2147483648
      %v3089 = vxor.u32 %v2659, 2147483648
      %v3090 = vxor.u32 %v2661, 2147483648
      %v3091 = vxor.u32 %v1606, 2147483648
      %v3092 = vxor.u32 %v1608, 2147483648
      %v3093 = vxor.u32 %v1959, 2147483648
      %v3094 = vxor.u32 %v1961, 2147483648
      %v3095 = vxor.u32 %v2312, 2147483648
      %v3096 = vxor.u32 %v2314, 2147483648
      %v3097 = vxor.u32 %v2665, 2147483648
      %v3098 = vxor.u32 %v2667, 2147483648
      %v3099 = vxor.u32 %v1610, 2147483648
      %v3100 = vxor.u32 %v1612, 2147483648
      %v3101 = vxor.u32 %v1963, 2147483648
      %v3102 = vxor.u32 %v1965, 2147483648
      %v3103 = vxor.u32 %v2316, 2147483648
      %v3104 = vxor.u32 %v2318, 2147483648
      %v3105 = vxor.u32 %v2669, 2147483648
      %v3106 = vxor.u32 %v2671, 2147483648
      %v3107 = vxor.u32 %v1616, 2147483648
      %v3108 = vxor.u32 %v1618, 2147483648
      %v3109 = vxor.u32 %v1969, 2147483648
      %v3110 = vxor.u32 %v1971, 2147483648
      %v3111 = vxor.u32 %v2322, 2147483648
      %v3112 = vxor.u32 %v2324, 2147483648
      %v3113 = vxor.u32 %v2675, 2147483648
      %v3114 = vxor.u32 %v2677, 2147483648
      %v3115 = vxor.u32 %v1620, 2147483648
      %v3116 = vxor.u32 %v1622, 2147483648
      %v3117 = vxor.u32 %v1973, 2147483648
      %v3118 = vxor.u32 %v1975, 2147483648
      %v3119 = vxor.u32 %v2326, 2147483648
      %v3120 = vxor.u32 %v2328, 2147483648
      %v3121 = vxor.u32 %v2679, 2147483648
      %v3122 = vxor.u32 %v2681, 2147483648
      %v3123 = vxor.u32 %v1626, 2147483648
      %v3124 = vxor.u32 %v1628, 2147483648
      %v3125 = vxor.u32 %v1979, 2147483648
      %v3126 = vxor.u32 %v1981, 2147483648
      %v3127 = vxor.u32 %v2332, 2147483648
      %v3128 = vxor.u32 %v2334, 2147483648
      %v3129 = vxor.u32 %v2685, 2147483648
      %v3130 = vxor.u32 %v2687, 2147483648
      %v3131 = vxor.u32 %v1630, 2147483648
      %v3132 = vxor.u32 %v1632, 2147483648
      %v3133 = vxor.u32 %v1983, 2147483648
      %v3134 = vxor.u32 %v1985, 2147483648
      %v3135 = vxor.u32 %v2336, 2147483648
      %v3136 = vxor.u32 %v2338, 2147483648
      %v3137 = vxor.u32 %v2689, 2147483648
      %v3138 = vxor.u32 %v2691, 2147483648
      %v3139 = vxor.u32 %v1636, 2147483648
      %v3140 = vxor.u32 %v1638, 2147483648
      %v3141 = vxor.u32 %v1989, 2147483648
      %v3142 = vxor.u32 %v1991, 2147483648
      %v3143 = vxor.u32 %v2342, 2147483648
      %v3144 = vxor.u32 %v2344, 2147483648
      %v3145 = vxor.u32 %v2695, 2147483648
      %v3146 = vxor.u32 %v2697, 2147483648
      %v3147 = vxor.u32 %v1640, 2147483648
      %v3148 = vxor.u32 %v1642, 2147483648
      %v3149 = vxor.u32 %v1993, 2147483648
      %v3150 = vxor.u32 %v1995, 2147483648
      %v3151 = vxor.u32 %v2346, 2147483648
      %v3152 = vxor.u32 %v2348, 2147483648
      %v3153 = vxor.u32 %v2699, 2147483648
      %v3154 = vxor.u32 %v2701, 2147483648
      %v3155 = vxor.u32 %v1646, 2147483648
      %v3156 = vxor.u32 %v1648, 2147483648
      %v3157 = vxor.u32 %v1999, 2147483648
      %v3158 = vxor.u32 %v2001, 2147483648
      %v3159 = vxor.u32 %v2352, 2147483648
      %v3160 = vxor.u32 %v2354, 2147483648
      %v3161 = vxor.u32 %v2705, 2147483648
      %v3162 = vxor.u32 %v2707, 2147483648
      %v3163 = vxor.u32 %v1650, 2147483648
      %v3164 = vxor.u32 %v1652, 2147483648
      %v3165 = vxor.u32 %v2003, 2147483648
      %v3166 = vxor.u32 %v2005, 2147483648
      %v3167 = vxor.u32 %v2356, 2147483648
      %v3168 = vxor.u32 %v2358, 2147483648
      %v3169 = vxor.u32 %v2709, 2147483648
      %v3170 = vxor.u32 %v2711, 2147483648
      %v3171 = vxor.u32 %v1656, 2147483648
      %v3172 = vxor.u32 %v1658, 2147483648
      %v3173 = vxor.u32 %v2009, 2147483648
      %v3174 = vxor.u32 %v2011, 2147483648
      %v3175 = vxor.u32 %v2362, 2147483648
      %v3176 = vxor.u32 %v2364, 2147483648
      %v3177 = vxor.u32 %v2715, 2147483648
      %v3178 = vxor.u32 %v2717, 2147483648
      %v3179 = vxor.u32 %v1660, 2147483648
      %v3180 = vxor.u32 %v1662, 2147483648
      %v3181 = vxor.u32 %v2013, 2147483648
      %v3182 = vxor.u32 %v2015, 2147483648
      %v3183 = vxor.u32 %v2366, 2147483648
      %v3184 = vxor.u32 %v2368, 2147483648
      %v3185 = vxor.u32 %v2719, 2147483648
      %v3186 = vxor.u32 %v2721, 2147483648
      %v3187 = vxor.u32 %v1666, 2147483648
      %v3188 = vxor.u32 %v1668, 2147483648
      %v3189 = vxor.u32 %v2019, 2147483648
      %v3190 = vxor.u32 %v2021, 2147483648
      %v3191 = vxor.u32 %v2372, 2147483648
      %v3192 = vxor.u32 %v2374, 2147483648
      %v3193 = vxor.u32 %v2725, 2147483648
      %v3194 = vxor.u32 %v2727, 2147483648
      %v3195 = vxor.u32 %v1670, 2147483648
      %v3196 = vxor.u32 %v1672, 2147483648
      %v3197 = vxor.u32 %v2023, 2147483648
      %v3198 = vxor.u32 %v2025, 2147483648
      %v3199 = vxor.u32 %v2376, 2147483648
      %v3200 = vxor.u32 %v2378, 2147483648
      %v3201 = vxor.u32 %v2729, 2147483648
      %v3202 = vxor.u32 %v2731, 2147483648
      %v3203 = vxor.u32 %v1676, 2147483648
      %v3204 = vxor.u32 %v1678, 2147483648
      %v3205 = vxor.u32 %v2029, 2147483648
      %v3206 = vxor.u32 %v2031, 2147483648
      %v3207 = vxor.u32 %v2382, 2147483648
      %v3208 = vxor.u32 %v2384, 2147483648
      %v3209 = vxor.u32 %v2735, 2147483648
      %v3210 = vxor.u32 %v2737, 2147483648
      %v3211 = vxor.u32 %v1680, 2147483648
      %v3212 = vxor.u32 %v1682, 2147483648
      %v3213 = vxor.u32 %v2033, 2147483648
      %v3214 = vxor.u32 %v2035, 2147483648
      %v3215 = vxor.u32 %v2386, 2147483648
      %v3216 = vxor.u32 %v2388, 2147483648
      %v3217 = vxor.u32 %v2739, 2147483648
      %v3218 = vxor.u32 %v2741, 2147483648
      %v3219 = vxor.u32 %v1686, 2147483648
      %v3220 = vxor.u32 %v1688, 2147483648
      %v3221 = vxor.u32 %v2039, 2147483648
      %v3222 = vxor.u32 %v2041, 2147483648
      %v3223 = vxor.u32 %v2392, 2147483648
      %v3224 = vxor.u32 %v2394, 2147483648
      %v3225 = vxor.u32 %v2745, 2147483648
      %v3226 = vxor.u32 %v2747, 2147483648
      %v3227 = vxor.u32 %v1690, 2147483648
      %v3228 = vxor.u32 %v1692, 2147483648
      %v3229 = vxor.u32 %v2043, 2147483648
      %v3230 = vxor.u32 %v2045, 2147483648
      %v3231 = vxor.u32 %v2396, 2147483648
      %v3232 = vxor.u32 %v2398, 2147483648
      %v3233 = vxor.u32 %v2749, 2147483648
      %v3234 = vxor.u32 %v2751, 2147483648
      %v3235 = vxor.u32 %v1696, 2147483648
      %v3236 = vxor.u32 %v1698, 2147483648
      %v3237 = vxor.u32 %v2049, 2147483648
      %v3238 = vxor.u32 %v2051, 2147483648
      %v3239 = vxor.u32 %v2402, 2147483648
      %v3240 = vxor.u32 %v2404, 2147483648
      %v3241 = vxor.u32 %v2755, 2147483648
      %v3242 = vxor.u32 %v2757, 2147483648
      %v3243 = vxor.u32 %v1700, 2147483648
      %v3244 = vxor.u32 %v1702, 2147483648
      %v3245 = vxor.u32 %v2053, 2147483648
      %v3246 = vxor.u32 %v2055, 2147483648
      %v3247 = vxor.u32 %v2406, 2147483648
      %v3248 = vxor.u32 %v2408, 2147483648
      %v3249 = vxor.u32 %v2759, 2147483648
      %v3250 = vxor.u32 %v2761, 2147483648
      %v3251 = vxor.u32 %v1706, 2147483648
      %v3252 = vxor.u32 %v1708, 2147483648
      %v3253 = vxor.u32 %v2059, 2147483648
      %v3254 = vxor.u32 %v2061, 2147483648
      %v3255 = vxor.u32 %v2412, 2147483648
      %v3256 = vxor.u32 %v2414, 2147483648
      %v3257 = vxor.u32 %v2765, 2147483648
      %v3258 = vxor.u32 %v2767, 2147483648
      %v3259 = vxor.u32 %v1710, 2147483648
      %v3260 = vxor.u32 %v1712, 2147483648
      %v3261 = vxor.u32 %v2063, 2147483648
      %v3262 = vxor.u32 %v2065, 2147483648
      %v3263 = vxor.u32 %v2416, 2147483648
      %v3264 = vxor.u32 %v2418, 2147483648
      %v3265 = vxor.u32 %v2769, 2147483648
      %v3266 = vxor.u32 %v2771, 2147483648
      %v3267 = vxor.u32 %v1716, 2147483648
      %v3268 = vxor.u32 %v1718, 2147483648
      %v3269 = vxor.u32 %v2069, 2147483648
      %v3270 = vxor.u32 %v2071, 2147483648
      %v3271 = vxor.u32 %v2422, 2147483648
      %v3272 = vxor.u32 %v2424, 2147483648
      %v3273 = vxor.u32 %v2775, 2147483648
      %v3274 = vxor.u32 %v2777, 2147483648
      %v3275 = vxor.u32 %v1720, 2147483648
      %v3276 = vxor.u32 %v1722, 2147483648
      %v3277 = vxor.u32 %v2073, 2147483648
      %v3278 = vxor.u32 %v2075, 2147483648
      %v3279 = vxor.u32 %v2426, 2147483648
      %v3280 = vxor.u32 %v2428, 2147483648
      %v3281 = vxor.u32 %v2779, 2147483648
      %v3282 = vxor.u32 %v2781, 2147483648
      %v3283 = vxor.u32 %v1726, 2147483648
      %v3284 = vxor.u32 %v1728, 2147483648
      %v3285 = vxor.u32 %v2079, 2147483648
      %v3286 = vxor.u32 %v2081, 2147483648
      %v3287 = vxor.u32 %v2432, 2147483648
      %v3288 = vxor.u32 %v2434, 2147483648
      %v3289 = vxor.u32 %v2785, 2147483648
      %v3290 = vxor.u32 %v2787, 2147483648
      %v3291 = vxor.u32 %v1730, 2147483648
      %v3292 = vxor.u32 %v1732, 2147483648
      %v3293 = vxor.u32 %v2083, 2147483648
      %v3294 = vxor.u32 %v2085, 2147483648
      %v3295 = vxor.u32 %v2436, 2147483648
      %v3296 = vxor.u32 %v2438, 2147483648
      %v3297 = vxor.u32 %v2789, 2147483648
      %v3298 = vxor.u32 %v2791, 2147483648
      %v3299 = vxor.u32 %v1736, 2147483648
      %v3300 = vxor.u32 %v1738, 2147483648
      %v3301 = vxor.u32 %v2089, 2147483648
      %v3302 = vxor.u32 %v2091, 2147483648
      %v3303 = vxor.u32 %v2442, 2147483648
      %v3304 = vxor.u32 %v2444, 2147483648
      %v3305 = vxor.u32 %v2795, 2147483648
      %v3306 = vxor.u32 %v2797, 2147483648
      %v3307 = vxor.u32 %v1740, 2147483648
      %v3308 = vxor.u32 %v1742, 2147483648
      %v3309 = vxor.u32 %v2093, 2147483648
      %v3310 = vxor.u32 %v2095, 2147483648
      %v3311 = vxor.u32 %v2446, 2147483648
      %v3312 = vxor.u32 %v2448, 2147483648
      %v3313 = vxor.u32 %v2799, 2147483648
      %v3314 = vxor.u32 %v2801, 2147483648
      %v3315 = vmul.f32 %v2803, 1.442695
      %v3316 = vpow.pop %v3315
      %v3317 = vmul.f32 %v2804, 1.442695
      %v3318 = vpow.pop %v3317
      %v3319 = vmul.f32 %v2805, 1.442695
      %v3320 = vpow.pop %v3319
      %v3321 = vmul.f32 %v2806, 1.442695
      %v3322 = vpow.pop %v3321
      %v3323 = vmul.f32 %v2807, 1.442695
      %v3324 = vpow.pop %v3323
      %v3325 = vmul.f32 %v2808, 1.442695
      %v3326 = vpow.pop %v3325
      %v3327 = vmul.f32 %v2809, 1.442695
      %v3328 = vpow.pop %v3327
      %v3329 = vmul.f32 %v2810, 1.442695
      %v3330 = vpow.pop %v3329
      %v3331 = vmul.f32 %v2811, 1.442695
      %v3332 = vpow.pop %v3331
      %v3333 = vmul.f32 %v2812, 1.442695
      %v3334 = vpow.pop %v3333
      %v3335 = vmul.f32 %v2813, 1.442695
      %v3336 = vpow.pop %v3335
      %v3337 = vmul.f32 %v2814, 1.442695
      %v3338 = vpow.pop %v3337
      %v3339 = vmul.f32 %v2815, 1.442695
      %v3340 = vpow.pop %v3339
      %v3341 = vmul.f32 %v2816, 1.442695
      %v3342 = vpow.pop %v3341
      %v3343 = vmul.f32 %v2817, 1.442695
      %v3344 = vpow.pop %v3343
      %v3345 = vmul.f32 %v2818, 1.442695
      %v3346 = vpow.pop %v3345
      %v3347 = vmul.f32 %v2819, 1.442695
      %v3348 = vpow.pop %v3347
      %v3349 = vmul.f32 %v2820, 1.442695
      %v3350 = vpow.pop %v3349
      %v3351 = vmul.f32 %v2821, 1.442695
      %v3352 = vpow.pop %v3351
      %v3353 = vmul.f32 %v2822, 1.442695
      %v3354 = vpow.pop %v3353
      %v3355 = vmul.f32 %v2823, 1.442695
      %v3356 = vpow.pop %v3355
      %v3357 = vmul.f32 %v2824, 1.442695
      %v3358 = vpow.pop %v3357
      %v3359 = vmul.f32 %v2825, 1.442695
      %v3360 = vpow.pop %v3359
      %v3361 = vmul.f32 %v2826, 1.442695
      %v3362 = vpow.pop %v3361
      %v3363 = vmul.f32 %v2827, 1.442695
      %v3364 = vpow.pop %v3363
      %v3365 = vmul.f32 %v2828, 1.442695
      %v3366 = vpow.pop %v3365
      %v3367 = vmul.f32 %v2829, 1.442695
      %v3368 = vpow.pop %v3367
      %v3369 = vmul.f32 %v2830, 1.442695
      %v3370 = vpow.pop %v3369
      %v3371 = vmul.f32 %v2831, 1.442695
      %v3372 = vpow.pop %v3371
      %v3373 = vmul.f32 %v2832, 1.442695
      %v3374 = vpow.pop %v3373
      %v3375 = vmul.f32 %v2833, 1.442695
      %v3376 = vpow.pop %v3375
      %v3377 = vmul.f32 %v2834, 1.442695
      %v3378 = vpow.pop %v3377
      %v3379 = vmul.f32 %v2835, 1.442695
      %v3380 = vpow.pop %v3379
      %v3381 = vmul.f32 %v2836, 1.442695
      %v3382 = vpow.pop %v3381
      %v3383 = vmul.f32 %v2837, 1.442695
      %v3384 = vpow.pop %v3383
      %v3385 = vmul.f32 %v2838, 1.442695
      %v3386 = vpow.pop %v3385
      %v3387 = vmul.f32 %v2839, 1.442695
      %v3388 = vpow.pop %v3387
      %v3389 = vmul.f32 %v2840, 1.442695
      %v3390 = vpow.pop %v3389
      %v3391 = vmul.f32 %v2841, 1.442695
      %v3392 = vpow.pop %v3391
      %v3393 = vmul.f32 %v2842, 1.442695
      %v3394 = vpow.pop %v3393
      %v3395 = vmul.f32 %v2843, 1.442695
      %v3396 = vpow.pop %v3395
      %v3397 = vmul.f32 %v2844, 1.442695
      %v3398 = vpow.pop %v3397
      %v3399 = vmul.f32 %v2845, 1.442695
      %v3400 = vpow.pop %v3399
      %v3401 = vmul.f32 %v2846, 1.442695
      %v3402 = vpow.pop %v3401
      %v3403 = vmul.f32 %v2847, 1.442695
      %v3404 = vpow.pop %v3403
      %v3405 = vmul.f32 %v2848, 1.442695
      %v3406 = vpow.pop %v3405
      %v3407 = vmul.f32 %v2849, 1.442695
      %v3408 = vpow.pop %v3407
      %v3409 = vmul.f32 %v2850, 1.442695
      %v3410 = vpow.pop %v3409
      %v3411 = vmul.f32 %v2851, 1.442695
      %v3412 = vpow.pop %v3411
      %v3413 = vmul.f32 %v2852, 1.442695
      %v3414 = vpow.pop %v3413
      %v3415 = vmul.f32 %v2853, 1.442695
      %v3416 = vpow.pop %v3415
      %v3417 = vmul.f32 %v2854, 1.442695
      %v3418 = vpow.pop %v3417
      %v3419 = vmul.f32 %v2855, 1.442695
      %v3420 = vpow.pop %v3419
      %v3421 = vmul.f32 %v2856, 1.442695
      %v3422 = vpow.pop %v3421
      %v3423 = vmul.f32 %v2857, 1.442695
      %v3424 = vpow.pop %v3423
      %v3425 = vmul.f32 %v2858, 1.442695
      %v3426 = vpow.pop %v3425
      %v3427 = vmul.f32 %v2859, 1.442695
      %v3428 = vpow.pop %v3427
      %v3429 = vmul.f32 %v2860, 1.442695
      %v3430 = vpow.pop %v3429
      %v3431 = vmul.f32 %v2861, 1.442695
      %v3432 = vpow.pop %v3431
      %v3433 = vmul.f32 %v2862, 1.442695
      %v3434 = vpow.pop %v3433
      %v3435 = vmul.f32 %v2863, 1.442695
      %v3436 = vpow.pop %v3435
      %v3437 = vmul.f32 %v2864, 1.442695
      %v3438 = vpow.pop %v3437
      %v3439 = vmul.f32 %v2865, 1.442695
      %v3440 = vpow.pop %v3439
      %v3441 = vmul.f32 %v2866, 1.442695
      %v3442 = vpow.pop %v3441
      %v3443 = vmul.f32 %v2867, 1.442695
      %v3444 = vpow.pop %v3443
      %v3445 = vmul.f32 %v2868, 1.442695
      %v3446 = vpow.pop %v3445
      %v3447 = vmul.f32 %v2869, 1.442695
      %v3448 = vpow.pop %v3447
      %v3449 = vmul.f32 %v2870, 1.442695
      %v3450 = vpow.pop %v3449
      %v3451 = vmul.f32 %v2871, 1.442695
      %v3452 = vpow.pop %v3451
      %v3453 = vmul.f32 %v2872, 1.442695
      %v3454 = vpow.pop %v3453
      %v3455 = vmul.f32 %v2873, 1.442695
      %v3456 = vpow.pop %v3455
      %v3457 = vmul.f32 %v2874, 1.442695
      %v3458 = vpow.pop %v3457
      %v3459 = vmul.f32 %v2875, 1.442695
      %v3460 = vpow.pop %v3459
      %v3461 = vmul.f32 %v2876, 1.442695
      %v3462 = vpow.pop %v3461
      %v3463 = vmul.f32 %v2877, 1.442695
      %v3464 = vpow.pop %v3463
      %v3465 = vmul.f32 %v2878, 1.442695
      %v3466 = vpow.pop %v3465
      %v3467 = vmul.f32 %v2879, 1.442695
      %v3468 = vpow.pop %v3467
      %v3469 = vmul.f32 %v2880, 1.442695
      %v3470 = vpow.pop %v3469
      %v3471 = vmul.f32 %v2881, 1.442695
      %v3472 = vpow.pop %v3471
      %v3473 = vmul.f32 %v2882, 1.442695
      %v3474 = vpow.pop %v3473
      %v3475 = vmul.f32 %v2883, 1.442695
      %v3476 = vpow.pop %v3475
      %v3477 = vmul.f32 %v2884, 1.442695
      %v3478 = vpow.pop %v3477
      %v3479 = vmul.f32 %v2885, 1.442695
      %v3480 = vpow.pop %v3479
      %v3481 = vmul.f32 %v2886, 1.442695
      %v3482 = vpow.pop %v3481
      %v3483 = vmul.f32 %v2887, 1.442695
      %v3484 = vpow.pop %v3483
      %v3485 = vmul.f32 %v2888, 1.442695
      %v3486 = vpow.pop %v3485
      %v3487 = vmul.f32 %v2889, 1.442695
      %v3488 = vpow.pop %v3487
      %v3489 = vmul.f32 %v2890, 1.442695
      %v3490 = vpow.pop %v3489
      %v3491 = vmul.f32 %v2891, 1.442695
      %v3492 = vpow.pop %v3491
      %v3493 = vmul.f32 %v2892, 1.442695
      %v3494 = vpow.pop %v3493
      %v3495 = vmul.f32 %v2893, 1.442695
      %v3496 = vpow.pop %v3495
      %v3497 = vmul.f32 %v2894, 1.442695
      %v3498 = vpow.pop %v3497
      %v3499 = vmul.f32 %v2895, 1.442695
      %v3500 = vpow.pop %v3499
      %v3501 = vmul.f32 %v2896, 1.442695
      %v3502 = vpow.pop %v3501
      %v3503 = vmul.f32 %v2897, 1.442695
      %v3504 = vpow.pop %v3503
      %v3505 = vmul.f32 %v2898, 1.442695
      %v3506 = vpow.pop %v3505
      %v3507 = vmul.f32 %v2899, 1.442695
      %v3508 = vpow.pop %v3507
      %v3509 = vmul.f32 %v2900, 1.442695
      %v3510 = vpow.pop %v3509
      %v3511 = vmul.f32 %v2901, 1.442695
      %v3512 = vpow.pop %v3511
      %v3513 = vmul.f32 %v2902, 1.442695
      %v3514 = vpow.pop %v3513
      %v3515 = vmul.f32 %v2903, 1.442695
      %v3516 = vpow.pop %v3515
      %v3517 = vmul.f32 %v2904, 1.442695
      %v3518 = vpow.pop %v3517
      %v3519 = vmul.f32 %v2905, 1.442695
      %v3520 = vpow.pop %v3519
      %v3521 = vmul.f32 %v2906, 1.442695
      %v3522 = vpow.pop %v3521
      %v3523 = vmul.f32 %v2907, 1.442695
      %v3524 = vpow.pop %v3523
      %v3525 = vmul.f32 %v2908, 1.442695
      %v3526 = vpow.pop %v3525
      %v3527 = vmul.f32 %v2909, 1.442695
      %v3528 = vpow.pop %v3527
      %v3529 = vmul.f32 %v2910, 1.442695
      %v3530 = vpow.pop %v3529
      %v3531 = vmul.f32 %v2911, 1.442695
      %v3532 = vpow.pop %v3531
      %v3533 = vmul.f32 %v2912, 1.442695
      %v3534 = vpow.pop %v3533
      %v3535 = vmul.f32 %v2913, 1.442695
      %v3536 = vpow.pop %v3535
      %v3537 = vmul.f32 %v2914, 1.442695
      %v3538 = vpow.pop %v3537
      %v3539 = vmul.f32 %v2915, 1.442695
      %v3540 = vpow.pop %v3539
      %v3541 = vmul.f32 %v2916, 1.442695
      %v3542 = vpow.pop %v3541
      %v3543 = vmul.f32 %v2917, 1.442695
      %v3544 = vpow.pop %v3543
      %v3545 = vmul.f32 %v2918, 1.442695
      %v3546 = vpow.pop %v3545
      %v3547 = vmul.f32 %v2919, 1.442695
      %v3548 = vpow.pop %v3547
      %v3549 = vmul.f32 %v2920, 1.442695
      %v3550 = vpow.pop %v3549
      %v3551 = vmul.f32 %v2921, 1.442695
      %v3552 = vpow.pop %v3551
      %v3553 = vmul.f32 %v2922, 1.442695
      %v3554 = vpow.pop %v3553
      %v3555 = vmul.f32 %v2923, 1.442695
      %v3556 = vpow.pop %v3555
      %v3557 = vmul.f32 %v2924, 1.442695
      %v3558 = vpow.pop %v3557
      %v3559 = vmul.f32 %v2925, 1.442695
      %v3560 = vpow.pop %v3559
      %v3561 = vmul.f32 %v2926, 1.442695
      %v3562 = vpow.pop %v3561
      %v3563 = vmul.f32 %v2927, 1.442695
      %v3564 = vpow.pop %v3563
      %v3565 = vmul.f32 %v2928, 1.442695
      %v3566 = vpow.pop %v3565
      %v3567 = vmul.f32 %v2929, 1.442695
      %v3568 = vpow.pop %v3567
      %v3569 = vmul.f32 %v2930, 1.442695
      %v3570 = vpow.pop %v3569
      %v3571 = vmul.f32 %v2931, 1.442695
      %v3572 = vpow.pop %v3571
      %v3573 = vmul.f32 %v2932, 1.442695
      %v3574 = vpow.pop %v3573
      %v3575 = vmul.f32 %v2933, 1.442695
      %v3576 = vpow.pop %v3575
      %v3577 = vmul.f32 %v2934, 1.442695
      %v3578 = vpow.pop %v3577
      %v3579 = vmul.f32 %v2935, 1.442695
      %v3580 = vpow.pop %v3579
      %v3581 = vmul.f32 %v2936, 1.442695
      %v3582 = vpow.pop %v3581
      %v3583 = vmul.f32 %v2937, 1.442695
      %v3584 = vpow.pop %v3583
      %v3585 = vmul.f32 %v2938, 1.442695
      %v3586 = vpow.pop %v3585
      %v3587 = vmul.f32 %v2939, 1.442695
      %v3588 = vpow.pop %v3587
      %v3589 = vmul.f32 %v2940, 1.442695
      %v3590 = vpow.pop %v3589
      %v3591 = vmul.f32 %v2941, 1.442695
      %v3592 = vpow.pop %v3591
      %v3593 = vmul.f32 %v2942, 1.442695
      %v3594 = vpow.pop %v3593
      %v3595 = vmul.f32 %v2943, 1.442695
      %v3596 = vpow.pop %v3595
      %v3597 = vmul.f32 %v2944, 1.442695
      %v3598 = vpow.pop %v3597
      %v3599 = vmul.f32 %v2945, 1.442695
      %v3600 = vpow.pop %v3599
      %v3601 = vmul.f32 %v2946, 1.442695
      %v3602 = vpow.pop %v3601
      %v3603 = vmul.f32 %v2947, 1.442695
      %v3604 = vpow.pop %v3603
      %v3605 = vmul.f32 %v2948, 1.442695
      %v3606 = vpow.pop %v3605
      %v3607 = vmul.f32 %v2949, 1.442695
      %v3608 = vpow.pop %v3607
      %v3609 = vmul.f32 %v2950, 1.442695
      %v3610 = vpow.pop %v3609
      %v3611 = vmul.f32 %v2951, 1.442695
      %v3612 = vpow.pop %v3611
      %v3613 = vmul.f32 %v2952, 1.442695
      %v3614 = vpow.pop %v3613
      %v3615 = vmul.f32 %v2953, 1.442695
      %v3616 = vpow.pop %v3615
      %v3617 = vmul.f32 %v2954, 1.442695
      %v3618 = vpow.pop %v3617
      %v3619 = vmul.f32 %v2955, 1.442695
      %v3620 = vpow.pop %v3619
      %v3621 = vmul.f32 %v2956, 1.442695
      %v3622 = vpow.pop %v3621
      %v3623 = vmul.f32 %v2957, 1.442695
      %v3624 = vpow.pop %v3623
      %v3625 = vmul.f32 %v2958, 1.442695
      %v3626 = vpow.pop %v3625
      %v3627 = vmul.f32 %v2959, 1.442695
      %v3628 = vpow.pop %v3627
      %v3629 = vmul.f32 %v2960, 1.442695
      %v3630 = vpow.pop %v3629
      %v3631 = vmul.f32 %v2961, 1.442695
      %v3632 = vpow.pop %v3631
      %v3633 = vmul.f32 %v2962, 1.442695
      %v3634 = vpow.pop %v3633
      %v3635 = vmul.f32 %v2963, 1.442695
      %v3636 = vpow.pop %v3635
      %v3637 = vmul.f32 %v2964, 1.442695
      %v3638 = vpow.pop %v3637
      %v3639 = vmul.f32 %v2965, 1.442695
      %v3640 = vpow.pop %v3639
      %v3641 = vmul.f32 %v2966, 1.442695
      %v3642 = vpow.pop %v3641
      %v3643 = vmul.f32 %v2967, 1.442695
      %v3644 = vpow.pop %v3643
      %v3645 = vmul.f32 %v2968, 1.442695
      %v3646 = vpow.pop %v3645
      %v3647 = vmul.f32 %v2969, 1.442695
      %v3648 = vpow.pop %v3647
      %v3649 = vmul.f32 %v2970, 1.442695
      %v3650 = vpow.pop %v3649
      %v3651 = vmul.f32 %v2971, 1.442695
      %v3652 = vpow.pop %v3651
      %v3653 = vmul.f32 %v2972, 1.442695
      %v3654 = vpow.pop %v3653
      %v3655 = vmul.f32 %v2973, 1.442695
      %v3656 = vpow.pop %v3655
      %v3657 = vmul.f32 %v2974, 1.442695
      %v3658 = vpow.pop %v3657
      %v3659 = vmul.f32 %v2975, 1.442695
      %v3660 = vpow.pop %v3659
      %v3661 = vmul.f32 %v2976, 1.442695
      %v3662 = vpow.pop %v3661
      %v3663 = vmul.f32 %v2977, 1.442695
      %v3664 = vpow.pop %v3663
      %v3665 = vmul.f32 %v2978, 1.442695
      %v3666 = vpow.pop %v3665
      %v3667 = vmul.f32 %v2979, 1.442695
      %v3668 = vpow.pop %v3667
      %v3669 = vmul.f32 %v2980, 1.442695
      %v3670 = vpow.pop %v3669
      %v3671 = vmul.f32 %v2981, 1.442695
      %v3672 = vpow.pop %v3671
      %v3673 = vmul.f32 %v2982, 1.442695
      %v3674 = vpow.pop %v3673
      %v3675 = vmul.f32 %v2983, 1.442695
      %v3676 = vpow.pop %v3675
      %v3677 = vmul.f32 %v2984, 1.442695
      %v3678 = vpow.pop %v3677
      %v3679 = vmul.f32 %v2985, 1.442695
      %v3680 = vpow.pop %v3679
      %v3681 = vmul.f32 %v2986, 1.442695
      %v3682 = vpow.pop %v3681
      %v3683 = vmul.f32 %v2987, 1.442695
      %v3684 = vpow.pop %v3683
      %v3685 = vmul.f32 %v2988, 1.442695
      %v3686 = vpow.pop %v3685
      %v3687 = vmul.f32 %v2989, 1.442695
      %v3688 = vpow.pop %v3687
      %v3689 = vmul.f32 %v2990, 1.442695
      %v3690 = vpow.pop %v3689
      %v3691 = vmul.f32 %v2991, 1.442695
      %v3692 = vpow.pop %v3691
      %v3693 = vmul.f32 %v2992, 1.442695
      %v3694 = vpow.pop %v3693
      %v3695 = vmul.f32 %v2993, 1.442695
      %v3696 = vpow.pop %v3695
      %v3697 = vmul.f32 %v2994, 1.442695
      %v3698 = vpow.pop %v3697
      %v3699 = vmul.f32 %v2995, 1.442695
      %v3700 = vpow.pop %v3699
      %v3701 = vmul.f32 %v2996, 1.442695
      %v3702 = vpow.pop %v3701
      %v3703 = vmul.f32 %v2997, 1.442695
      %v3704 = vpow.pop %v3703
      %v3705 = vmul.f32 %v2998, 1.442695
      %v3706 = vpow.pop %v3705
      %v3707 = vmul.f32 %v2999, 1.442695
      %v3708 = vpow.pop %v3707
      %v3709 = vmul.f32 %v3000, 1.442695
      %v3710 = vpow.pop %v3709
      %v3711 = vmul.f32 %v3001, 1.442695
      %v3712 = vpow.pop %v3711
      %v3713 = vmul.f32 %v3002, 1.442695
      %v3714 = vpow.pop %v3713
      %v3715 = vmul.f32 %v3003, 1.442695
      %v3716 = vpow.pop %v3715
      %v3717 = vmul.f32 %v3004, 1.442695
      %v3718 = vpow.pop %v3717
      %v3719 = vmul.f32 %v3005, 1.442695
      %v3720 = vpow.pop %v3719
      %v3721 = vmul.f32 %v3006, 1.442695
      %v3722 = vpow.pop %v3721
      %v3723 = vmul.f32 %v3007, 1.442695
      %v3724 = vpow.pop %v3723
      %v3725 = vmul.f32 %v3008, 1.442695
      %v3726 = vpow.pop %v3725
      %v3727 = vmul.f32 %v3009, 1.442695
      %v3728 = vpow.pop %v3727
      %v3729 = vmul.f32 %v3010, 1.442695
      %v3730 = vpow.pop %v3729
      %v3731 = vmul.f32 %v3011, 1.442695
      %v3732 = vpow.pop %v3731
      %v3733 = vmul.f32 %v3012, 1.442695
      %v3734 = vpow.pop %v3733
      %v3735 = vmul.f32 %v3013, 1.442695
      %v3736 = vpow.pop %v3735
      %v3737 = vmul.f32 %v3014, 1.442695
      %v3738 = vpow.pop %v3737
      %v3739 = vmul.f32 %v3015, 1.442695
      %v3740 = vpow.pop %v3739
      %v3741 = vmul.f32 %v3016, 1.442695
      %v3742 = vpow.pop %v3741
      %v3743 = vmul.f32 %v3017, 1.442695
      %v3744 = vpow.pop %v3743
      %v3745 = vmul.f32 %v3018, 1.442695
      %v3746 = vpow.pop %v3745
      %v3747 = vmul.f32 %v3019, 1.442695
      %v3748 = vpow.pop %v3747
      %v3749 = vmul.f32 %v3020, 1.442695
      %v3750 = vpow.pop %v3749
      %v3751 = vmul.f32 %v3021, 1.442695
      %v3752 = vpow.pop %v3751
      %v3753 = vmul.f32 %v3022, 1.442695
      %v3754 = vpow.pop %v3753
      %v3755 = vmul.f32 %v3023, 1.442695
      %v3756 = vpow.pop %v3755
      %v3757 = vmul.f32 %v3024, 1.442695
      %v3758 = vpow.pop %v3757
      %v3759 = vmul.f32 %v3025, 1.442695
      %v3760 = vpow.pop %v3759
      %v3761 = vmul.f32 %v3026, 1.442695
      %v3762 = vpow.pop %v3761
      %v3763 = vmul.f32 %v3027, 1.442695
      %v3764 = vpow.pop %v3763
      %v3765 = vmul.f32 %v3028, 1.442695
      %v3766 = vpow.pop %v3765
      %v3767 = vmul.f32 %v3029, 1.442695
      %v3768 = vpow.pop %v3767
      %v3769 = vmul.f32 %v3030, 1.442695
      %v3770 = vpow.pop %v3769
      %v3771 = vmul.f32 %v3031, 1.442695
      %v3772 = vpow.pop %v3771
      %v3773 = vmul.f32 %v3032, 1.442695
      %v3774 = vpow.pop %v3773
      %v3775 = vmul.f32 %v3033, 1.442695
      %v3776 = vpow.pop %v3775
      %v3777 = vmul.f32 %v3034, 1.442695
      %v3778 = vpow.pop %v3777
      %v3779 = vmul.f32 %v3035, 1.442695
      %v3780 = vpow.pop %v3779
      %v3781 = vmul.f32 %v3036, 1.442695
      %v3782 = vpow.pop %v3781
      %v3783 = vmul.f32 %v3037, 1.442695
      %v3784 = vpow.pop %v3783
      %v3785 = vmul.f32 %v3038, 1.442695
      %v3786 = vpow.pop %v3785
      %v3787 = vmul.f32 %v3039, 1.442695
      %v3788 = vpow.pop %v3787
      %v3789 = vmul.f32 %v3040, 1.442695
      %v3790 = vpow.pop %v3789
      %v3791 = vmul.f32 %v3041, 1.442695
      %v3792 = vpow.pop %v3791
      %v3793 = vmul.f32 %v3042, 1.442695
      %v3794 = vpow.pop %v3793
      %v3795 = vmul.f32 %v3043, 1.442695
      %v3796 = vpow.pop %v3795
      %v3797 = vmul.f32 %v3044, 1.442695
      %v3798 = vpow.pop %v3797
      %v3799 = vmul.f32 %v3045, 1.442695
      %v3800 = vpow.pop %v3799
      %v3801 = vmul.f32 %v3046, 1.442695
      %v3802 = vpow.pop %v3801
      %v3803 = vmul.f32 %v3047, 1.442695
      %v3804 = vpow.pop %v3803
      %v3805 = vmul.f32 %v3048, 1.442695
      %v3806 = vpow.pop %v3805
      %v3807 = vmul.f32 %v3049, 1.442695
      %v3808 = vpow.pop %v3807
      %v3809 = vmul.f32 %v3050, 1.442695
      %v3810 = vpow.pop %v3809
      %v3811 = vmul.f32 %v3051, 1.442695
      %v3812 = vpow.pop %v3811
      %v3813 = vmul.f32 %v3052, 1.442695
      %v3814 = vpow.pop %v3813
      %v3815 = vmul.f32 %v3053, 1.442695
      %v3816 = vpow.pop %v3815
      %v3817 = vmul.f32 %v3054, 1.442695
      %v3818 = vpow.pop %v3817
      %v3819 = vmul.f32 %v3055, 1.442695
      %v3820 = vpow.pop %v3819
      %v3821 = vmul.f32 %v3056, 1.442695
      %v3822 = vpow.pop %v3821
      %v3823 = vmul.f32 %v3057, 1.442695
      %v3824 = vpow.pop %v3823
      %v3825 = vmul.f32 %v3058, 1.442695
      %v3826 = vpow.pop %v3825
      %v3827 = vmul.f32 %v3059, 1.442695
      %v3828 = vpow.pop %v3827
      %v3829 = vmul.f32 %v3060, 1.442695
      %v3830 = vpow.pop %v3829
      %v3831 = vmul.f32 %v3061, 1.442695
      %v3832 = vpow.pop %v3831
      %v3833 = vmul.f32 %v3062, 1.442695
      %v3834 = vpow.pop %v3833
      %v3835 = vmul.f32 %v3063, 1.442695
      %v3836 = vpow.pop %v3835
      %v3837 = vmul.f32 %v3064, 1.442695
      %v3838 = vpow.pop %v3837
      %v3839 = vmul.f32 %v3065, 1.442695
      %v3840 = vpow.pop %v3839
      %v3841 = vmul.f32 %v3066, 1.442695
      %v3842 = vpow.pop %v3841
      %v3843 = vmul.f32 %v3067, 1.442695
      %v3844 = vpow.pop %v3843
      %v3845 = vmul.f32 %v3068, 1.442695
      %v3846 = vpow.pop %v3845
      %v3847 = vmul.f32 %v3069, 1.442695
      %v3848 = vpow.pop %v3847
      %v3849 = vmul.f32 %v3070, 1.442695
      %v3850 = vpow.pop %v3849
      %v3851 = vmul.f32 %v3071, 1.442695
      %v3852 = vpow.pop %v3851
      %v3853 = vmul.f32 %v3072, 1.442695
      %v3854 = vpow.pop %v3853
      %v3855 = vmul.f32 %v3073, 1.442695
      %v3856 = vpow.pop %v3855
      %v3857 = vmul.f32 %v3074, 1.442695
      %v3858 = vpow.pop %v3857
      %v3859 = vmul.f32 %v3075, 1.442695
      %v3860 = vpow.pop %v3859
      %v3861 = vmul.f32 %v3076, 1.442695
      %v3862 = vpow.pop %v3861
      %v3863 = vmul.f32 %v3077, 1.442695
      %v3864 = vpow.pop %v3863
      %v3865 = vmul.f32 %v3078, 1.442695
      %v3866 = vpow.pop %v3865
      %v3867 = vmul.f32 %v3079, 1.442695
      %v3868 = vpow.pop %v3867
      %v3869 = vmul.f32 %v3080, 1.442695
      %v3870 = vpow.pop %v3869
      %v3871 = vmul.f32 %v3081, 1.442695
      %v3872 = vpow.pop %v3871
      %v3873 = vmul.f32 %v3082, 1.442695
      %v3874 = vpow.pop %v3873
      %v3875 = vmul.f32 %v3083, 1.442695
      %v3876 = vpow.pop %v3875
      %v3877 = vmul.f32 %v3084, 1.442695
      %v3878 = vpow.pop %v3877
      %v3879 = vmul.f32 %v3085, 1.442695
      %v3880 = vpow.pop %v3879
      %v3881 = vmul.f32 %v3086, 1.442695
      %v3882 = vpow.pop %v3881
      %v3883 = vmul.f32 %v3087, 1.442695
      %v3884 = vpow.pop %v3883
      %v3885 = vmul.f32 %v3088, 1.442695
      %v3886 = vpow.pop %v3885
      %v3887 = vmul.f32 %v3089, 1.442695
      %v3888 = vpow.pop %v3887
      %v3889 = vmul.f32 %v3090, 1.442695
      %v3890 = vpow.pop %v3889
      %v3891 = vmul.f32 %v3091, 1.442695
      %v3892 = vpow.pop %v3891
      %v3893 = vmul.f32 %v3092, 1.442695
      %v3894 = vpow.pop %v3893
      %v3895 = vmul.f32 %v3093, 1.442695
      %v3896 = vpow.pop %v3895
      %v3897 = vmul.f32 %v3094, 1.442695
      %v3898 = vpow.pop %v3897
      %v3899 = vmul.f32 %v3095, 1.442695
      %v3900 = vpow.pop %v3899
      %v3901 = vmul.f32 %v3096, 1.442695
      %v3902 = vpow.pop %v3901
      %v3903 = vmul.f32 %v3097, 1.442695
      %v3904 = vpow.pop %v3903
      %v3905 = vmul.f32 %v3098, 1.442695
      %v3906 = vpow.pop %v3905
      %v3907 = vmul.f32 %v3099, 1.442695
      %v3908 = vpow.pop %v3907
      %v3909 = vmul.f32 %v3100, 1.442695
      %v3910 = vpow.pop %v3909
      %v3911 = vmul.f32 %v3101, 1.442695
      %v3912 = vpow.pop %v3911
      %v3913 = vmul.f32 %v3102, 1.442695
      %v3914 = vpow.pop %v3913
      %v3915 = vmul.f32 %v3103, 1.442695
      %v3916 = vpow.pop %v3915
      %v3917 = vmul.f32 %v3104, 1.442695
      %v3918 = vpow.pop %v3917
      %v3919 = vmul.f32 %v3105, 1.442695
      %v3920 = vpow.pop %v3919
      %v3921 = vmul.f32 %v3106, 1.442695
      %v3922 = vpow.pop %v3921
      %v3923 = vmul.f32 %v3107, 1.442695
      %v3924 = vpow.pop %v3923
      %v3925 = vmul.f32 %v3108, 1.442695
      %v3926 = vpow.pop %v3925
      %v3927 = vmul.f32 %v3109, 1.442695
      %v3928 = vpow.pop %v3927
      %v3929 = vmul.f32 %v3110, 1.442695
      %v3930 = vpow.pop %v3929
      %v3931 = vmul.f32 %v3111, 1.442695
      %v3932 = vpow.pop %v3931
      %v3933 = vmul.f32 %v3112, 1.442695
      %v3934 = vpow.pop %v3933
      %v3935 = vmul.f32 %v3113, 1.442695
      %v3936 = vpow.pop %v3935
      %v3937 = vmul.f32 %v3114, 1.442695
      %v3938 = vpow.pop %v3937
      %v3939 = vmul.f32 %v3115, 1.442695
      %v3940 = vpow.pop %v3939
      %v3941 = vmul.f32 %v3116, 1.442695
      %v3942 = vpow.pop %v3941
      %v3943 = vmul.f32 %v3117, 1.442695
      %v3944 = vpow.pop %v3943
      %v3945 = vmul.f32 %v3118, 1.442695
      %v3946 = vpow.pop %v3945
      %v3947 = vmul.f32 %v3119, 1.442695
      %v3948 = vpow.pop %v3947
      %v3949 = vmul.f32 %v3120, 1.442695
      %v3950 = vpow.pop %v3949
      %v3951 = vmul.f32 %v3121, 1.442695
      %v3952 = vpow.pop %v3951
      %v3953 = vmul.f32 %v3122, 1.442695
      %v3954 = vpow.pop %v3953
      %v3955 = vmul.f32 %v3123, 1.442695
      %v3956 = vpow.pop %v3955
      %v3957 = vmul.f32 %v3124, 1.442695
      %v3958 = vpow.pop %v3957
      %v3959 = vmul.f32 %v3125, 1.442695
      %v3960 = vpow.pop %v3959
      %v3961 = vmul.f32 %v3126, 1.442695
      %v3962 = vpow.pop %v3961
      %v3963 = vmul.f32 %v3127, 1.442695
      %v3964 = vpow.pop %v3963
      %v3965 = vmul.f32 %v3128, 1.442695
      %v3966 = vpow.pop %v3965
      %v3967 = vmul.f32 %v3129, 1.442695
      %v3968 = vpow.pop %v3967
      %v3969 = vmul.f32 %v3130, 1.442695
      %v3970 = vpow.pop %v3969
      %v3971 = vmul.f32 %v3131, 1.442695
      %v3972 = vpow.pop %v3971
      %v3973 = vmul.f32 %v3132, 1.442695
      %v3974 = vpow.pop %v3973
      %v3975 = vmul.f32 %v3133, 1.442695
      %v3976 = vpow.pop %v3975
      %v3977 = vmul.f32 %v3134, 1.442695
      %v3978 = vpow.pop %v3977
      %v3979 = vmul.f32 %v3135, 1.442695
      %v3980 = vpow.pop %v3979
      %v3981 = vmul.f32 %v3136, 1.442695
      %v3982 = vpow.pop %v3981
      %v3983 = vmul.f32 %v3137, 1.442695
      %v3984 = vpow.pop %v3983
      %v3985 = vmul.f32 %v3138, 1.442695
      %v3986 = vpow.pop %v3985
      %v3987 = vmul.f32 %v3139, 1.442695
      %v3988 = vpow.pop %v3987
      %v3989 = vmul.f32 %v3140, 1.442695
      %v3990 = vpow.pop %v3989
      %v3991 = vmul.f32 %v3141, 1.442695
      %v3992 = vpow.pop %v3991
      %v3993 = vmul.f32 %v3142, 1.442695
      %v3994 = vpow.pop %v3993
      %v3995 = vmul.f32 %v3143, 1.442695
      %v3996 = vpow.pop %v3995
      %v3997 = vmul.f32 %v3144, 1.442695
      %v3998 = vpow.pop %v3997
      %v3999 = vmul.f32 %v3145, 1.442695
      %v4000 = vpow.pop %v3999
      %v4001 = vmul.f32 %v3146, 1.442695
      %v4002 = vpow.pop %v4001
      %v4003 = vmul.f32 %v3147, 1.442695
      %v4004 = vpow.pop %v4003
      %v4005 = vmul.f32 %v3148, 1.442695
      %v4006 = vpow.pop %v4005
      %v4007 = vmul.f32 %v3149, 1.442695
      %v4008 = vpow.pop %v4007
      %v4009 = vmul.f32 %v3150, 1.442695
      %v4010 = vpow.pop %v4009
      %v4011 = vmul.f32 %v3151, 1.442695
      %v4012 = vpow.pop %v4011
      %v4013 = vmul.f32 %v3152, 1.442695
      %v4014 = vpow.pop %v4013
      %v4015 = vmul.f32 %v3153, 1.442695
      %v4016 = vpow.pop %v4015
      %v4017 = vmul.f32 %v3154, 1.442695
      %v4018 = vpow.pop %v4017
      %v4019 = vmul.f32 %v3155, 1.442695
      %v4020 = vpow.pop %v4019
      %v4021 = vmul.f32 %v3156, 1.442695
      %v4022 = vpow.pop %v4021
      %v4023 = vmul.f32 %v3157, 1.442695
      %v4024 = vpow.pop %v4023
      %v4025 = vmul.f32 %v3158, 1.442695
      %v4026 = vpow.pop %v4025
      %v4027 = vmul.f32 %v3159, 1.442695
      %v4028 = vpow.pop %v4027
      %v4029 = vmul.f32 %v3160, 1.442695
      %v4030 = vpow.pop %v4029
      %v4031 = vmul.f32 %v3161, 1.442695
      %v4032 = vpow.pop %v4031
      %v4033 = vmul.f32 %v3162, 1.442695
      %v4034 = vpow.pop %v4033
      %v4035 = vmul.f32 %v3163, 1.442695
      %v4036 = vpow.pop %v4035
      %v4037 = vmul.f32 %v3164, 1.442695
      %v4038 = vpow.pop %v4037
      %v4039 = vmul.f32 %v3165, 1.442695
      %v4040 = vpow.pop %v4039
      %v4041 = vmul.f32 %v3166, 1.442695
      %v4042 = vpow.pop %v4041
      %v4043 = vmul.f32 %v3167, 1.442695
      %v4044 = vpow.pop %v4043
      %v4045 = vmul.f32 %v3168, 1.442695
      %v4046 = vpow.pop %v4045
      %v4047 = vmul.f32 %v3169, 1.442695
      %v4048 = vpow.pop %v4047
      %v4049 = vmul.f32 %v3170, 1.442695
      %v4050 = vpow.pop %v4049
      %v4051 = vmul.f32 %v3171, 1.442695
      %v4052 = vpow.pop %v4051
      %v4053 = vmul.f32 %v3172, 1.442695
      %v4054 = vpow.pop %v4053
      %v4055 = vmul.f32 %v3173, 1.442695
      %v4056 = vpow.pop %v4055
      %v4057 = vmul.f32 %v3174, 1.442695
      %v4058 = vpow.pop %v4057
      %v4059 = vmul.f32 %v3175, 1.442695
      %v4060 = vpow.pop %v4059
      %v4061 = vmul.f32 %v3176, 1.442695
      %v4062 = vpow.pop %v4061
      %v4063 = vmul.f32 %v3177, 1.442695
      %v4064 = vpow.pop %v4063
      %v4065 = vmul.f32 %v3178, 1.442695
      %v4066 = vpow.pop %v4065
      %v4067 = vmul.f32 %v3179, 1.442695
      %v4068 = vpow.pop %v4067
      %v4069 = vmul.f32 %v3180, 1.442695
      %v4070 = vpow.pop %v4069
      %v4071 = vmul.f32 %v3181, 1.442695
      %v4072 = vpow.pop %v4071
      %v4073 = vmul.f32 %v3182, 1.442695
      %v4074 = vpow.pop %v4073
      %v4075 = vmul.f32 %v3183, 1.442695
      %v4076 = vpow.pop %v4075
      %v4077 = vmul.f32 %v3184, 1.442695
      %v4078 = vpow.pop %v4077
      %v4079 = vmul.f32 %v3185, 1.442695
      %v4080 = vpow.pop %v4079
      %v4081 = vmul.f32 %v3186, 1.442695
      %v4082 = vpow.pop %v4081
      %v4083 = vmul.f32 %v3187, 1.442695
      %v4084 = vpow.pop %v4083
      %v4085 = vmul.f32 %v3188, 1.442695
      %v4086 = vpow.pop %v4085
      %v4087 = vmul.f32 %v3189, 1.442695
      %v4088 = vpow.pop %v4087
      %v4089 = vmul.f32 %v3190, 1.442695
      %v4090 = vpow.pop %v4089
      %v4091 = vmul.f32 %v3191, 1.442695
      %v4092 = vpow.pop %v4091
      %v4093 = vmul.f32 %v3192, 1.442695
      %v4094 = vpow.pop %v4093
      %v4095 = vmul.f32 %v3193, 1.442695
      %v4096 = vpow.pop %v4095
      %v4097 = vmul.f32 %v3194, 1.442695
      %v4098 = vpow.pop %v4097
      %v4099 = vmul.f32 %v3195, 1.442695
      %v4100 = vpow.pop %v4099
      %v4101 = vmul.f32 %v3196, 1.442695
      %v4102 = vpow.pop %v4101
      %v4103 = vmul.f32 %v3197, 1.442695
      %v4104 = vpow.pop %v4103
      %v4105 = vmul.f32 %v3198, 1.442695
      %v4106 = vpow.pop %v4105
      %v4107 = vmul.f32 %v3199, 1.442695
      %v4108 = vpow.pop %v4107
      %v4109 = vmul.f32 %v3200, 1.442695
      %v4110 = vpow.pop %v4109
      %v4111 = vmul.f32 %v3201, 1.442695
      %v4112 = vpow.pop %v4111
      %v4113 = vmul.f32 %v3202, 1.442695
      %v4114 = vpow.pop %v4113
      %v4115 = vmul.f32 %v3203, 1.442695
      %v4116 = vpow.pop %v4115
      %v4117 = vmul.f32 %v3204, 1.442695
      %v4118 = vpow.pop %v4117
      %v4119 = vmul.f32 %v3205, 1.442695
      %v4120 = vpow.pop %v4119
      %v4121 = vmul.f32 %v3206, 1.442695
      %v4122 = vpow.pop %v4121
      %v4123 = vmul.f32 %v3207, 1.442695
      %v4124 = vpow.pop %v4123
      %v4125 = vmul.f32 %v3208, 1.442695
      %v4126 = vpow.pop %v4125
      %v4127 = vmul.f32 %v3209, 1.442695
      %v4128 = vpow.pop %v4127
      %v4129 = vmul.f32 %v3210, 1.442695
      %v4130 = vpow.pop %v4129
      %v4131 = vmul.f32 %v3211, 1.442695
      %v4132 = vpow.pop %v4131
      %v4133 = vmul.f32 %v3212, 1.442695
      %v4134 = vpow.pop %v4133
      %v4135 = vmul.f32 %v3213, 1.442695
      %v4136 = vpow.pop %v4135
      %v4137 = vmul.f32 %v3214, 1.442695
      %v4138 = vpow.pop %v4137
      %v4139 = vmul.f32 %v3215, 1.442695
      %v4140 = vpow.pop %v4139
      %v4141 = vmul.f32 %v3216, 1.442695
      %v4142 = vpow.pop %v4141
      %v4143 = vmul.f32 %v3217, 1.442695
      %v4144 = vpow.pop %v4143
      %v4145 = vmul.f32 %v3218, 1.442695
      %v4146 = vpow.pop %v4145
      %v4147 = vmul.f32 %v3219, 1.442695
      %v4148 = vpow.pop %v4147
      %v4149 = vmul.f32 %v3220, 1.442695
      %v4150 = vpow.pop %v4149
      %v4151 = vmul.f32 %v3221, 1.442695
      %v4152 = vpow.pop %v4151
      %v4153 = vmul.f32 %v3222, 1.442695
      %v4154 = vpow.pop %v4153
      %v4155 = vmul.f32 %v3223, 1.442695
      %v4156 = vpow.pop %v4155
      %v4157 = vmul.f32 %v3224, 1.442695
      %v4158 = vpow.pop %v4157
      %v4159 = vmul.f32 %v3225, 1.442695
      %v4160 = vpow.pop %v4159
      %v4161 = vmul.f32 %v3226, 1.442695
      %v4162 = vpow.pop %v4161
      %v4163 = vmul.f32 %v3227, 1.442695
      %v4164 = vpow.pop %v4163
      %v4165 = vmul.f32 %v3228, 1.442695
      %v4166 = vpow.pop %v4165
      %v4167 = vmul.f32 %v3229, 1.442695
      %v4168 = vpow.pop %v4167
      %v4169 = vmul.f32 %v3230, 1.442695
      %v4170 = vpow.pop %v4169
      %v4171 = vmul.f32 %v3231, 1.442695
      %v4172 = vpow.pop %v4171
      %v4173 = vmul.f32 %v3232, 1.442695
      %v4174 = vpow.pop %v4173
      %v4175 = vmul.f32 %v3233, 1.442695
      %v4176 = vpow.pop %v4175
      %v4177 = vmul.f32 %v3234, 1.442695
      %v4178 = vpow.pop %v4177
      %v4179 = vmul.f32 %v3235, 1.442695
      %v4180 = vpow.pop %v4179
      %v4181 = vmul.f32 %v3236, 1.442695
      %v4182 = vpow.pop %v4181
      %v4183 = vmul.f32 %v3237, 1.442695
      %v4184 = vpow.pop %v4183
      %v4185 = vmul.f32 %v3238, 1.442695
      %v4186 = vpow.pop %v4185
      %v4187 = vmul.f32 %v3239, 1.442695
      %v4188 = vpow.pop %v4187
      %v4189 = vmul.f32 %v3240, 1.442695
      %v4190 = vpow.pop %v4189
      %v4191 = vmul.f32 %v3241, 1.442695
      %v4192 = vpow.pop %v4191
      %v4193 = vmul.f32 %v3242, 1.442695
      %v4194 = vpow.pop %v4193
      %v4195 = vmul.f32 %v3243, 1.442695
      %v4196 = vpow.pop %v4195
      %v4197 = vmul.f32 %v3244, 1.442695
      %v4198 = vpow.pop %v4197
      %v4199 = vmul.f32 %v3245, 1.442695
      %v4200 = vpow.pop %v4199
      %v4201 = vmul.f32 %v3246, 1.442695
      %v4202 = vpow.pop %v4201
      %v4203 = vmul.f32 %v3247, 1.442695
      %v4204 = vpow.pop %v4203
      %v4205 = vmul.f32 %v3248, 1.442695
      %v4206 = vpow.pop %v4205
      %v4207 = vmul.f32 %v3249, 1.442695
      %v4208 = vpow.pop %v4207
      %v4209 = vmul.f32 %v3250, 1.442695
      %v4210 = vpow.pop %v4209
      %v4211 = vmul.f32 %v3251, 1.442695
      %v4212 = vpow.pop %v4211
      %v4213 = vmul.f32 %v3252, 1.442695
      %v4214 = vpow.pop %v4213
      %v4215 = vmul.f32 %v3253, 1.442695
      %v4216 = vpow.pop %v4215
      %v4217 = vmul.f32 %v3254, 1.442695
      %v4218 = vpow.pop %v4217
      %v4219 = vmul.f32 %v3255, 1.442695
      %v4220 = vpow.pop %v4219
      %v4221 = vmul.f32 %v3256, 1.442695
      %v4222 = vpow.pop %v4221
      %v4223 = vmul.f32 %v3257, 1.442695
      %v4224 = vpow.pop %v4223
      %v4225 = vmul.f32 %v3258, 1.442695
      %v4226 = vpow.pop %v4225
      %v4227 = vmul.f32 %v3259, 1.442695
      %v4228 = vpow.pop %v4227
      %v4229 = vmul.f32 %v3260, 1.442695
      %v4230 = vpow.pop %v4229
      %v4231 = vmul.f32 %v3261, 1.442695
      %v4232 = vpow.pop %v4231
      %v4233 = vmul.f32 %v3262, 1.442695
      %v4234 = vpow.pop %v4233
      %v4235 = vmul.f32 %v3263, 1.442695
      %v4236 = vpow.pop %v4235
      %v4237 = vmul.f32 %v3264, 1.442695
      %v4238 = vpow.pop %v4237
      %v4239 = vmul.f32 %v3265, 1.442695
      %v4240 = vpow.pop %v4239
      %v4241 = vmul.f32 %v3266, 1.442695
      %v4242 = vpow.pop %v4241
      %v4243 = vmul.f32 %v3267, 1.442695
      %v4244 = vpow.pop %v4243
      %v4245 = vmul.f32 %v3268, 1.442695
      %v4246 = vpow.pop %v4245
      %v4247 = vmul.f32 %v3269, 1.442695
      %v4248 = vpow.pop %v4247
      %v4249 = vmul.f32 %v3270, 1.442695
      %v4250 = vpow.pop %v4249
      %v4251 = vmul.f32 %v3271, 1.442695
      %v4252 = vpow.pop %v4251
      %v4253 = vmul.f32 %v3272, 1.442695
      %v4254 = vpow.pop %v4253
      %v4255 = vmul.f32 %v3273, 1.442695
      %v4256 = vpow.pop %v4255
      %v4257 = vmul.f32 %v3274, 1.442695
      %v4258 = vpow.pop %v4257
      %v4259 = vmul.f32 %v3275, 1.442695
      %v4260 = vpow.pop %v4259
      %v4261 = vmul.f32 %v3276, 1.442695
      %v4262 = vpow.pop %v4261
      %v4263 = vmul.f32 %v3277, 1.442695
      %v4264 = vpow.pop %v4263
      %v4265 = vmul.f32 %v3278, 1.442695
      %v4266 = vpow.pop %v4265
      %v4267 = vmul.f32 %v3279, 1.442695
      %v4268 = vpow.pop %v4267
      %v4269 = vmul.f32 %v3280, 1.442695
      %v4270 = vpow.pop %v4269
      %v4271 = vmul.f32 %v3281, 1.442695
      %v4272 = vpow.pop %v4271
      %v4273 = vmul.f32 %v3282, 1.442695
      %v4274 = vpow.pop %v4273
      %v4275 = vmul.f32 %v3283, 1.442695
      %v4276 = vpow.pop %v4275
      %v4277 = vmul.f32 %v3284, 1.442695
      %v4278 = vpow.pop %v4277
      %v4279 = vmul.f32 %v3285, 1.442695
      %v4280 = vpow.pop %v4279
      %v4281 = vmul.f32 %v3286, 1.442695
      %v4282 = vpow.pop %v4281
      %v4283 = vmul.f32 %v3287, 1.442695
      %v4284 = vpow.pop %v4283
      %v4285 = vmul.f32 %v3288, 1.442695
      %v4286 = vpow.pop %v4285
      %v4287 = vmul.f32 %v3289, 1.442695
      %v4288 = vpow.pop %v4287
      %v4289 = vmul.f32 %v3290, 1.442695
      %v4290 = vpow.pop %v4289
      %v4291 = vmul.f32 %v3291, 1.442695
      %v4292 = vpow.pop %v4291
      %v4293 = vmul.f32 %v3292, 1.442695
      %v4294 = vpow.pop %v4293
      %v4295 = vmul.f32 %v3293, 1.442695
      %v4296 = vpow.pop %v4295
      %v4297 = vmul.f32 %v3294, 1.442695
      %v4298 = vpow.pop %v4297
      %v4299 = vmul.f32 %v3295, 1.442695
      %v4300 = vpow.pop %v4299
      %v4301 = vmul.f32 %v3296, 1.442695
      %v4302 = vpow.pop %v4301
      %v4303 = vmul.f32 %v3297, 1.442695
      %v4304 = vpow.pop %v4303
      %v4305 = vmul.f32 %v3298, 1.442695
      %v4306 = vpow.pop %v4305
      %v4307 = vmul.f32 %v3299, 1.442695
      %v4308 = vpow.pop %v4307
      %v4309 = vmul.f32 %v3300, 1.442695
      %v4310 = vpow.pop %v4309
      %v4311 = vmul.f32 %v3301, 1.442695
      %v4312 = vpow.pop %v4311
      %v4313 = vmul.f32 %v3302, 1.442695
      %v4314 = vpow.pop %v4313
      %v4315 = vmul.f32 %v3303, 1.442695
      %v4316 = vpow.pop %v4315
      %v4317 = vmul.f32 %v3304, 1.442695
      %v4318 = vpow.pop %v4317
      %v4319 = vmul.f32 %v3305, 1.442695
      %v4320 = vpow.pop %v4319
      %v4321 = vmul.f32 %v3306, 1.442695
      %v4322 = vpow.pop %v4321
      %v4323 = vmul.f32 %v3307, 1.442695
      %v4324 = vpow.pop %v4323
      %v4325 = vmul.f32 %v3308, 1.442695
      %v4326 = vpow.pop %v4325
      %v4327 = vmul.f32 %v3309, 1.442695
      %v4328 = vpow.pop %v4327
      %v4329 = vmul.f32 %v3310, 1.442695
      %v4330 = vpow.pop %v4329
      %v4331 = vmul.f32 %v3311, 1.442695
      %v4332 = vpow.pop %v4331
      %v4333 = vmul.f32 %v3312, 1.442695
      %v4334 = vpow.pop %v4333
      %v4335 = vmul.f32 %v3313, 1.442695
      %v4336 = vpow.pop %v4335
      %v4337 = vmul.f32 %v3314, 1.442695
      %v4338 = vpow.pop %v4337
      %v4339 = vadd.f32 %v3316, 1.0
      %v4340 = vadd.f32 %v3318, 1.0
      %v4341 = vadd.f32 %v3320, 1.0
      %v4342 = vadd.f32 %v3322, 1.0
      %v4343 = vadd.f32 %v3324, 1.0
      %v4344 = vadd.f32 %v3326, 1.0
      %v4345 = vadd.f32 %v3328, 1.0
      %v4346 = vadd.f32 %v3330, 1.0
      %v4347 = vadd.f32 %v3332, 1.0
      %v4348 = vadd.f32 %v3334, 1.0
      %v4349 = vadd.f32 %v3336, 1.0
      %v4350 = vadd.f32 %v3338, 1.0
      %v4351 = vadd.f32 %v3340, 1.0
      %v4352 = vadd.f32 %v3342, 1.0
      %v4353 = vadd.f32 %v3344, 1.0
      %v4354 = vadd.f32 %v3346, 1.0
      %v4355 = vadd.f32 %v3348, 1.0
      %v4356 = vadd.f32 %v3350, 1.0
      %v4357 = vadd.f32 %v3352, 1.0
      %v4358 = vadd.f32 %v3354, 1.0
      %v4359 = vadd.f32 %v3356, 1.0
      %v4360 = vadd.f32 %v3358, 1.0
      %v4361 = vadd.f32 %v3360, 1.0
      %v4362 = vadd.f32 %v3362, 1.0
      %v4363 = vadd.f32 %v3364, 1.0
      %v4364 = vadd.f32 %v3366, 1.0
      %v4365 = vadd.f32 %v3368, 1.0
      %v4366 = vadd.f32 %v3370, 1.0
      %v4367 = vadd.f32 %v3372, 1.0
      %v4368 = vadd.f32 %v3374, 1.0
      %v4369 = vadd.f32 %v3376, 1.0
      %v4370 = vadd.f32 %v3378, 1.0
      %v4371 = vadd.f32 %v3380, 1.0
      %v4372 = vadd.f32 %v3382, 1.0
      %v4373 = vadd.f32 %v3384, 1.0
      %v4374 = vadd.f32 %v3386, 1.0
      %v4375 = vadd.f32 %v3388, 1.0
      %v4376 = vadd.f32 %v3390, 1.0
      %v4377 = vadd.f32 %v3392, 1.0
      %v4378 = vadd.f32 %v3394, 1.0
      %v4379 = vadd.f32 %v3396, 1.0
      %v4380 = vadd.f32 %v3398, 1.0
      %v4381 = vadd.f32 %v3400, 1.0
      %v4382 = vadd.f32 %v3402, 1.0
      %v4383 = vadd.f32 %v3404, 1.0
      %v4384 = vadd.f32 %v3406, 1.0
      %v4385 = vadd.f32 %v3408, 1.0
      %v4386 = vadd.f32 %v3410, 1.0
      %v4387 = vadd.f32 %v3412, 1.0
      %v4388 = vadd.f32 %v3414, 1.0
      %v4389 = vadd.f32 %v3416, 1.0
      %v4390 = vadd.f32 %v3418, 1.0
      %v4391 = vadd.f32 %v3420, 1.0
      %v4392 = vadd.f32 %v3422, 1.0
      %v4393 = vadd.f32 %v3424, 1.0
      %v4394 = vadd.f32 %v3426, 1.0
      %v4395 = vadd.f32 %v3428, 1.0
      %v4396 = vadd.f32 %v3430, 1.0
      %v4397 = vadd.f32 %v3432, 1.0
      %v4398 = vadd.f32 %v3434, 1.0
      %v4399 = vadd.f32 %v3436, 1.0
      %v4400 = vadd.f32 %v3438, 1.0
      %v4401 = vadd.f32 %v3440, 1.0
      %v4402 = vadd.f32 %v3442, 1.0
      %v4403 = vadd.f32 %v3444, 1.0
      %v4404 = vadd.f32 %v3446, 1.0
      %v4405 = vadd.f32 %v3448, 1.0
      %v4406 = vadd.f32 %v3450, 1.0
      %v4407 = vadd.f32 %v3452, 1.0
      %v4408 = vadd.f32 %v3454, 1.0
      %v4409 = vadd.f32 %v3456, 1.0
      %v4410 = vadd.f32 %v3458, 1.0
      %v4411 = vadd.f32 %v3460, 1.0
      %v4412 = vadd.f32 %v3462, 1.0
      %v4413 = vadd.f32 %v3464, 1.0
      %v4414 = vadd.f32 %v3466, 1.0
      %v4415 = vadd.f32 %v3468, 1.0
      %v4416 = vadd.f32 %v3470, 1.0
      %v4417 = vadd.f32 %v3472, 1.0
      %v4418 = vadd.f32 %v3474, 1.0
      %v4419 = vadd.f32 %v3476, 1.0
      %v4420 = vadd.f32 %v3478, 1.0
      %v4421 = vadd.f32 %v3480, 1.0
      %v4422 = vadd.f32 %v3482, 1.0
      %v4423 = vadd.f32 %v3484, 1.0
      %v4424 = vadd.f32 %v3486, 1.0
      %v4425 = vadd.f32 %v3488, 1.0
      %v4426 = vadd.f32 %v3490, 1.0
      %v4427 = vadd.f32 %v3492, 1.0
      %v4428 = vadd.f32 %v3494, 1.0
      %v4429 = vadd.f32 %v3496, 1.0
      %v4430 = vadd.f32 %v3498, 1.0
      %v4431 = vadd.f32 %v3500, 1.0
      %v4432 = vadd.f32 %v3502, 1.0
      %v4433 = vadd.f32 %v3504, 1.0
      %v4434 = vadd.f32 %v3506, 1.0
      %v4435 = vadd.f32 %v3508, 1.0
      %v4436 = vadd.f32 %v3510, 1.0
      %v4437 = vadd.f32 %v3512, 1.0
      %v4438 = vadd.f32 %v3514, 1.0
      %v4439 = vadd.f32 %v3516, 1.0
      %v4440 = vadd.f32 %v3518, 1.0
      %v4441 = vadd.f32 %v3520, 1.0
      %v4442 = vadd.f32 %v3522, 1.0
      %v4443 = vadd.f32 %v3524, 1.0
      %v4444 = vadd.f32 %v3526, 1.0
      %v4445 = vadd.f32 %v3528, 1.0
      %v4446 = vadd.f32 %v3530, 1.0
      %v4447 = vadd.f32 %v3532, 1.0
      %v4448 = vadd.f32 %v3534, 1.0
      %v4449 = vadd.f32 %v3536, 1.0
      %v4450 = vadd.f32 %v3538, 1.0
      %v4451 = vadd.f32 %v3540, 1.0
      %v4452 = vadd.f32 %v3542, 1.0
      %v4453 = vadd.f32 %v3544, 1.0
      %v4454 = vadd.f32 %v3546, 1.0
      %v4455 = vadd.f32 %v3548, 1.0
      %v4456 = vadd.f32 %v3550, 1.0
      %v4457 = vadd.f32 %v3552, 1.0
      %v4458 = vadd.f32 %v3554, 1.0
      %v4459 = vadd.f32 %v3556, 1.0
      %v4460 = vadd.f32 %v3558, 1.0
      %v4461 = vadd.f32 %v3560, 1.0
      %v4462 = vadd.f32 %v3562, 1.0
      %v4463 = vadd.f32 %v3564, 1.0
      %v4464 = vadd.f32 %v3566, 1.0
      %v4465 = vadd.f32 %v3568, 1.0
      %v4466 = vadd.f32 %v3570, 1.0
      %v4467 = vadd.f32 %v3572, 1.0
      %v4468 = vadd.f32 %v3574, 1.0
      %v4469 = vadd.f32 %v3576, 1.0
      %v4470 = vadd.f32 %v3578, 1.0
      %v4471 = vadd.f32 %v3580, 1.0
      %v4472 = vadd.f32 %v3582, 1.0
      %v4473 = vadd.f32 %v3584, 1.0
      %v4474 = vadd.f32 %v3586, 1.0
      %v4475 = vadd.f32 %v3588, 1.0
      %v4476 = vadd.f32 %v3590, 1.0
      %v4477 = vadd.f32 %v3592, 1.0
      %v4478 = vadd.f32 %v3594, 1.0
      %v4479 = vadd.f32 %v3596, 1.0
      %v4480 = vadd.f32 %v3598, 1.0
      %v4481 = vadd.f32 %v3600, 1.0
      %v4482 = vadd.f32 %v3602, 1.0
      %v4483 = vadd.f32 %v3604, 1.0
      %v4484 = vadd.f32 %v3606, 1.0
      %v4485 = vadd.f32 %v3608, 1.0
      %v4486 = vadd.f32 %v3610, 1.0
      %v4487 = vadd.f32 %v3612, 1.0
      %v4488 = vadd.f32 %v3614, 1.0
      %v4489 = vadd.f32 %v3616, 1.0
      %v4490 = vadd.f32 %v3618, 1.0
      %v4491 = vadd.f32 %v3620, 1.0
      %v4492 = vadd.f32 %v3622, 1.0
      %v4493 = vadd.f32 %v3624, 1.0
      %v4494 = vadd.f32 %v3626, 1.0
      %v4495 = vadd.f32 %v3628, 1.0
      %v4496 = vadd.f32 %v3630, 1.0
      %v4497 = vadd.f32 %v3632, 1.0
      %v4498 = vadd.f32 %v3634, 1.0
      %v4499 = vadd.f32 %v3636, 1.0
      %v4500 = vadd.f32 %v3638, 1.0
      %v4501 = vadd.f32 %v3640, 1.0
      %v4502 = vadd.f32 %v3642, 1.0
      %v4503 = vadd.f32 %v3644, 1.0
      %v4504 = vadd.f32 %v3646, 1.0
      %v4505 = vadd.f32 %v3648, 1.0
      %v4506 = vadd.f32 %v3650, 1.0
      %v4507 = vadd.f32 %v3652, 1.0
      %v4508 = vadd.f32 %v3654, 1.0
      %v4509 = vadd.f32 %v3656, 1.0
      %v4510 = vadd.f32 %v3658, 1.0
      %v4511 = vadd.f32 %v3660, 1.0
      %v4512 = vadd.f32 %v3662, 1.0
      %v4513 = vadd.f32 %v3664, 1.0
      %v4514 = vadd.f32 %v3666, 1.0
      %v4515 = vadd.f32 %v3668, 1.0
      %v4516 = vadd.f32 %v3670, 1.0
      %v4517 = vadd.f32 %v3672, 1.0
      %v4518 = vadd.f32 %v3674, 1.0
      %v4519 = vadd.f32 %v3676, 1.0
      %v4520 = vadd.f32 %v3678, 1.0
      %v4521 = vadd.f32 %v3680, 1.0
      %v4522 = vadd.f32 %v3682, 1.0
      %v4523 = vadd.f32 %v3684, 1.0
      %v4524 = vadd.f32 %v3686, 1.0
      %v4525 = vadd.f32 %v3688, 1.0
      %v4526 = vadd.f32 %v3690, 1.0
      %v4527 = vadd.f32 %v3692, 1.0
      %v4528 = vadd.f32 %v3694, 1.0
      %v4529 = vadd.f32 %v3696, 1.0
      %v4530 = vadd.f32 %v3698, 1.0
      %v4531 = vadd.f32 %v3700, 1.0
      %v4532 = vadd.f32 %v3702, 1.0
      %v4533 = vadd.f32 %v3704, 1.0
      %v4534 = vadd.f32 %v3706, 1.0
      %v4535 = vadd.f32 %v3708, 1.0
      %v4536 = vadd.f32 %v3710, 1.0
      %v4537 = vadd.f32 %v3712, 1.0
      %v4538 = vadd.f32 %v3714, 1.0
      %v4539 = vadd.f32 %v3716, 1.0
      %v4540 = vadd.f32 %v3718, 1.0
      %v4541 = vadd.f32 %v3720, 1.0
      %v4542 = vadd.f32 %v3722, 1.0
      %v4543 = vadd.f32 %v3724, 1.0
      %v4544 = vadd.f32 %v3726, 1.0
      %v4545 = vadd.f32 %v3728, 1.0
      %v4546 = vadd.f32 %v3730, 1.0
      %v4547 = vadd.f32 %v3732, 1.0
      %v4548 = vadd.f32 %v3734, 1.0
      %v4549 = vadd.f32 %v3736, 1.0
      %v4550 = vadd.f32 %v3738, 1.0
      %v4551 = vadd.f32 %v3740, 1.0
      %v4552 = vadd.f32 %v3742, 1.0
      %v4553 = vadd.f32 %v3744, 1.0
      %v4554 = vadd.f32 %v3746, 1.0
      %v4555 = vadd.f32 %v3748, 1.0
      %v4556 = vadd.f32 %v3750, 1.0
      %v4557 = vadd.f32 %v3752, 1.0
      %v4558 = vadd.f32 %v3754, 1.0
      %v4559 = vadd.f32 %v3756, 1.0
      %v4560 = vadd.f32 %v3758, 1.0
      %v4561 = vadd.f32 %v3760, 1.0
      %v4562 = vadd.f32 %v3762, 1.0
      %v4563 = vadd.f32 %v3764, 1.0
      %v4564 = vadd.f32 %v3766, 1.0
      %v4565 = vadd.f32 %v3768, 1.0
      %v4566 = vadd.f32 %v3770, 1.0
      %v4567 = vadd.f32 %v3772, 1.0
      %v4568 = vadd.f32 %v3774, 1.0
      %v4569 = vadd.f32 %v3776, 1.0
      %v4570 = vadd.f32 %v3778, 1.0
      %v4571 = vadd.f32 %v3780, 1.0
      %v4572 = vadd.f32 %v3782, 1.0
      %v4573 = vadd.f32 %v3784, 1.0
      %v4574 = vadd.f32 %v3786, 1.0
      %v4575 = vadd.f32 %v3788, 1.0
      %v4576 = vadd.f32 %v3790, 1.0
      %v4577 = vadd.f32 %v3792, 1.0
      %v4578 = vadd.f32 %v3794, 1.0
      %v4579 = vadd.f32 %v3796, 1.0
      %v4580 = vadd.f32 %v3798, 1.0
      %v4581 = vadd.f32 %v3800, 1.0
      %v4582 = vadd.f32 %v3802, 1.0
      %v4583 = vadd.f32 %v3804, 1.0
      %v4584 = vadd.f32 %v3806, 1.0
      %v4585 = vadd.f32 %v3808, 1.0
      %v4586 = vadd.f32 %v3810, 1.0
      %v4587 = vadd.f32 %v3812, 1.0
      %v4588 = vadd.f32 %v3814, 1.0
      %v4589 = vadd.f32 %v3816, 1.0
      %v4590 = vadd.f32 %v3818, 1.0
      %v4591 = vadd.f32 %v3820, 1.0
      %v4592 = vadd.f32 %v3822, 1.0
      %v4593 = vadd.f32 %v3824, 1.0
      %v4594 = vadd.f32 %v3826, 1.0
      %v4595 = vadd.f32 %v3828, 1.0
      %v4596 = vadd.f32 %v3830, 1.0
      %v4597 = vadd.f32 %v3832, 1.0
      %v4598 = vadd.f32 %v3834, 1.0
      %v4599 = vadd.f32 %v3836, 1.0
      %v4600 = vadd.f32 %v3838, 1.0
      %v4601 = vadd.f32 %v3840, 1.0
      %v4602 = vadd.f32 %v3842, 1.0
      %v4603 = vadd.f32 %v3844, 1.0
      %v4604 = vadd.f32 %v3846, 1.0
      %v4605 = vadd.f32 %v3848, 1.0
      %v4606 = vadd.f32 %v3850, 1.0
      %v4607 = vadd.f32 %v3852, 1.0
      %v4608 = vadd.f32 %v3854, 1.0
      %v4609 = vadd.f32 %v3856, 1.0
      %v4610 = vadd.f32 %v3858, 1.0
      %v4611 = vadd.f32 %v3860, 1.0
      %v4612 = vadd.f32 %v3862, 1.0
      %v4613 = vadd.f32 %v3864, 1.0
      %v4614 = vadd.f32 %v3866, 1.0
      %v4615 = vadd.f32 %v3868, 1.0
      %v4616 = vadd.f32 %v3870, 1.0
      %v4617 = vadd.f32 %v3872, 1.0
      %v4618 = vadd.f32 %v3874, 1.0
      %v4619 = vadd.f32 %v3876, 1.0
      %v4620 = vadd.f32 %v3878, 1.0
      %v4621 = vadd.f32 %v3880, 1.0
      %v4622 = vadd.f32 %v3882, 1.0
      %v4623 = vadd.f32 %v3884, 1.0
      %v4624 = vadd.f32 %v3886, 1.0
      %v4625 = vadd.f32 %v3888, 1.0
      %v4626 = vadd.f32 %v3890, 1.0
      %v4627 = vadd.f32 %v3892, 1.0
      %v4628 = vadd.f32 %v3894, 1.0
      %v4629 = vadd.f32 %v3896, 1.0
      %v4630 = vadd.f32 %v3898, 1.0
      %v4631 = vadd.f32 %v3900, 1.0
      %v4632 = vadd.f32 %v3902, 1.0
      %v4633 = vadd.f32 %v3904, 1.0
      %v4634 = vadd.f32 %v3906, 1.0
      %v4635 = vadd.f32 %v3908, 1.0
      %v4636 = vadd.f32 %v3910, 1.0
      %v4637 = vadd.f32 %v3912, 1.0
      %v4638 = vadd.f32 %v3914, 1.0
      %v4639 = vadd.f32 %v3916, 1.0
      %v4640 = vadd.f32 %v3918, 1.0
      %v4641 = vadd.f32 %v3920, 1.0
      %v4642 = vadd.f32 %v3922, 1.0
      %v4643 = vadd.f32 %v3924, 1.0
      %v4644 = vadd.f32 %v3926, 1.0
      %v4645 = vadd.f32 %v3928, 1.0
      %v4646 = vadd.f32 %v3930, 1.0
      %v4647 = vadd.f32 %v3932, 1.0
      %v4648 = vadd.f32 %v3934, 1.0
      %v4649 = vadd.f32 %v3936, 1.0
      %v4650 = vadd.f32 %v3938, 1.0
      %v4651 = vadd.f32 %v3940, 1.0
      %v4652 = vadd.f32 %v3942, 1.0
      %v4653 = vadd.f32 %v3944, 1.0
      %v4654 = vadd.f32 %v3946, 1.0
      %v4655 = vadd.f32 %v3948, 1.0
      %v4656 = vadd.f32 %v3950, 1.0
      %v4657 = vadd.f32 %v3952, 1.0
      %v4658 = vadd.f32 %v3954, 1.0
      %v4659 = vadd.f32 %v3956, 1.0
      %v4660 = vadd.f32 %v3958, 1.0
      %v4661 = vadd.f32 %v3960, 1.0
      %v4662 = vadd.f32 %v3962, 1.0
      %v4663 = vadd.f32 %v3964, 1.0
      %v4664 = vadd.f32 %v3966, 1.0
      %v4665 = vadd.f32 %v3968, 1.0
      %v4666 = vadd.f32 %v3970, 1.0
      %v4667 = vadd.f32 %v3972, 1.0
      %v4668 = vadd.f32 %v3974, 1.0
      %v4669 = vadd.f32 %v3976, 1.0
      %v4670 = vadd.f32 %v3978, 1.0
      %v4671 = vadd.f32 %v3980, 1.0
      %v4672 = vadd.f32 %v3982, 1.0
      %v4673 = vadd.f32 %v3984, 1.0
      %v4674 = vadd.f32 %v3986, 1.0
      %v4675 = vadd.f32 %v3988, 1.0
      %v4676 = vadd.f32 %v3990, 1.0
      %v4677 = vadd.f32 %v3992, 1.0
      %v4678 = vadd.f32 %v3994, 1.0
      %v4679 = vadd.f32 %v3996, 1.0
      %v4680 = vadd.f32 %v3998, 1.0
      %v4681 = vadd.f32 %v4000, 1.0
      %v4682 = vadd.f32 %v4002, 1.0
      %v4683 = vadd.f32 %v4004, 1.0
      %v4684 = vadd.f32 %v4006, 1.0
      %v4685 = vadd.f32 %v4008, 1.0
      %v4686 = vadd.f32 %v4010, 1.0
      %v4687 = vadd.f32 %v4012, 1.0
      %v4688 = vadd.f32 %v4014, 1.0
      %v4689 = vadd.f32 %v4016, 1.0
      %v4690 = vadd.f32 %v4018, 1.0
      %v4691 = vadd.f32 %v4020, 1.0
      %v4692 = vadd.f32 %v4022, 1.0
      %v4693 = vadd.f32 %v4024, 1.0
      %v4694 = vadd.f32 %v4026, 1.0
      %v4695 = vadd.f32 %v4028, 1.0
      %v4696 = vadd.f32 %v4030, 1.0
      %v4697 = vadd.f32 %v4032, 1.0
      %v4698 = vadd.f32 %v4034, 1.0
      %v4699 = vadd.f32 %v4036, 1.0
      %v4700 = vadd.f32 %v4038, 1.0
      %v4701 = vadd.f32 %v4040, 1.0
      %v4702 = vadd.f32 %v4042, 1.0
      %v4703 = vadd.f32 %v4044, 1.0
      %v4704 = vadd.f32 %v4046, 1.0
      %v4705 = vadd.f32 %v4048, 1.0
      %v4706 = vadd.f32 %v4050, 1.0
      %v4707 = vadd.f32 %v4052, 1.0
      %v4708 = vadd.f32 %v4054, 1.0
      %v4709 = vadd.f32 %v4056, 1.0
      %v4710 = vadd.f32 %v4058, 1.0
      %v4711 = vadd.f32 %v4060, 1.0
      %v4712 = vadd.f32 %v4062, 1.0
      %v4713 = vadd.f32 %v4064, 1.0
      %v4714 = vadd.f32 %v4066, 1.0
      %v4715 = vadd.f32 %v4068, 1.0
      %v4716 = vadd.f32 %v4070, 1.0
      %v4717 = vadd.f32 %v4072, 1.0
      %v4718 = vadd.f32 %v4074, 1.0
      %v4719 = vadd.f32 %v4076, 1.0
      %v4720 = vadd.f32 %v4078, 1.0
      %v4721 = vadd.f32 %v4080, 1.0
      %v4722 = vadd.f32 %v4082, 1.0
      %v4723 = vadd.f32 %v4084, 1.0
      %v4724 = vadd.f32 %v4086, 1.0
      %v4725 = vadd.f32 %v4088, 1.0
      %v4726 = vadd.f32 %v4090, 1.0
      %v4727 = vadd.f32 %v4092, 1.0
      %v4728 = vadd.f32 %v4094, 1.0
      %v4729 = vadd.f32 %v4096, 1.0
      %v4730 = vadd.f32 %v4098, 1.0
      %v4731 = vadd.f32 %v4100, 1.0
      %v4732 = vadd.f32 %v4102, 1.0
      %v4733 = vadd.f32 %v4104, 1.0
      %v4734 = vadd.f32 %v4106, 1.0
      %v4735 = vadd.f32 %v4108, 1.0
      %v4736 = vadd.f32 %v4110, 1.0
      %v4737 = vadd.f32 %v4112, 1.0
      %v4738 = vadd.f32 %v4114, 1.0
      %v4739 = vadd.f32 %v4116, 1.0
      %v4740 = vadd.f32 %v4118, 1.0
      %v4741 = vadd.f32 %v4120, 1.0
      %v4742 = vadd.f32 %v4122, 1.0
      %v4743 = vadd.f32 %v4124, 1.0
      %v4744 = vadd.f32 %v4126, 1.0
      %v4745 = vadd.f32 %v4128, 1.0
      %v4746 = vadd.f32 %v4130, 1.0
      %v4747 = vadd.f32 %v4132, 1.0
      %v4748 = vadd.f32 %v4134, 1.0
      %v4749 = vadd.f32 %v4136, 1.0
      %v4750 = vadd.f32 %v4138, 1.0
      %v4751 = vadd.f32 %v4140, 1.0
      %v4752 = vadd.f32 %v4142, 1.0
      %v4753 = vadd.f32 %v4144, 1.0
      %v4754 = vadd.f32 %v4146, 1.0
      %v4755 = vadd.f32 %v4148, 1.0
      %v4756 = vadd.f32 %v4150, 1.0
      %v4757 = vadd.f32 %v4152, 1.0
      %v4758 = vadd.f32 %v4154, 1.0
      %v4759 = vadd.f32 %v4156, 1.0
      %v4760 = vadd.f32 %v4158, 1.0
      %v4761 = vadd.f32 %v4160, 1.0
      %v4762 = vadd.f32 %v4162, 1.0
      %v4763 = vadd.f32 %v4164, 1.0
      %v4764 = vadd.f32 %v4166, 1.0
      %v4765 = vadd.f32 %v4168, 1.0
      %v4766 = vadd.f32 %v4170, 1.0
      %v4767 = vadd.f32 %v4172, 1.0
      %v4768 = vadd.f32 %v4174, 1.0
      %v4769 = vadd.f32 %v4176, 1.0
      %v4770 = vadd.f32 %v4178, 1.0
      %v4771 = vadd.f32 %v4180, 1.0
      %v4772 = vadd.f32 %v4182, 1.0
      %v4773 = vadd.f32 %v4184, 1.0
      %v4774 = vadd.f32 %v4186, 1.0
      %v4775 = vadd.f32 %v4188, 1.0
      %v4776 = vadd.f32 %v4190, 1.0
      %v4777 = vadd.f32 %v4192, 1.0
      %v4778 = vadd.f32 %v4194, 1.0
      %v4779 = vadd.f32 %v4196, 1.0
      %v4780 = vadd.f32 %v4198, 1.0
      %v4781 = vadd.f32 %v4200, 1.0
      %v4782 = vadd.f32 %v4202, 1.0
      %v4783 = vadd.f32 %v4204, 1.0
      %v4784 = vadd.f32 %v4206, 1.0
      %v4785 = vadd.f32 %v4208, 1.0
      %v4786 = vadd.f32 %v4210, 1.0
      %v4787 = vadd.f32 %v4212, 1.0
      %v4788 = vadd.f32 %v4214, 1.0
      %v4789 = vadd.f32 %v4216, 1.0
      %v4790 = vadd.f32 %v4218, 1.0
      %v4791 = vadd.f32 %v4220, 1.0
      %v4792 = vadd.f32 %v4222, 1.0
      %v4793 = vadd.f32 %v4224, 1.0
      %v4794 = vadd.f32 %v4226, 1.0
      %v4795 = vadd.f32 %v4228, 1.0
      %v4796 = vadd.f32 %v4230, 1.0
      %v4797 = vadd.f32 %v4232, 1.0
      %v4798 = vadd.f32 %v4234, 1.0
      %v4799 = vadd.f32 %v4236, 1.0
      %v4800 = vadd.f32 %v4238, 1.0
      %v4801 = vadd.f32 %v4240, 1.0
      %v4802 = vadd.f32 %v4242, 1.0
      %v4803 = vadd.f32 %v4244, 1.0
      %v4804 = vadd.f32 %v4246, 1.0
      %v4805 = vadd.f32 %v4248, 1.0
      %v4806 = vadd.f32 %v4250, 1.0
      %v4807 = vadd.f32 %v4252, 1.0
      %v4808 = vadd.f32 %v4254, 1.0
      %v4809 = vadd.f32 %v4256, 1.0
      %v4810 = vadd.f32 %v4258, 1.0
      %v4811 = vadd.f32 %v4260, 1.0
      %v4812 = vadd.f32 %v4262, 1.0
      %v4813 = vadd.f32 %v4264, 1.0
      %v4814 = vadd.f32 %v4266, 1.0
      %v4815 = vadd.f32 %v4268, 1.0
      %v4816 = vadd.f32 %v4270, 1.0
      %v4817 = vadd.f32 %v4272, 1.0
      %v4818 = vadd.f32 %v4274, 1.0
      %v4819 = vadd.f32 %v4276, 1.0
      %v4820 = vadd.f32 %v4278, 1.0
      %v4821 = vadd.f32 %v4280, 1.0
      %v4822 = vadd.f32 %v4282, 1.0
      %v4823 = vadd.f32 %v4284, 1.0
      %v4824 = vadd.f32 %v4286, 1.0
      %v4825 = vadd.f32 %v4288, 1.0
      %v4826 = vadd.f32 %v4290, 1.0
      %v4827 = vadd.f32 %v4292, 1.0
      %v4828 = vadd.f32 %v4294, 1.0
      %v4829 = vadd.f32 %v4296, 1.0
      %v4830 = vadd.f32 %v4298, 1.0
      %v4831 = vadd.f32 %v4300, 1.0
      %v4832 = vadd.f32 %v4302, 1.0
      %v4833 = vadd.f32 %v4304, 1.0
      %v4834 = vadd.f32 %v4306, 1.0
      %v4835 = vadd.f32 %v4308, 1.0
      %v4836 = vadd.f32 %v4310, 1.0
      %v4837 = vadd.f32 %v4312, 1.0
      %v4838 = vadd.f32 %v4314, 1.0
      %v4839 = vadd.f32 %v4316, 1.0
      %v4840 = vadd.f32 %v4318, 1.0
      %v4841 = vadd.f32 %v4320, 1.0
      %v4842 = vadd.f32 %v4322, 1.0
      %v4843 = vadd.f32 %v4324, 1.0
      %v4844 = vadd.f32 %v4326, 1.0
      %v4845 = vadd.f32 %v4328, 1.0
      %v4846 = vadd.f32 %v4330, 1.0
      %v4847 = vadd.f32 %v4332, 1.0
      %v4848 = vadd.f32 %v4334, 1.0
      %v4849 = vadd.f32 %v4336, 1.0
      %v4850 = vadd.f32 %v4338, 1.0
      %v4851 = vrcp.pop %v4339
      %v4852 = vmul.f32 1.0, %v4851
      %v4853 = vrcp.pop %v4340
      %v4854 = vmul.f32 1.0, %v4853
      %v4855 = vrcp.pop %v4341
      %v4856 = vmul.f32 1.0, %v4855
      %v4857 = vrcp.pop %v4342
      %v4858 = vmul.f32 1.0, %v4857
      %v4859 = vrcp.pop %v4343
      %v4860 = vmul.f32 1.0, %v4859
      %v4861 = vrcp.pop %v4344
      %v4862 = vmul.f32 1.0, %v4861
      %v4863 = vrcp.pop %v4345
      %v4864 = vmul.f32 1.0, %v4863
      %v4865 = vrcp.pop %v4346
      %v4866 = vmul.f32 1.0, %v4865
      %v4867 = vrcp.pop %v4347
      %v4868 = vmul.f32 1.0, %v4867
      %v4869 = vrcp.pop %v4348
      %v4870 = vmul.f32 1.0, %v4869
      %v4871 = vrcp.pop %v4349
      %v4872 = vmul.f32 1.0, %v4871
      %v4873 = vrcp.pop %v4350
      %v4874 = vmul.f32 1.0, %v4873
      %v4875 = vrcp.pop %v4351
      %v4876 = vmul.f32 1.0, %v4875
      %v4877 = vrcp.pop %v4352
      %v4878 = vmul.f32 1.0, %v4877
      %v4879 = vrcp.pop %v4353
      %v4880 = vmul.f32 1.0, %v4879
      %v4881 = vrcp.pop %v4354
      %v4882 = vmul.f32 1.0, %v4881
      %v4883 = vrcp.pop %v4355
      %v4884 = vmul.f32 1.0, %v4883
      %v4885 = vrcp.pop %v4356
      %v4886 = vmul.f32 1.0, %v4885
      %v4887 = vrcp.pop %v4357
      %v4888 = vmul.f32 1.0, %v4887
      %v4889 = vrcp.pop %v4358
      %v4890 = vmul.f32 1.0, %v4889
      %v4891 = vrcp.pop %v4359
      %v4892 = vmul.f32 1.0, %v4891
      %v4893 = vrcp.pop %v4360
      %v4894 = vmul.f32 1.0, %v4893
      %v4895 = vrcp.pop %v4361
      %v4896 = vmul.f32 1.0, %v4895
      %v4897 = vrcp.pop %v4362
      %v4898 = vmul.f32 1.0, %v4897
      %v4899 = vrcp.pop %v4363
      %v4900 = vmul.f32 1.0, %v4899
      %v4901 = vrcp.pop %v4364
      %v4902 = vmul.f32 1.0, %v4901
      %v4903 = vrcp.pop %v4365
      %v4904 = vmul.f32 1.0, %v4903
      %v4905 = vrcp.pop %v4366
      %v4906 = vmul.f32 1.0, %v4905
      %v4907 = vrcp.pop %v4367
      %v4908 = vmul.f32 1.0, %v4907
      %v4909 = vrcp.pop %v4368
      %v4910 = vmul.f32 1.0, %v4909
      %v4911 = vrcp.pop %v4369
      %v4912 = vmul.f32 1.0, %v4911
      %v4913 = vrcp.pop %v4370
      %v4914 = vmul.f32 1.0, %v4913
      %v4915 = vrcp.pop %v4371
      %v4916 = vmul.f32 1.0, %v4915
      %v4917 = vrcp.pop %v4372
      %v4918 = vmul.f32 1.0, %v4917
      %v4919 = vrcp.pop %v4373
      %v4920 = vmul.f32 1.0, %v4919
      %v4921 = vrcp.pop %v4374
      %v4922 = vmul.f32 1.0, %v4921
      %v4923 = vrcp.pop %v4375
      %v4924 = vmul.f32 1.0, %v4923
      %v4925 = vrcp.pop %v4376
      %v4926 = vmul.f32 1.0, %v4925
      %v4927 = vrcp.pop %v4377
      %v4928 = vmul.f32 1.0, %v4927
      %v4929 = vrcp.pop %v4378
      %v4930 = vmul.f32 1.0, %v4929
      %v4931 = vrcp.pop %v4379
      %v4932 = vmul.f32 1.0, %v4931
      %v4933 = vrcp.pop %v4380
      %v4934 = vmul.f32 1.0, %v4933
      %v4935 = vrcp.pop %v4381
      %v4936 = vmul.f32 1.0, %v4935
      %v4937 = vrcp.pop %v4382
      %v4938 = vmul.f32 1.0, %v4937
      %v4939 = vrcp.pop %v4383
      %v4940 = vmul.f32 1.0, %v4939
      %v4941 = vrcp.pop %v4384
      %v4942 = vmul.f32 1.0, %v4941
      %v4943 = vrcp.pop %v4385
      %v4944 = vmul.f32 1.0, %v4943
      %v4945 = vrcp.pop %v4386
      %v4946 = vmul.f32 1.0, %v4945
      %v4947 = vrcp.pop %v4387
      %v4948 = vmul.f32 1.0, %v4947
      %v4949 = vrcp.pop %v4388
      %v4950 = vmul.f32 1.0, %v4949
      %v4951 = vrcp.pop %v4389
      %v4952 = vmul.f32 1.0, %v4951
      %v4953 = vrcp.pop %v4390
      %v4954 = vmul.f32 1.0, %v4953
      %v4955 = vrcp.pop %v4391
      %v4956 = vmul.f32 1.0, %v4955
      %v4957 = vrcp.pop %v4392
      %v4958 = vmul.f32 1.0, %v4957
      %v4959 = vrcp.pop %v4393
      %v4960 = vmul.f32 1.0, %v4959
      %v4961 = vrcp.pop %v4394
      %v4962 = vmul.f32 1.0, %v4961
      %v4963 = vrcp.pop %v4395
      %v4964 = vmul.f32 1.0, %v4963
      %v4965 = vrcp.pop %v4396
      %v4966 = vmul.f32 1.0, %v4965
      %v4967 = vrcp.pop %v4397
      %v4968 = vmul.f32 1.0, %v4967
      %v4969 = vrcp.pop %v4398
      %v4970 = vmul.f32 1.0, %v4969
      %v4971 = vrcp.pop %v4399
      %v4972 = vmul.f32 1.0, %v4971
      %v4973 = vrcp.pop %v4400
      %v4974 = vmul.f32 1.0, %v4973
      %v4975 = vrcp.pop %v4401
      %v4976 = vmul.f32 1.0, %v4975
      %v4977 = vrcp.pop %v4402
      %v4978 = vmul.f32 1.0, %v4977
      %v4979 = vrcp.pop %v4403
      %v4980 = vmul.f32 1.0, %v4979
      %v4981 = vrcp.pop %v4404
      %v4982 = vmul.f32 1.0, %v4981
      %v4983 = vrcp.pop %v4405
      %v4984 = vmul.f32 1.0, %v4983
      %v4985 = vrcp.pop %v4406
      %v4986 = vmul.f32 1.0, %v4985
      %v4987 = vrcp.pop %v4407
      %v4988 = vmul.f32 1.0, %v4987
      %v4989 = vrcp.pop %v4408
      %v4990 = vmul.f32 1.0, %v4989
      %v4991 = vrcp.pop %v4409
      %v4992 = vmul.f32 1.0, %v4991
      %v4993 = vrcp.pop %v4410
      %v4994 = vmul.f32 1.0, %v4993
      %v4995 = vrcp.pop %v4411
      %v4996 = vmul.f32 1.0, %v4995
      %v4997 = vrcp.pop %v4412
      %v4998 = vmul.f32 1.0, %v4997
      %v4999 = vrcp.pop %v4413
      %v5000 = vmul.f32 1.0, %v4999
      %v5001 = vrcp.pop %v4414
      %v5002 = vmul.f32 1.0, %v5001
      %v5003 = vrcp.pop %v4415
      %v5004 = vmul.f32 1.0, %v5003
      %v5005 = vrcp.pop %v4416
      %v5006 = vmul.f32 1.0, %v5005
      %v5007 = vrcp.pop %v4417
      %v5008 = vmul.f32 1.0, %v5007
      %v5009 = vrcp.pop %v4418
      %v5010 = vmul.f32 1.0, %v5009
      %v5011 = vrcp.pop %v4419
      %v5012 = vmul.f32 1.0, %v5011
      %v5013 = vrcp.pop %v4420
      %v5014 = vmul.f32 1.0, %v5013
      %v5015 = vrcp.pop %v4421
      %v5016 = vmul.f32 1.0, %v5015
      %v5017 = vrcp.pop %v4422
      %v5018 = vmul.f32 1.0, %v5017
      %v5019 = vrcp.pop %v4423
      %v5020 = vmul.f32 1.0, %v5019
      %v5021 = vrcp.pop %v4424
      %v5022 = vmul.f32 1.0, %v5021
      %v5023 = vrcp.pop %v4425
      %v5024 = vmul.f32 1.0, %v5023
      %v5025 = vrcp.pop %v4426
      %v5026 = vmul.f32 1.0, %v5025
      %v5027 = vrcp.pop %v4427
      %v5028 = vmul.f32 1.0, %v5027
      %v5029 = vrcp.pop %v4428
      %v5030 = vmul.f32 1.0, %v5029
      %v5031 = vrcp.pop %v4429
      %v5032 = vmul.f32 1.0, %v5031
      %v5033 = vrcp.pop %v4430
      %v5034 = vmul.f32 1.0, %v5033
      %v5035 = vrcp.pop %v4431
      %v5036 = vmul.f32 1.0, %v5035
      %v5037 = vrcp.pop %v4432
      %v5038 = vmul.f32 1.0, %v5037
      %v5039 = vrcp.pop %v4433
      %v5040 = vmul.f32 1.0, %v5039
      %v5041 = vrcp.pop %v4434
      %v5042 = vmul.f32 1.0, %v5041
      %v5043 = vrcp.pop %v4435
      %v5044 = vmul.f32 1.0, %v5043
      %v5045 = vrcp.pop %v4436
      %v5046 = vmul.f32 1.0, %v5045
      %v5047 = vrcp.pop %v4437
      %v5048 = vmul.f32 1.0, %v5047
      %v5049 = vrcp.pop %v4438
      %v5050 = vmul.f32 1.0, %v5049
      %v5051 = vrcp.pop %v4439
      %v5052 = vmul.f32 1.0, %v5051
      %v5053 = vrcp.pop %v4440
      %v5054 = vmul.f32 1.0, %v5053
      %v5055 = vrcp.pop %v4441
      %v5056 = vmul.f32 1.0, %v5055
      %v5057 = vrcp.pop %v4442
      %v5058 = vmul.f32 1.0, %v5057
      %v5059 = vrcp.pop %v4443
      %v5060 = vmul.f32 1.0, %v5059
      %v5061 = vrcp.pop %v4444
      %v5062 = vmul.f32 1.0, %v5061
      %v5063 = vrcp.pop %v4445
      %v5064 = vmul.f32 1.0, %v5063
      %v5065 = vrcp.pop %v4446
      %v5066 = vmul.f32 1.0, %v5065
      %v5067 = vrcp.pop %v4447
      %v5068 = vmul.f32 1.0, %v5067
      %v5069 = vrcp.pop %v4448
      %v5070 = vmul.f32 1.0, %v5069
      %v5071 = vrcp.pop %v4449
      %v5072 = vmul.f32 1.0, %v5071
      %v5073 = vrcp.pop %v4450
      %v5074 = vmul.f32 1.0, %v5073
      %v5075 = vrcp.pop %v4451
      %v5076 = vmul.f32 1.0, %v5075
      %v5077 = vrcp.pop %v4452
      %v5078 = vmul.f32 1.0, %v5077
      %v5079 = vrcp.pop %v4453
      %v5080 = vmul.f32 1.0, %v5079
      %v5081 = vrcp.pop %v4454
      %v5082 = vmul.f32 1.0, %v5081
      %v5083 = vrcp.pop %v4455
      %v5084 = vmul.f32 1.0, %v5083
      %v5085 = vrcp.pop %v4456
      %v5086 = vmul.f32 1.0, %v5085
      %v5087 = vrcp.pop %v4457
      %v5088 = vmul.f32 1.0, %v5087
      %v5089 = vrcp.pop %v4458
      %v5090 = vmul.f32 1.0, %v5089
      %v5091 = vrcp.pop %v4459
      %v5092 = vmul.f32 1.0, %v5091
      %v5093 = vrcp.pop %v4460
      %v5094 = vmul.f32 1.0, %v5093
      %v5095 = vrcp.pop %v4461
      %v5096 = vmul.f32 1.0, %v5095
      %v5097 = vrcp.pop %v4462
      %v5098 = vmul.f32 1.0, %v5097
      %v5099 = vrcp.pop %v4463
      %v5100 = vmul.f32 1.0, %v5099
      %v5101 = vrcp.pop %v4464
      %v5102 = vmul.f32 1.0, %v5101
      %v5103 = vrcp.pop %v4465
      %v5104 = vmul.f32 1.0, %v5103
      %v5105 = vrcp.pop %v4466
      %v5106 = vmul.f32 1.0, %v5105
      %v5107 = vrcp.pop %v4467
      %v5108 = vmul.f32 1.0, %v5107
      %v5109 = vrcp.pop %v4468
      %v5110 = vmul.f32 1.0, %v5109
      %v5111 = vrcp.pop %v4469
      %v5112 = vmul.f32 1.0, %v5111
      %v5113 = vrcp.pop %v4470
      %v5114 = vmul.f32 1.0, %v5113
      %v5115 = vrcp.pop %v4471
      %v5116 = vmul.f32 1.0, %v5115
      %v5117 = vrcp.pop %v4472
      %v5118 = vmul.f32 1.0, %v5117
      %v5119 = vrcp.pop %v4473
      %v5120 = vmul.f32 1.0, %v5119
      %v5121 = vrcp.pop %v4474
      %v5122 = vmul.f32 1.0, %v5121
      %v5123 = vrcp.pop %v4475
      %v5124 = vmul.f32 1.0, %v5123
      %v5125 = vrcp.pop %v4476
      %v5126 = vmul.f32 1.0, %v5125
      %v5127 = vrcp.pop %v4477
      %v5128 = vmul.f32 1.0, %v5127
      %v5129 = vrcp.pop %v4478
      %v5130 = vmul.f32 1.0, %v5129
      %v5131 = vrcp.pop %v4479
      %v5132 = vmul.f32 1.0, %v5131
      %v5133 = vrcp.pop %v4480
      %v5134 = vmul.f32 1.0, %v5133
      %v5135 = vrcp.pop %v4481
      %v5136 = vmul.f32 1.0, %v5135
      %v5137 = vrcp.pop %v4482
      %v5138 = vmul.f32 1.0, %v5137
      %v5139 = vrcp.pop %v4483
      %v5140 = vmul.f32 1.0, %v5139
      %v5141 = vrcp.pop %v4484
      %v5142 = vmul.f32 1.0, %v5141
      %v5143 = vrcp.pop %v4485
      %v5144 = vmul.f32 1.0, %v5143
      %v5145 = vrcp.pop %v4486
      %v5146 = vmul.f32 1.0, %v5145
      %v5147 = vrcp.pop %v4487
      %v5148 = vmul.f32 1.0, %v5147
      %v5149 = vrcp.pop %v4488
      %v5150 = vmul.f32 1.0, %v5149
      %v5151 = vrcp.pop %v4489
      %v5152 = vmul.f32 1.0, %v5151
      %v5153 = vrcp.pop %v4490
      %v5154 = vmul.f32 1.0, %v5153
      %v5155 = vrcp.pop %v4491
      %v5156 = vmul.f32 1.0, %v5155
      %v5157 = vrcp.pop %v4492
      %v5158 = vmul.f32 1.0, %v5157
      %v5159 = vrcp.pop %v4493
      %v5160 = vmul.f32 1.0, %v5159
      %v5161 = vrcp.pop %v4494
      %v5162 = vmul.f32 1.0, %v5161
      %v5163 = vrcp.pop %v4495
      %v5164 = vmul.f32 1.0, %v5163
      %v5165 = vrcp.pop %v4496
      %v5166 = vmul.f32 1.0, %v5165
      %v5167 = vrcp.pop %v4497
      %v5168 = vmul.f32 1.0, %v5167
      %v5169 = vrcp.pop %v4498
      %v5170 = vmul.f32 1.0, %v5169
      %v5171 = vrcp.pop %v4499
      %v5172 = vmul.f32 1.0, %v5171
      %v5173 = vrcp.pop %v4500
      %v5174 = vmul.f32 1.0, %v5173
      %v5175 = vrcp.pop %v4501
      %v5176 = vmul.f32 1.0, %v5175
      %v5177 = vrcp.pop %v4502
      %v5178 = vmul.f32 1.0, %v5177
      %v5179 = vrcp.pop %v4503
      %v5180 = vmul.f32 1.0, %v5179
      %v5181 = vrcp.pop %v4504
      %v5182 = vmul.f32 1.0, %v5181
      %v5183 = vrcp.pop %v4505
      %v5184 = vmul.f32 1.0, %v5183
      %v5185 = vrcp.pop %v4506
      %v5186 = vmul.f32 1.0, %v5185
      %v5187 = vrcp.pop %v4507
      %v5188 = vmul.f32 1.0, %v5187
      %v5189 = vrcp.pop %v4508
      %v5190 = vmul.f32 1.0, %v5189
      %v5191 = vrcp.pop %v4509
      %v5192 = vmul.f32 1.0, %v5191
      %v5193 = vrcp.pop %v4510
      %v5194 = vmul.f32 1.0, %v5193
      %v5195 = vrcp.pop %v4511
      %v5196 = vmul.f32 1.0, %v5195
      %v5197 = vrcp.pop %v4512
      %v5198 = vmul.f32 1.0, %v5197
      %v5199 = vrcp.pop %v4513
      %v5200 = vmul.f32 1.0, %v5199
      %v5201 = vrcp.pop %v4514
      %v5202 = vmul.f32 1.0, %v5201
      %v5203 = vrcp.pop %v4515
      %v5204 = vmul.f32 1.0, %v5203
      %v5205 = vrcp.pop %v4516
      %v5206 = vmul.f32 1.0, %v5205
      %v5207 = vrcp.pop %v4517
      %v5208 = vmul.f32 1.0, %v5207
      %v5209 = vrcp.pop %v4518
      %v5210 = vmul.f32 1.0, %v5209
      %v5211 = vrcp.pop %v4519
      %v5212 = vmul.f32 1.0, %v5211
      %v5213 = vrcp.pop %v4520
      %v5214 = vmul.f32 1.0, %v5213
      %v5215 = vrcp.pop %v4521
      %v5216 = vmul.f32 1.0, %v5215
      %v5217 = vrcp.pop %v4522
      %v5218 = vmul.f32 1.0, %v5217
      %v5219 = vrcp.pop %v4523
      %v5220 = vmul.f32 1.0, %v5219
      %v5221 = vrcp.pop %v4524
      %v5222 = vmul.f32 1.0, %v5221
      %v5223 = vrcp.pop %v4525
      %v5224 = vmul.f32 1.0, %v5223
      %v5225 = vrcp.pop %v4526
      %v5226 = vmul.f32 1.0, %v5225
      %v5227 = vrcp.pop %v4527
      %v5228 = vmul.f32 1.0, %v5227
      %v5229 = vrcp.pop %v4528
      %v5230 = vmul.f32 1.0, %v5229
      %v5231 = vrcp.pop %v4529
      %v5232 = vmul.f32 1.0, %v5231
      %v5233 = vrcp.pop %v4530
      %v5234 = vmul.f32 1.0, %v5233
      %v5235 = vrcp.pop %v4531
      %v5236 = vmul.f32 1.0, %v5235
      %v5237 = vrcp.pop %v4532
      %v5238 = vmul.f32 1.0, %v5237
      %v5239 = vrcp.pop %v4533
      %v5240 = vmul.f32 1.0, %v5239
      %v5241 = vrcp.pop %v4534
      %v5242 = vmul.f32 1.0, %v5241
      %v5243 = vrcp.pop %v4535
      %v5244 = vmul.f32 1.0, %v5243
      %v5245 = vrcp.pop %v4536
      %v5246 = vmul.f32 1.0, %v5245
      %v5247 = vrcp.pop %v4537
      %v5248 = vmul.f32 1.0, %v5247
      %v5249 = vrcp.pop %v4538
      %v5250 = vmul.f32 1.0, %v5249
      %v5251 = vrcp.pop %v4539
      %v5252 = vmul.f32 1.0, %v5251
      %v5253 = vrcp.pop %v4540
      %v5254 = vmul.f32 1.0, %v5253
      %v5255 = vrcp.pop %v4541
      %v5256 = vmul.f32 1.0, %v5255
      %v5257 = vrcp.pop %v4542
      %v5258 = vmul.f32 1.0, %v5257
      %v5259 = vrcp.pop %v4543
      %v5260 = vmul.f32 1.0, %v5259
      %v5261 = vrcp.pop %v4544
      %v5262 = vmul.f32 1.0, %v5261
      %v5263 = vrcp.pop %v4545
      %v5264 = vmul.f32 1.0, %v5263
      %v5265 = vrcp.pop %v4546
      %v5266 = vmul.f32 1.0, %v5265
      %v5267 = vrcp.pop %v4547
      %v5268 = vmul.f32 1.0, %v5267
      %v5269 = vrcp.pop %v4548
      %v5270 = vmul.f32 1.0, %v5269
      %v5271 = vrcp.pop %v4549
      %v5272 = vmul.f32 1.0, %v5271
      %v5273 = vrcp.pop %v4550
      %v5274 = vmul.f32 1.0, %v5273
      %v5275 = vrcp.pop %v4551
      %v5276 = vmul.f32 1.0, %v5275
      %v5277 = vrcp.pop %v4552
      %v5278 = vmul.f32 1.0, %v5277
      %v5279 = vrcp.pop %v4553
      %v5280 = vmul.f32 1.0, %v5279
      %v5281 = vrcp.pop %v4554
      %v5282 = vmul.f32 1.0, %v5281
      %v5283 = vrcp.pop %v4555
      %v5284 = vmul.f32 1.0, %v5283
      %v5285 = vrcp.pop %v4556
      %v5286 = vmul.f32 1.0, %v5285
      %v5287 = vrcp.pop %v4557
      %v5288 = vmul.f32 1.0, %v5287
      %v5289 = vrcp.pop %v4558
      %v5290 = vmul.f32 1.0, %v5289
      %v5291 = vrcp.pop %v4559
      %v5292 = vmul.f32 1.0, %v5291
      %v5293 = vrcp.pop %v4560
      %v5294 = vmul.f32 1.0, %v5293
      %v5295 = vrcp.pop %v4561
      %v5296 = vmul.f32 1.0, %v5295
      %v5297 = vrcp.pop %v4562
      %v5298 = vmul.f32 1.0, %v5297
      %v5299 = vrcp.pop %v4563
      %v5300 = vmul.f32 1.0, %v5299
      %v5301 = vrcp.pop %v4564
      %v5302 = vmul.f32 1.0, %v5301
      %v5303 = vrcp.pop %v4565
      %v5304 = vmul.f32 1.0, %v5303
      %v5305 = vrcp.pop %v4566
      %v5306 = vmul.f32 1.0, %v5305
      %v5307 = vrcp.pop %v4567
      %v5308 = vmul.f32 1.0, %v5307
      %v5309 = vrcp.pop %v4568
      %v5310 = vmul.f32 1.0, %v5309
      %v5311 = vrcp.pop %v4569
      %v5312 = vmul.f32 1.0, %v5311
      %v5313 = vrcp.pop %v4570
      %v5314 = vmul.f32 1.0, %v5313
      %v5315 = vrcp.pop %v4571
      %v5316 = vmul.f32 1.0, %v5315
      %v5317 = vrcp.pop %v4572
      %v5318 = vmul.f32 1.0, %v5317
      %v5319 = vrcp.pop %v4573
      %v5320 = vmul.f32 1.0, %v5319
      %v5321 = vrcp.pop %v4574
      %v5322 = vmul.f32 1.0, %v5321
      %v5323 = vrcp.pop %v4575
      %v5324 = vmul.f32 1.0, %v5323
      %v5325 = vrcp.pop %v4576
      %v5326 = vmul.f32 1.0, %v5325
      %v5327 = vrcp.pop %v4577
      %v5328 = vmul.f32 1.0, %v5327
      %v5329 = vrcp.pop %v4578
      %v5330 = vmul.f32 1.0, %v5329
      %v5331 = vrcp.pop %v4579
      %v5332 = vmul.f32 1.0, %v5331
      %v5333 = vrcp.pop %v4580
      %v5334 = vmul.f32 1.0, %v5333
      %v5335 = vrcp.pop %v4581
      %v5336 = vmul.f32 1.0, %v5335
      %v5337 = vrcp.pop %v4582
      %v5338 = vmul.f32 1.0, %v5337
      %v5339 = vrcp.pop %v4583
      %v5340 = vmul.f32 1.0, %v5339
      %v5341 = vrcp.pop %v4584
      %v5342 = vmul.f32 1.0, %v5341
      %v5343 = vrcp.pop %v4585
      %v5344 = vmul.f32 1.0, %v5343
      %v5345 = vrcp.pop %v4586
      %v5346 = vmul.f32 1.0, %v5345
      %v5347 = vrcp.pop %v4587
      %v5348 = vmul.f32 1.0, %v5347
      %v5349 = vrcp.pop %v4588
      %v5350 = vmul.f32 1.0, %v5349
      %v5351 = vrcp.pop %v4589
      %v5352 = vmul.f32 1.0, %v5351
      %v5353 = vrcp.pop %v4590
      %v5354 = vmul.f32 1.0, %v5353
      %v5355 = vrcp.pop %v4591
      %v5356 = vmul.f32 1.0, %v5355
      %v5357 = vrcp.pop %v4592
      %v5358 = vmul.f32 1.0, %v5357
      %v5359 = vrcp.pop %v4593
      %v5360 = vmul.f32 1.0, %v5359
      %v5361 = vrcp.pop %v4594
      %v5362 = vmul.f32 1.0, %v5361
      %v5363 = vrcp.pop %v4595
      %v5364 = vmul.f32 1.0, %v5363
      %v5365 = vrcp.pop %v4596
      %v5366 = vmul.f32 1.0, %v5365
      %v5367 = vrcp.pop %v4597
      %v5368 = vmul.f32 1.0, %v5367
      %v5369 = vrcp.pop %v4598
      %v5370 = vmul.f32 1.0, %v5369
      %v5371 = vrcp.pop %v4599
      %v5372 = vmul.f32 1.0, %v5371
      %v5373 = vrcp.pop %v4600
      %v5374 = vmul.f32 1.0, %v5373
      %v5375 = vrcp.pop %v4601
      %v5376 = vmul.f32 1.0, %v5375
      %v5377 = vrcp.pop %v4602
      %v5378 = vmul.f32 1.0, %v5377
      %v5379 = vrcp.pop %v4603
      %v5380 = vmul.f32 1.0, %v5379
      %v5381 = vrcp.pop %v4604
      %v5382 = vmul.f32 1.0, %v5381
      %v5383 = vrcp.pop %v4605
      %v5384 = vmul.f32 1.0, %v5383
      %v5385 = vrcp.pop %v4606
      %v5386 = vmul.f32 1.0, %v5385
      %v5387 = vrcp.pop %v4607
      %v5388 = vmul.f32 1.0, %v5387
      %v5389 = vrcp.pop %v4608
      %v5390 = vmul.f32 1.0, %v5389
      %v5391 = vrcp.pop %v4609
      %v5392 = vmul.f32 1.0, %v5391
      %v5393 = vrcp.pop %v4610
      %v5394 = vmul.f32 1.0, %v5393
      %v5395 = vrcp.pop %v4611
      %v5396 = vmul.f32 1.0, %v5395
      %v5397 = vrcp.pop %v4612
      %v5398 = vmul.f32 1.0, %v5397
      %v5399 = vrcp.pop %v4613
      %v5400 = vmul.f32 1.0, %v5399
      %v5401 = vrcp.pop %v4614
      %v5402 = vmul.f32 1.0, %v5401
      %v5403 = vrcp.pop %v4615
      %v5404 = vmul.f32 1.0, %v5403
      %v5405 = vrcp.pop %v4616
      %v5406 = vmul.f32 1.0, %v5405
      %v5407 = vrcp.pop %v4617
      %v5408 = vmul.f32 1.0, %v5407
      %v5409 = vrcp.pop %v4618
      %v5410 = vmul.f32 1.0, %v5409
      %v5411 = vrcp.pop %v4619
      %v5412 = vmul.f32 1.0, %v5411
      %v5413 = vrcp.pop %v4620
      %v5414 = vmul.f32 1.0, %v5413
      %v5415 = vrcp.pop %v4621
      %v5416 = vmul.f32 1.0, %v5415
      %v5417 = vrcp.pop %v4622
      %v5418 = vmul.f32 1.0, %v5417
      %v5419 = vrcp.pop %v4623
      %v5420 = vmul.f32 1.0, %v5419
      %v5421 = vrcp.pop %v4624
      %v5422 = vmul.f32 1.0, %v5421
      %v5423 = vrcp.pop %v4625
      %v5424 = vmul.f32 1.0, %v5423
      %v5425 = vrcp.pop %v4626
      %v5426 = vmul.f32 1.0, %v5425
      %v5427 = vrcp.pop %v4627
      %v5428 = vmul.f32 1.0, %v5427
      %v5429 = vrcp.pop %v4628
      %v5430 = vmul.f32 1.0, %v5429
      %v5431 = vrcp.pop %v4629
      %v5432 = vmul.f32 1.0, %v5431
      %v5433 = vrcp.pop %v4630
      %v5434 = vmul.f32 1.0, %v5433
      %v5435 = vrcp.pop %v4631
      %v5436 = vmul.f32 1.0, %v5435
      %v5437 = vrcp.pop %v4632
      %v5438 = vmul.f32 1.0, %v5437
      %v5439 = vrcp.pop %v4633
      %v5440 = vmul.f32 1.0, %v5439
      %v5441 = vrcp.pop %v4634
      %v5442 = vmul.f32 1.0, %v5441
      %v5443 = vrcp.pop %v4635
      %v5444 = vmul.f32 1.0, %v5443
      %v5445 = vrcp.pop %v4636
      %v5446 = vmul.f32 1.0, %v5445
      %v5447 = vrcp.pop %v4637
      %v5448 = vmul.f32 1.0, %v5447
      %v5449 = vrcp.pop %v4638
      %v5450 = vmul.f32 1.0, %v5449
      %v5451 = vrcp.pop %v4639
      %v5452 = vmul.f32 1.0, %v5451
      %v5453 = vrcp.pop %v4640
      %v5454 = vmul.f32 1.0, %v5453
      %v5455 = vrcp.pop %v4641
      %v5456 = vmul.f32 1.0, %v5455
      %v5457 = vrcp.pop %v4642
      %v5458 = vmul.f32 1.0, %v5457
      %v5459 = vrcp.pop %v4643
      %v5460 = vmul.f32 1.0, %v5459
      %v5461 = vrcp.pop %v4644
      %v5462 = vmul.f32 1.0, %v5461
      %v5463 = vrcp.pop %v4645
      %v5464 = vmul.f32 1.0, %v5463
      %v5465 = vrcp.pop %v4646
      %v5466 = vmul.f32 1.0, %v5465
      %v5467 = vrcp.pop %v4647
      %v5468 = vmul.f32 1.0, %v5467
      %v5469 = vrcp.pop %v4648
      %v5470 = vmul.f32 1.0, %v5469
      %v5471 = vrcp.pop %v4649
      %v5472 = vmul.f32 1.0, %v5471
      %v5473 = vrcp.pop %v4650
      %v5474 = vmul.f32 1.0, %v5473
      %v5475 = vrcp.pop %v4651
      %v5476 = vmul.f32 1.0, %v5475
      %v5477 = vrcp.pop %v4652
      %v5478 = vmul.f32 1.0, %v5477
      %v5479 = vrcp.pop %v4653
      %v5480 = vmul.f32 1.0, %v5479
      %v5481 = vrcp.pop %v4654
      %v5482 = vmul.f32 1.0, %v5481
      %v5483 = vrcp.pop %v4655
      %v5484 = vmul.f32 1.0, %v5483
      %v5485 = vrcp.pop %v4656
      %v5486 = vmul.f32 1.0, %v5485
      %v5487 = vrcp.pop %v4657
      %v5488 = vmul.f32 1.0, %v5487
      %v5489 = vrcp.pop %v4658
      %v5490 = vmul.f32 1.0, %v5489
      %v5491 = vrcp.pop %v4659
      %v5492 = vmul.f32 1.0, %v5491
      %v5493 = vrcp.pop %v4660
      %v5494 = vmul.f32 1.0, %v5493
      %v5495 = vrcp.pop %v4661
      %v5496 = vmul.f32 1.0, %v5495
      %v5497 = vrcp.pop %v4662
      %v5498 = vmul.f32 1.0, %v5497
      %v5499 = vrcp.pop %v4663
      %v5500 = vmul.f32 1.0, %v5499
      %v5501 = vrcp.pop %v4664
      %v5502 = vmul.f32 1.0, %v5501
      %v5503 = vrcp.pop %v4665
      %v5504 = vmul.f32 1.0, %v5503
      %v5505 = vrcp.pop %v4666
      %v5506 = vmul.f32 1.0, %v5505
      %v5507 = vrcp.pop %v4667
      %v5508 = vmul.f32 1.0, %v5507
      %v5509 = vrcp.pop %v4668
      %v5510 = vmul.f32 1.0, %v5509
      %v5511 = vrcp.pop %v4669
      %v5512 = vmul.f32 1.0, %v5511
      %v5513 = vrcp.pop %v4670
      %v5514 = vmul.f32 1.0, %v5513
      %v5515 = vrcp.pop %v4671
      %v5516 = vmul.f32 1.0, %v5515
      %v5517 = vrcp.pop %v4672
      %v5518 = vmul.f32 1.0, %v5517
      %v5519 = vrcp.pop %v4673
      %v5520 = vmul.f32 1.0, %v5519
      %v5521 = vrcp.pop %v4674
      %v5522 = vmul.f32 1.0, %v5521
      %v5523 = vrcp.pop %v4675
      %v5524 = vmul.f32 1.0, %v5523
      %v5525 = vrcp.pop %v4676
      %v5526 = vmul.f32 1.0, %v5525
      %v5527 = vrcp.pop %v4677
      %v5528 = vmul.f32 1.0, %v5527
      %v5529 = vrcp.pop %v4678
      %v5530 = vmul.f32 1.0, %v5529
      %v5531 = vrcp.pop %v4679
      %v5532 = vmul.f32 1.0, %v5531
      %v5533 = vrcp.pop %v4680
      %v5534 = vmul.f32 1.0, %v5533
      %v5535 = vrcp.pop %v4681
      %v5536 = vmul.f32 1.0, %v5535
      %v5537 = vrcp.pop %v4682
      %v5538 = vmul.f32 1.0, %v5537
      %v5539 = vrcp.pop %v4683
      %v5540 = vmul.f32 1.0, %v5539
      %v5541 = vrcp.pop %v4684
      %v5542 = vmul.f32 1.0, %v5541
      %v5543 = vrcp.pop %v4685
      %v5544 = vmul.f32 1.0, %v5543
      %v5545 = vrcp.pop %v4686
      %v5546 = vmul.f32 1.0, %v5545
      %v5547 = vrcp.pop %v4687
      %v5548 = vmul.f32 1.0, %v5547
      %v5549 = vrcp.pop %v4688
      %v5550 = vmul.f32 1.0, %v5549
      %v5551 = vrcp.pop %v4689
      %v5552 = vmul.f32 1.0, %v5551
      %v5553 = vrcp.pop %v4690
      %v5554 = vmul.f32 1.0, %v5553
      %v5555 = vrcp.pop %v4691
      %v5556 = vmul.f32 1.0, %v5555
      %v5557 = vrcp.pop %v4692
      %v5558 = vmul.f32 1.0, %v5557
      %v5559 = vrcp.pop %v4693
      %v5560 = vmul.f32 1.0, %v5559
      %v5561 = vrcp.pop %v4694
      %v5562 = vmul.f32 1.0, %v5561
      %v5563 = vrcp.pop %v4695
      %v5564 = vmul.f32 1.0, %v5563
      %v5565 = vrcp.pop %v4696
      %v5566 = vmul.f32 1.0, %v5565
      %v5567 = vrcp.pop %v4697
      %v5568 = vmul.f32 1.0, %v5567
      %v5569 = vrcp.pop %v4698
      %v5570 = vmul.f32 1.0, %v5569
      %v5571 = vrcp.pop %v4699
      %v5572 = vmul.f32 1.0, %v5571
      %v5573 = vrcp.pop %v4700
      %v5574 = vmul.f32 1.0, %v5573
      %v5575 = vrcp.pop %v4701
      %v5576 = vmul.f32 1.0, %v5575
      %v5577 = vrcp.pop %v4702
      %v5578 = vmul.f32 1.0, %v5577
      %v5579 = vrcp.pop %v4703
      %v5580 = vmul.f32 1.0, %v5579
      %v5581 = vrcp.pop %v4704
      %v5582 = vmul.f32 1.0, %v5581
      %v5583 = vrcp.pop %v4705
      %v5584 = vmul.f32 1.0, %v5583
      %v5585 = vrcp.pop %v4706
      %v5586 = vmul.f32 1.0, %v5585
      %v5587 = vrcp.pop %v4707
      %v5588 = vmul.f32 1.0, %v5587
      %v5589 = vrcp.pop %v4708
      %v5590 = vmul.f32 1.0, %v5589
      %v5591 = vrcp.pop %v4709
      %v5592 = vmul.f32 1.0, %v5591
      %v5593 = vrcp.pop %v4710
      %v5594 = vmul.f32 1.0, %v5593
      %v5595 = vrcp.pop %v4711
      %v5596 = vmul.f32 1.0, %v5595
      %v5597 = vrcp.pop %v4712
      %v5598 = vmul.f32 1.0, %v5597
      %v5599 = vrcp.pop %v4713
      %v5600 = vmul.f32 1.0, %v5599
      %v5601 = vrcp.pop %v4714
      %v5602 = vmul.f32 1.0, %v5601
      %v5603 = vrcp.pop %v4715
      %v5604 = vmul.f32 1.0, %v5603
      %v5605 = vrcp.pop %v4716
      %v5606 = vmul.f32 1.0, %v5605
      %v5607 = vrcp.pop %v4717
      %v5608 = vmul.f32 1.0, %v5607
      %v5609 = vrcp.pop %v4718
      %v5610 = vmul.f32 1.0, %v5609
      %v5611 = vrcp.pop %v4719
      %v5612 = vmul.f32 1.0, %v5611
      %v5613 = vrcp.pop %v4720
      %v5614 = vmul.f32 1.0, %v5613
      %v5615 = vrcp.pop %v4721
      %v5616 = vmul.f32 1.0, %v5615
      %v5617 = vrcp.pop %v4722
      %v5618 = vmul.f32 1.0, %v5617
      %v5619 = vrcp.pop %v4723
      %v5620 = vmul.f32 1.0, %v5619
      %v5621 = vrcp.pop %v4724
      %v5622 = vmul.f32 1.0, %v5621
      %v5623 = vrcp.pop %v4725
      %v5624 = vmul.f32 1.0, %v5623
      %v5625 = vrcp.pop %v4726
      %v5626 = vmul.f32 1.0, %v5625
      %v5627 = vrcp.pop %v4727
      %v5628 = vmul.f32 1.0, %v5627
      %v5629 = vrcp.pop %v4728
      %v5630 = vmul.f32 1.0, %v5629
      %v5631 = vrcp.pop %v4729
      %v5632 = vmul.f32 1.0, %v5631
      %v5633 = vrcp.pop %v4730
      %v5634 = vmul.f32 1.0, %v5633
      %v5635 = vrcp.pop %v4731
      %v5636 = vmul.f32 1.0, %v5635
      %v5637 = vrcp.pop %v4732
      %v5638 = vmul.f32 1.0, %v5637
      %v5639 = vrcp.pop %v4733
      %v5640 = vmul.f32 1.0, %v5639
      %v5641 = vrcp.pop %v4734
      %v5642 = vmul.f32 1.0, %v5641
      %v5643 = vrcp.pop %v4735
      %v5644 = vmul.f32 1.0, %v5643
      %v5645 = vrcp.pop %v4736
      %v5646 = vmul.f32 1.0, %v5645
      %v5647 = vrcp.pop %v4737
      %v5648 = vmul.f32 1.0, %v5647
      %v5649 = vrcp.pop %v4738
      %v5650 = vmul.f32 1.0, %v5649
      %v5651 = vrcp.pop %v4739
      %v5652 = vmul.f32 1.0, %v5651
      %v5653 = vrcp.pop %v4740
      %v5654 = vmul.f32 1.0, %v5653
      %v5655 = vrcp.pop %v4741
      %v5656 = vmul.f32 1.0, %v5655
      %v5657 = vrcp.pop %v4742
      %v5658 = vmul.f32 1.0, %v5657
      %v5659 = vrcp.pop %v4743
      %v5660 = vmul.f32 1.0, %v5659
      %v5661 = vrcp.pop %v4744
      %v5662 = vmul.f32 1.0, %v5661
      %v5663 = vrcp.pop %v4745
      %v5664 = vmul.f32 1.0, %v5663
      %v5665 = vrcp.pop %v4746
      %v5666 = vmul.f32 1.0, %v5665
      %v5667 = vrcp.pop %v4747
      %v5668 = vmul.f32 1.0, %v5667
      %v5669 = vrcp.pop %v4748
      %v5670 = vmul.f32 1.0, %v5669
      %v5671 = vrcp.pop %v4749
      %v5672 = vmul.f32 1.0, %v5671
      %v5673 = vrcp.pop %v4750
      %v5674 = vmul.f32 1.0, %v5673
      %v5675 = vrcp.pop %v4751
      %v5676 = vmul.f32 1.0, %v5675
      %v5677 = vrcp.pop %v4752
      %v5678 = vmul.f32 1.0, %v5677
      %v5679 = vrcp.pop %v4753
      %v5680 = vmul.f32 1.0, %v5679
      %v5681 = vrcp.pop %v4754
      %v5682 = vmul.f32 1.0, %v5681
      %v5683 = vrcp.pop %v4755
      %v5684 = vmul.f32 1.0, %v5683
      %v5685 = vrcp.pop %v4756
      %v5686 = vmul.f32 1.0, %v5685
      %v5687 = vrcp.pop %v4757
      %v5688 = vmul.f32 1.0, %v5687
      %v5689 = vrcp.pop %v4758
      %v5690 = vmul.f32 1.0, %v5689
      %v5691 = vrcp.pop %v4759
      %v5692 = vmul.f32 1.0, %v5691
      %v5693 = vrcp.pop %v4760
      %v5694 = vmul.f32 1.0, %v5693
      %v5695 = vrcp.pop %v4761
      %v5696 = vmul.f32 1.0, %v5695
      %v5697 = vrcp.pop %v4762
      %v5698 = vmul.f32 1.0, %v5697
      %v5699 = vrcp.pop %v4763
      %v5700 = vmul.f32 1.0, %v5699
      %v5701 = vrcp.pop %v4764
      %v5702 = vmul.f32 1.0, %v5701
      %v5703 = vrcp.pop %v4765
      %v5704 = vmul.f32 1.0, %v5703
      %v5705 = vrcp.pop %v4766
      %v5706 = vmul.f32 1.0, %v5705
      %v5707 = vrcp.pop %v4767
      %v5708 = vmul.f32 1.0, %v5707
      %v5709 = vrcp.pop %v4768
      %v5710 = vmul.f32 1.0, %v5709
      %v5711 = vrcp.pop %v4769
      %v5712 = vmul.f32 1.0, %v5711
      %v5713 = vrcp.pop %v4770
      %v5714 = vmul.f32 1.0, %v5713
      %v5715 = vrcp.pop %v4771
      %v5716 = vmul.f32 1.0, %v5715
      %v5717 = vrcp.pop %v4772
      %v5718 = vmul.f32 1.0, %v5717
      %v5719 = vrcp.pop %v4773
      %v5720 = vmul.f32 1.0, %v5719
      %v5721 = vrcp.pop %v4774
      %v5722 = vmul.f32 1.0, %v5721
      %v5723 = vrcp.pop %v4775
      %v5724 = vmul.f32 1.0, %v5723
      %v5725 = vrcp.pop %v4776
      %v5726 = vmul.f32 1.0, %v5725
      %v5727 = vrcp.pop %v4777
      %v5728 = vmul.f32 1.0, %v5727
      %v5729 = vrcp.pop %v4778
      %v5730 = vmul.f32 1.0, %v5729
      %v5731 = vrcp.pop %v4779
      %v5732 = vmul.f32 1.0, %v5731
      %v5733 = vrcp.pop %v4780
      %v5734 = vmul.f32 1.0, %v5733
      %v5735 = vrcp.pop %v4781
      %v5736 = vmul.f32 1.0, %v5735
      %v5737 = vrcp.pop %v4782
      %v5738 = vmul.f32 1.0, %v5737
      %v5739 = vrcp.pop %v4783
      %v5740 = vmul.f32 1.0, %v5739
      %v5741 = vrcp.pop %v4784
      %v5742 = vmul.f32 1.0, %v5741
      %v5743 = vrcp.pop %v4785
      %v5744 = vmul.f32 1.0, %v5743
      %v5745 = vrcp.pop %v4786
      %v5746 = vmul.f32 1.0, %v5745
      %v5747 = vrcp.pop %v4787
      %v5748 = vmul.f32 1.0, %v5747
      %v5749 = vrcp.pop %v4788
      %v5750 = vmul.f32 1.0, %v5749
      %v5751 = vrcp.pop %v4789
      %v5752 = vmul.f32 1.0, %v5751
      %v5753 = vrcp.pop %v4790
      %v5754 = vmul.f32 1.0, %v5753
      %v5755 = vrcp.pop %v4791
      %v5756 = vmul.f32 1.0, %v5755
      %v5757 = vrcp.pop %v4792
      %v5758 = vmul.f32 1.0, %v5757
      %v5759 = vrcp.pop %v4793
      %v5760 = vmul.f32 1.0, %v5759
      %v5761 = vrcp.pop %v4794
      %v5762 = vmul.f32 1.0, %v5761
      %v5763 = vrcp.pop %v4795
      %v5764 = vmul.f32 1.0, %v5763
      %v5765 = vrcp.pop %v4796
      %v5766 = vmul.f32 1.0, %v5765
      %v5767 = vrcp.pop %v4797
      %v5768 = vmul.f32 1.0, %v5767
      %v5769 = vrcp.pop %v4798
      %v5770 = vmul.f32 1.0, %v5769
      %v5771 = vrcp.pop %v4799
      %v5772 = vmul.f32 1.0, %v5771
      %v5773 = vrcp.pop %v4800
      %v5774 = vmul.f32 1.0, %v5773
      %v5775 = vrcp.pop %v4801
      %v5776 = vmul.f32 1.0, %v5775
      %v5777 = vrcp.pop %v4802
      %v5778 = vmul.f32 1.0, %v5777
      %v5779 = vrcp.pop %v4803
      %v5780 = vmul.f32 1.0, %v5779
      %v5781 = vrcp.pop %v4804
      %v5782 = vmul.f32 1.0, %v5781
      %v5783 = vrcp.pop %v4805
      %v5784 = vmul.f32 1.0, %v5783
      %v5785 = vrcp.pop %v4806
      %v5786 = vmul.f32 1.0, %v5785
      %v5787 = vrcp.pop %v4807
      %v5788 = vmul.f32 1.0, %v5787
      %v5789 = vrcp.pop %v4808
      %v5790 = vmul.f32 1.0, %v5789
      %v5791 = vrcp.pop %v4809
      %v5792 = vmul.f32 1.0, %v5791
      %v5793 = vrcp.pop %v4810
      %v5794 = vmul.f32 1.0, %v5793
      %v5795 = vrcp.pop %v4811
      %v5796 = vmul.f32 1.0, %v5795
      %v5797 = vrcp.pop %v4812
      %v5798 = vmul.f32 1.0, %v5797
      %v5799 = vrcp.pop %v4813
      %v5800 = vmul.f32 1.0, %v5799
      %v5801 = vrcp.pop %v4814
      %v5802 = vmul.f32 1.0, %v5801
      %v5803 = vrcp.pop %v4815
      %v5804 = vmul.f32 1.0, %v5803
      %v5805 = vrcp.pop %v4816
      %v5806 = vmul.f32 1.0, %v5805
      %v5807 = vrcp.pop %v4817
      %v5808 = vmul.f32 1.0, %v5807
      %v5809 = vrcp.pop %v4818
      %v5810 = vmul.f32 1.0, %v5809
      %v5811 = vrcp.pop %v4819
      %v5812 = vmul.f32 1.0, %v5811
      %v5813 = vrcp.pop %v4820
      %v5814 = vmul.f32 1.0, %v5813
      %v5815 = vrcp.pop %v4821
      %v5816 = vmul.f32 1.0, %v5815
      %v5817 = vrcp.pop %v4822
      %v5818 = vmul.f32 1.0, %v5817
      %v5819 = vrcp.pop %v4823
      %v5820 = vmul.f32 1.0, %v5819
      %v5821 = vrcp.pop %v4824
      %v5822 = vmul.f32 1.0, %v5821
      %v5823 = vrcp.pop %v4825
      %v5824 = vmul.f32 1.0, %v5823
      %v5825 = vrcp.pop %v4826
      %v5826 = vmul.f32 1.0, %v5825
      %v5827 = vrcp.pop %v4827
      %v5828 = vmul.f32 1.0, %v5827
      %v5829 = vrcp.pop %v4828
      %v5830 = vmul.f32 1.0, %v5829
      %v5831 = vrcp.pop %v4829
      %v5832 = vmul.f32 1.0, %v5831
      %v5833 = vrcp.pop %v4830
      %v5834 = vmul.f32 1.0, %v5833
      %v5835 = vrcp.pop %v4831
      %v5836 = vmul.f32 1.0, %v5835
      %v5837 = vrcp.pop %v4832
      %v5838 = vmul.f32 1.0, %v5837
      %v5839 = vrcp.pop %v4833
      %v5840 = vmul.f32 1.0, %v5839
      %v5841 = vrcp.pop %v4834
      %v5842 = vmul.f32 1.0, %v5841
      %v5843 = vrcp.pop %v4835
      %v5844 = vmul.f32 1.0, %v5843
      %v5845 = vrcp.pop %v4836
      %v5846 = vmul.f32 1.0, %v5845
      %v5847 = vrcp.pop %v4837
      %v5848 = vmul.f32 1.0, %v5847
      %v5849 = vrcp.pop %v4838
      %v5850 = vmul.f32 1.0, %v5849
      %v5851 = vrcp.pop %v4839
      %v5852 = vmul.f32 1.0, %v5851
      %v5853 = vrcp.pop %v4840
      %v5854 = vmul.f32 1.0, %v5853
      %v5855 = vrcp.pop %v4841
      %v5856 = vmul.f32 1.0, %v5855
      %v5857 = vrcp.pop %v4842
      %v5858 = vmul.f32 1.0, %v5857
      %v5859 = vrcp.pop %v4843
      %v5860 = vmul.f32 1.0, %v5859
      %v5861 = vrcp.pop %v4844
      %v5862 = vmul.f32 1.0, %v5861
      %v5863 = vrcp.pop %v4845
      %v5864 = vmul.f32 1.0, %v5863
      %v5865 = vrcp.pop %v4846
      %v5866 = vmul.f32 1.0, %v5865
      %v5867 = vrcp.pop %v4847
      %v5868 = vmul.f32 1.0, %v5867
      %v5869 = vrcp.pop %v4848
      %v5870 = vmul.f32 1.0, %v5869
      %v5871 = vrcp.pop %v4849
      %v5872 = vmul.f32 1.0, %v5871
      %v5873 = vrcp.pop %v4850
      %v5874 = vmul.f32 1.0, %v5873
      %v5875 = vmul.f32 %v1426, %v4852
      %v5876 = vmul.f32 %v1428, %v4854
      %v5877 = vmul.f32 %v1779, %v4856
      %v5878 = vmul.f32 %v1781, %v4858
      %v5879 = vmul.f32 %v2132, %v4860
      %v5880 = vmul.f32 %v2134, %v4862
      %v5881 = vmul.f32 %v2485, %v4864
      %v5882 = vmul.f32 %v2487, %v4866
      %v5883 = vmul.f32 %v1430, %v4868
      %v5884 = vmul.f32 %v1432, %v4870
      %v5885 = vmul.f32 %v1783, %v4872
      %v5886 = vmul.f32 %v1785, %v4874
      %v5887 = vmul.f32 %v2136, %v4876
      %v5888 = vmul.f32 %v2138, %v4878
      %v5889 = vmul.f32 %v2489, %v4880
      %v5890 = vmul.f32 %v2491, %v4882
      %v5891 = vmul.f32 %v1436, %v4884
      %v5892 = vmul.f32 %v1438, %v4886
      %v5893 = vmul.f32 %v1789, %v4888
      %v5894 = vmul.f32 %v1791, %v4890
      %v5895 = vmul.f32 %v2142, %v4892
      %v5896 = vmul.f32 %v2144, %v4894
      %v5897 = vmul.f32 %v2495, %v4896
      %v5898 = vmul.f32 %v2497, %v4898
      %v5899 = vmul.f32 %v1440, %v4900
      %v5900 = vmul.f32 %v1442, %v4902
      %v5901 = vmul.f32 %v1793, %v4904
      %v5902 = vmul.f32 %v1795, %v4906
      %v5903 = vmul.f32 %v2146, %v4908
      %v5904 = vmul.f32 %v2148, %v4910
      %v5905 = vmul.f32 %v2499, %v4912
      %v5906 = vmul.f32 %v2501, %v4914
      %v5907 = vmul.f32 %v1446, %v4916
      %v5908 = vmul.f32 %v1448, %v4918
      %v5909 = vmul.f32 %v1799, %v4920
      %v5910 = vmul.f32 %v1801, %v4922
      %v5911 = vmul.f32 %v2152, %v4924
      %v5912 = vmul.f32 %v2154, %v4926
      %v5913 = vmul.f32 %v2505, %v4928
      %v5914 = vmul.f32 %v2507, %v4930
      %v5915 = vmul.f32 %v1450, %v4932
      %v5916 = vmul.f32 %v1452, %v4934
      %v5917 = vmul.f32 %v1803, %v4936
      %v5918 = vmul.f32 %v1805, %v4938
      %v5919 = vmul.f32 %v2156, %v4940
      %v5920 = vmul.f32 %v2158, %v4942
      %v5921 = vmul.f32 %v2509, %v4944
      %v5922 = vmul.f32 %v2511, %v4946
      %v5923 = vmul.f32 %v1456, %v4948
      %v5924 = vmul.f32 %v1458, %v4950
      %v5925 = vmul.f32 %v1809, %v4952
      %v5926 = vmul.f32 %v1811, %v4954
      %v5927 = vmul.f32 %v2162, %v4956
      %v5928 = vmul.f32 %v2164, %v4958
      %v5929 = vmul.f32 %v2515, %v4960
      %v5930 = vmul.f32 %v2517, %v4962
      %v5931 = vmul.f32 %v1460, %v4964
      %v5932 = vmul.f32 %v1462, %v4966
      %v5933 = vmul.f32 %v1813, %v4968
      %v5934 = vmul.f32 %v1815, %v4970
      %v5935 = vmul.f32 %v2166, %v4972
      %v5936 = vmul.f32 %v2168, %v4974
      %v5937 = vmul.f32 %v2519, %v4976
      %v5938 = vmul.f32 %v2521, %v4978
      %v5939 = vmul.f32 %v1466, %v4980
      %v5940 = vmul.f32 %v1468, %v4982
      %v5941 = vmul.f32 %v1819, %v4984
      %v5942 = vmul.f32 %v1821, %v4986
      %v5943 = vmul.f32 %v2172, %v4988
      %v5944 = vmul.f32 %v2174, %v4990
      %v5945 = vmul.f32 %v2525, %v4992
      %v5946 = vmul.f32 %v2527, %v4994
      %v5947 = vmul.f32 %v1470, %v4996
      %v5948 = vmul.f32 %v1472, %v4998
      %v5949 = vmul.f32 %v1823, %v5000
      %v5950 = vmul.f32 %v1825, %v5002
      %v5951 = vmul.f32 %v2176, %v5004
      %v5952 = vmul.f32 %v2178, %v5006
      %v5953 = vmul.f32 %v2529, %v5008
      %v5954 = vmul.f32 %v2531, %v5010
      %v5955 = vmul.f32 %v1476, %v5012
      %v5956 = vmul.f32 %v1478, %v5014
      %v5957 = vmul.f32 %v1829, %v5016
      %v5958 = vmul.f32 %v1831, %v5018
      %v5959 = vmul.f32 %v2182, %v5020
      %v5960 = vmul.f32 %v2184, %v5022
      %v5961 = vmul.f32 %v2535, %v5024
      %v5962 = vmul.f32 %v2537, %v5026
      %v5963 = vmul.f32 %v1480, %v5028
      %v5964 = vmul.f32 %v1482, %v5030
      %v5965 = vmul.f32 %v1833, %v5032
      %v5966 = vmul.f32 %v1835, %v5034
      %v5967 = vmul.f32 %v2186, %v5036
      %v5968 = vmul.f32 %v2188, %v5038
      %v5969 = vmul.f32 %v2539, %v5040
      %v5970 = vmul.f32 %v2541, %v5042
      %v5971 = vmul.f32 %v1486, %v5044
      %v5972 = vmul.f32 %v1488, %v5046
      %v5973 = vmul.f32 %v1839, %v5048
      %v5974 = vmul.f32 %v1841, %v5050
      %v5975 = vmul.f32 %v2192, %v5052
      %v5976 = vmul.f32 %v2194, %v5054
      %v5977 = vmul.f32 %v2545, %v5056
      %v5978 = vmul.f32 %v2547, %v5058
      %v5979 = vmul.f32 %v1490, %v5060
      %v5980 = vmul.f32 %v1492, %v5062
      %v5981 = vmul.f32 %v1843, %v5064
      %v5982 = vmul.f32 %v1845, %v5066
      %v5983 = vmul.f32 %v2196, %v5068
      %v5984 = vmul.f32 %v2198, %v5070
      %v5985 = vmul.f32 %v2549, %v5072
      %v5986 = vmul.f32 %v2551, %v5074
      %v5987 = vmul.f32 %v1496, %v5076
      %v5988 = vmul.f32 %v1498, %v5078
      %v5989 = vmul.f32 %v1849, %v5080
      %v5990 = vmul.f32 %v1851, %v5082
      %v5991 = vmul.f32 %v2202, %v5084
      %v5992 = vmul.f32 %v2204, %v5086
      %v5993 = vmul.f32 %v2555, %v5088
      %v5994 = vmul.f32 %v2557, %v5090
      %v5995 = vmul.f32 %v1500, %v5092
      %v5996 = vmul.f32 %v1502, %v5094
      %v5997 = vmul.f32 %v1853, %v5096
      %v5998 = vmul.f32 %v1855, %v5098
      %v5999 = vmul.f32 %v2206, %v5100
      %v6000 = vmul.f32 %v2208, %v5102
      %v6001 = vmul.f32 %v2559, %v5104
      %v6002 = vmul.f32 %v2561, %v5106
      %v6003 = vmul.f32 %v1506, %v5108
      %v6004 = vmul.f32 %v1508, %v5110
      %v6005 = vmul.f32 %v1859, %v5112
      %v6006 = vmul.f32 %v1861, %v5114
      %v6007 = vmul.f32 %v2212, %v5116
      %v6008 = vmul.f32 %v2214, %v5118
      %v6009 = vmul.f32 %v2565, %v5120
      %v6010 = vmul.f32 %v2567, %v5122
      %v6011 = vmul.f32 %v1510, %v5124
      %v6012 = vmul.f32 %v1512, %v5126
      %v6013 = vmul.f32 %v1863, %v5128
      %v6014 = vmul.f32 %v1865, %v5130
      %v6015 = vmul.f32 %v2216, %v5132
      %v6016 = vmul.f32 %v2218, %v5134
      %v6017 = vmul.f32 %v2569, %v5136
      %v6018 = vmul.f32 %v2571, %v5138
      %v6019 = vmul.f32 %v1516, %v5140
      %v6020 = vmul.f32 %v1518, %v5142
      %v6021 = vmul.f32 %v1869, %v5144
      %v6022 = vmul.f32 %v1871, %v5146
      %v6023 = vmul.f32 %v2222, %v5148
      %v6024 = vmul.f32 %v2224, %v5150
      %v6025 = vmul.f32 %v2575, %v5152
      %v6026 = vmul.f32 %v2577, %v5154
      %v6027 = vmul.f32 %v1520, %v5156
      %v6028 = vmul.f32 %v1522, %v5158
      %v6029 = vmul.f32 %v1873, %v5160
      %v6030 = vmul.f32 %v1875, %v5162
      %v6031 = vmul.f32 %v2226, %v5164
      %v6032 = vmul.f32 %v2228, %v5166
      %v6033 = vmul.f32 %v2579, %v5168
      %v6034 = vmul.f32 %v2581, %v5170
      %v6035 = vmul.f32 %v1526, %v5172
      %v6036 = vmul.f32 %v1528, %v5174
      %v6037 = vmul.f32 %v1879, %v5176
      %v6038 = vmul.f32 %v1881, %v5178
      %v6039 = vmul.f32 %v2232, %v5180
      %v6040 = vmul.f32 %v2234, %v5182
      %v6041 = vmul.f32 %v2585, %v5184
      %v6042 = vmul.f32 %v2587, %v5186
      %v6043 = vmul.f32 %v1530, %v5188
      %v6044 = vmul.f32 %v1532, %v5190
      %v6045 = vmul.f32 %v1883, %v5192
      %v6046 = vmul.f32 %v1885, %v5194
      %v6047 = vmul.f32 %v2236, %v5196
      %v6048 = vmul.f32 %v2238, %v5198
      %v6049 = vmul.f32 %v2589, %v5200
      %v6050 = vmul.f32 %v2591, %v5202
      %v6051 = vmul.f32 %v1536, %v5204
      %v6052 = vmul.f32 %v1538, %v5206
      %v6053 = vmul.f32 %v1889, %v5208
      %v6054 = vmul.f32 %v1891, %v5210
      %v6055 = vmul.f32 %v2242, %v5212
      %v6056 = vmul.f32 %v2244, %v5214
      %v6057 = vmul.f32 %v2595, %v5216
      %v6058 = vmul.f32 %v2597, %v5218
      %v6059 = vmul.f32 %v1540, %v5220
      %v6060 = vmul.f32 %v1542, %v5222
      %v6061 = vmul.f32 %v1893, %v5224
      %v6062 = vmul.f32 %v1895, %v5226
      %v6063 = vmul.f32 %v2246, %v5228
      %v6064 = vmul.f32 %v2248, %v5230
      %v6065 = vmul.f32 %v2599, %v5232
      %v6066 = vmul.f32 %v2601, %v5234
      %v6067 = vmul.f32 %v1546, %v5236
      %v6068 = vmul.f32 %v1548, %v5238
      %v6069 = vmul.f32 %v1899, %v5240
      %v6070 = vmul.f32 %v1901, %v5242
      %v6071 = vmul.f32 %v2252, %v5244
      %v6072 = vmul.f32 %v2254, %v5246
      %v6073 = vmul.f32 %v2605, %v5248
      %v6074 = vmul.f32 %v2607, %v5250
      %v6075 = vmul.f32 %v1550, %v5252
      %v6076 = vmul.f32 %v1552, %v5254
      %v6077 = vmul.f32 %v1903, %v5256
      %v6078 = vmul.f32 %v1905, %v5258
      %v6079 = vmul.f32 %v2256, %v5260
      %v6080 = vmul.f32 %v2258, %v5262
      %v6081 = vmul.f32 %v2609, %v5264
      %v6082 = vmul.f32 %v2611, %v5266
      %v6083 = vmul.f32 %v1556, %v5268
      %v6084 = vmul.f32 %v1558, %v5270
      %v6085 = vmul.f32 %v1909, %v5272
      %v6086 = vmul.f32 %v1911, %v5274
      %v6087 = vmul.f32 %v2262, %v5276
      %v6088 = vmul.f32 %v2264, %v5278
      %v6089 = vmul.f32 %v2615, %v5280
      %v6090 = vmul.f32 %v2617, %v5282
      %v6091 = vmul.f32 %v1560, %v5284
      %v6092 = vmul.f32 %v1562, %v5286
      %v6093 = vmul.f32 %v1913, %v5288
      %v6094 = vmul.f32 %v1915, %v5290
      %v6095 = vmul.f32 %v2266, %v5292
      %v6096 = vmul.f32 %v2268, %v5294
      %v6097 = vmul.f32 %v2619, %v5296
      %v6098 = vmul.f32 %v2621, %v5298
      %v6099 = vmul.f32 %v1566, %v5300
      %v6100 = vmul.f32 %v1568, %v5302
      %v6101 = vmul.f32 %v1919, %v5304
      %v6102 = vmul.f32 %v1921, %v5306
      %v6103 = vmul.f32 %v2272, %v5308
      %v6104 = vmul.f32 %v2274, %v5310
      %v6105 = vmul.f32 %v2625, %v5312
      %v6106 = vmul.f32 %v2627, %v5314
      %v6107 = vmul.f32 %v1570, %v5316
      %v6108 = vmul.f32 %v1572, %v5318
      %v6109 = vmul.f32 %v1923, %v5320
      %v6110 = vmul.f32 %v1925, %v5322
      %v6111 = vmul.f32 %v2276, %v5324
      %v6112 = vmul.f32 %v2278, %v5326
      %v6113 = vmul.f32 %v2629, %v5328
      %v6114 = vmul.f32 %v2631, %v5330
      %v6115 = vmul.f32 %v1576, %v5332
      %v6116 = vmul.f32 %v1578, %v5334
      %v6117 = vmul.f32 %v1929, %v5336
      %v6118 = vmul.f32 %v1931, %v5338
      %v6119 = vmul.f32 %v2282, %v5340
      %v6120 = vmul.f32 %v2284, %v5342
      %v6121 = vmul.f32 %v2635, %v5344
      %v6122 = vmul.f32 %v2637, %v5346
      %v6123 = vmul.f32 %v1580, %v5348
      %v6124 = vmul.f32 %v1582, %v5350
      %v6125 = vmul.f32 %v1933, %v5352
      %v6126 = vmul.f32 %v1935, %v5354
      %v6127 = vmul.f32 %v2286, %v5356
      %v6128 = vmul.f32 %v2288, %v5358
      %v6129 = vmul.f32 %v2639, %v5360
      %v6130 = vmul.f32 %v2641, %v5362
      %v6131 = vmul.f32 %v1586, %v5364
      %v6132 = vmul.f32 %v1588, %v5366
      %v6133 = vmul.f32 %v1939, %v5368
      %v6134 = vmul.f32 %v1941, %v5370
      %v6135 = vmul.f32 %v2292, %v5372
      %v6136 = vmul.f32 %v2294, %v5374
      %v6137 = vmul.f32 %v2645, %v5376
      %v6138 = vmul.f32 %v2647, %v5378
      %v6139 = vmul.f32 %v1590, %v5380
      %v6140 = vmul.f32 %v1592, %v5382
      %v6141 = vmul.f32 %v1943, %v5384
      %v6142 = vmul.f32 %v1945, %v5386
      %v6143 = vmul.f32 %v2296, %v5388
      %v6144 = vmul.f32 %v2298, %v5390
      %v6145 = vmul.f32 %v2649, %v5392
      %v6146 = vmul.f32 %v2651, %v5394
      %v6147 = vmul.f32 %v1596, %v5396
      %v6148 = vmul.f32 %v1598, %v5398
      %v6149 = vmul.f32 %v1949, %v5400
      %v6150 = vmul.f32 %v1951, %v5402
      %v6151 = vmul.f32 %v2302, %v5404
      %v6152 = vmul.f32 %v2304, %v5406
      %v6153 = vmul.f32 %v2655, %v5408
      %v6154 = vmul.f32 %v2657, %v5410
      %v6155 = vmul.f32 %v1600, %v5412
      %v6156 = vmul.f32 %v1602, %v5414
      %v6157 = vmul.f32 %v1953, %v5416
      %v6158 = vmul.f32 %v1955, %v5418
      %v6159 = vmul.f32 %v2306, %v5420
      %v6160 = vmul.f32 %v2308, %v5422
      %v6161 = vmul.f32 %v2659, %v5424
      %v6162 = vmul.f32 %v2661, %v5426
      %v6163 = vmul.f32 %v1606, %v5428
      %v6164 = vmul.f32 %v1608, %v5430
      %v6165 = vmul.f32 %v1959, %v5432
      %v6166 = vmul.f32 %v1961, %v5434
      %v6167 = vmul.f32 %v2312, %v5436
      %v6168 = vmul.f32 %v2314, %v5438
      %v6169 = vmul.f32 %v2665, %v5440
      %v6170 = vmul.f32 %v2667, %v5442
      %v6171 = vmul.f32 %v1610, %v5444
      %v6172 = vmul.f32 %v1612, %v5446
      %v6173 = vmul.f32 %v1963, %v5448
      %v6174 = vmul.f32 %v1965, %v5450
      %v6175 = vmul.f32 %v2316, %v5452
      %v6176 = vmul.f32 %v2318, %v5454
      %v6177 = vmul.f32 %v2669, %v5456
      %v6178 = vmul.f32 %v2671, %v5458
      %v6179 = vmul.f32 %v1616, %v5460
      %v6180 = vmul.f32 %v1618, %v5462
      %v6181 = vmul.f32 %v1969, %v5464
      %v6182 = vmul.f32 %v1971, %v5466
      %v6183 = vmul.f32 %v2322, %v5468
      %v6184 = vmul.f32 %v2324, %v5470
      %v6185 = vmul.f32 %v2675, %v5472
      %v6186 = vmul.f32 %v2677, %v5474
      %v6187 = vmul.f32 %v1620, %v5476
      %v6188 = vmul.f32 %v1622, %v5478
      %v6189 = vmul.f32 %v1973, %v5480
      %v6190 = vmul.f32 %v1975, %v5482
      %v6191 = vmul.f32 %v2326, %v5484
      %v6192 = vmul.f32 %v2328, %v5486
      %v6193 = vmul.f32 %v2679, %v5488
      %v6194 = vmul.f32 %v2681, %v5490
      %v6195 = vmul.f32 %v1626, %v5492
      %v6196 = vmul.f32 %v1628, %v5494
      %v6197 = vmul.f32 %v1979, %v5496
      %v6198 = vmul.f32 %v1981, %v5498
      %v6199 = vmul.f32 %v2332, %v5500
      %v6200 = vmul.f32 %v2334, %v5502
      %v6201 = vmul.f32 %v2685, %v5504
      %v6202 = vmul.f32 %v2687, %v5506
      %v6203 = vmul.f32 %v1630, %v5508
      %v6204 = vmul.f32 %v1632, %v5510
      %v6205 = vmul.f32 %v1983, %v5512
      %v6206 = vmul.f32 %v1985, %v5514
      %v6207 = vmul.f32 %v2336, %v5516
      %v6208 = vmul.f32 %v2338, %v5518
      %v6209 = vmul.f32 %v2689, %v5520
      %v6210 = vmul.f32 %v2691, %v5522
      %v6211 = vmul.f32 %v1636, %v5524
      %v6212 = vmul.f32 %v1638, %v5526
      %v6213 = vmul.f32 %v1989, %v5528
      %v6214 = vmul.f32 %v1991, %v5530
      %v6215 = vmul.f32 %v2342, %v5532
      %v6216 = vmul.f32 %v2344, %v5534
      %v6217 = vmul.f32 %v2695, %v5536
      %v6218 = vmul.f32 %v2697, %v5538
      %v6219 = vmul.f32 %v1640, %v5540
      %v6220 = vmul.f32 %v1642, %v5542
      %v6221 = vmul.f32 %v1993, %v5544
      %v6222 = vmul.f32 %v1995, %v5546
      %v6223 = vmul.f32 %v2346, %v5548
      %v6224 = vmul.f32 %v2348, %v5550
      %v6225 = vmul.f32 %v2699, %v5552
      %v6226 = vmul.f32 %v2701, %v5554
      %v6227 = vmul.f32 %v1646, %v5556
      %v6228 = vmul.f32 %v1648, %v5558
      %v6229 = vmul.f32 %v1999, %v5560
      %v6230 = vmul.f32 %v2001, %v5562
      %v6231 = vmul.f32 %v2352, %v5564
      %v6232 = vmul.f32 %v2354, %v5566
      %v6233 = vmul.f32 %v2705, %v5568
      %v6234 = vmul.f32 %v2707, %v5570
      %v6235 = vmul.f32 %v1650, %v5572
      %v6236 = vmul.f32 %v1652, %v5574
      %v6237 = vmul.f32 %v2003, %v5576
      %v6238 = vmul.f32 %v2005, %v5578
      %v6239 = vmul.f32 %v2356, %v5580
      %v6240 = vmul.f32 %v2358, %v5582
      %v6241 = vmul.f32 %v2709, %v5584
      %v6242 = vmul.f32 %v2711, %v5586
      %v6243 = vmul.f32 %v1656, %v5588
      %v6244 = vmul.f32 %v1658, %v5590
      %v6245 = vmul.f32 %v2009, %v5592
      %v6246 = vmul.f32 %v2011, %v5594
      %v6247 = vmul.f32 %v2362, %v5596
      %v6248 = vmul.f32 %v2364, %v5598
      %v6249 = vmul.f32 %v2715, %v5600
      %v6250 = vmul.f32 %v2717, %v5602
      %v6251 = vmul.f32 %v1660, %v5604
      %v6252 = vmul.f32 %v1662, %v5606
      %v6253 = vmul.f32 %v2013, %v5608
      %v6254 = vmul.f32 %v2015, %v5610
      %v6255 = vmul.f32 %v2366, %v5612
      %v6256 = vmul.f32 %v2368, %v5614
      %v6257 = vmul.f32 %v2719, %v5616
      %v6258 = vmul.f32 %v2721, %v5618
      %v6259 = vmul.f32 %v1666, %v5620
      %v6260 = vmul.f32 %v1668, %v5622
      %v6261 = vmul.f32 %v2019, %v5624
      %v6262 = vmul.f32 %v2021, %v5626
      %v6263 = vmul.f32 %v2372, %v5628
      %v6264 = vmul.f32 %v2374, %v5630
      %v6265 = vmul.f32 %v2725, %v5632
      %v6266 = vmul.f32 %v2727, %v5634
      %v6267 = vmul.f32 %v1670, %v5636
      %v6268 = vmul.f32 %v1672, %v5638
      %v6269 = vmul.f32 %v2023, %v5640
      %v6270 = vmul.f32 %v2025, %v5642
      %v6271 = vmul.f32 %v2376, %v5644
      %v6272 = vmul.f32 %v2378, %v5646
      %v6273 = vmul.f32 %v2729, %v5648
      %v6274 = vmul.f32 %v2731, %v5650
      %v6275 = vmul.f32 %v1676, %v5652
      %v6276 = vmul.f32 %v1678, %v5654
      %v6277 = vmul.f32 %v2029, %v5656
      %v6278 = vmul.f32 %v2031, %v5658
      %v6279 = vmul.f32 %v2382, %v5660
      %v6280 = vmul.f32 %v2384, %v5662
      %v6281 = vmul.f32 %v2735, %v5664
      %v6282 = vmul.f32 %v2737, %v5666
      %v6283 = vmul.f32 %v1680, %v5668
      %v6284 = vmul.f32 %v1682, %v5670
      %v6285 = vmul.f32 %v2033, %v5672
      %v6286 = vmul.f32 %v2035, %v5674
      %v6287 = vmul.f32 %v2386, %v5676
      %v6288 = vmul.f32 %v2388, %v5678
      %v6289 = vmul.f32 %v2739, %v5680
      %v6290 = vmul.f32 %v2741, %v5682
      %v6291 = vmul.f32 %v1686, %v5684
      %v6292 = vmul.f32 %v1688, %v5686
      %v6293 = vmul.f32 %v2039, %v5688
      %v6294 = vmul.f32 %v2041, %v5690
      %v6295 = vmul.f32 %v2392, %v5692
      %v6296 = vmul.f32 %v2394, %v5694
      %v6297 = vmul.f32 %v2745, %v5696
      %v6298 = vmul.f32 %v2747, %v5698
      %v6299 = vmul.f32 %v1690, %v5700
      %v6300 = vmul.f32 %v1692, %v5702
      %v6301 = vmul.f32 %v2043, %v5704
      %v6302 = vmul.f32 %v2045, %v5706
      %v6303 = vmul.f32 %v2396, %v5708
      %v6304 = vmul.f32 %v2398, %v5710
      %v6305 = vmul.f32 %v2749, %v5712
      %v6306 = vmul.f32 %v2751, %v5714
      %v6307 = vmul.f32 %v1696, %v5716
      %v6308 = vmul.f32 %v1698, %v5718
      %v6309 = vmul.f32 %v2049, %v5720
      %v6310 = vmul.f32 %v2051, %v5722
      %v6311 = vmul.f32 %v2402, %v5724
      %v6312 = vmul.f32 %v2404, %v5726
      %v6313 = vmul.f32 %v2755, %v5728
      %v6314 = vmul.f32 %v2757, %v5730
      %v6315 = vmul.f32 %v1700, %v5732
      %v6316 = vmul.f32 %v1702, %v5734
      %v6317 = vmul.f32 %v2053, %v5736
      %v6318 = vmul.f32 %v2055, %v5738
      %v6319 = vmul.f32 %v2406, %v5740
      %v6320 = vmul.f32 %v2408, %v5742
      %v6321 = vmul.f32 %v2759, %v5744
      %v6322 = vmul.f32 %v2761, %v5746
      %v6323 = vmul.f32 %v1706, %v5748
      %v6324 = vmul.f32 %v1708, %v5750
      %v6325 = vmul.f32 %v2059, %v5752
      %v6326 = vmul.f32 %v2061, %v5754
      %v6327 = vmul.f32 %v2412, %v5756
      %v6328 = vmul.f32 %v2414, %v5758
      %v6329 = vmul.f32 %v2765, %v5760
      %v6330 = vmul.f32 %v2767, %v5762
      %v6331 = vmul.f32 %v1710, %v5764
      %v6332 = vmul.f32 %v1712, %v5766
      %v6333 = vmul.f32 %v2063, %v5768
      %v6334 = vmul.f32 %v2065, %v5770
      %v6335 = vmul.f32 %v2416, %v5772
      %v6336 = vmul.f32 %v2418, %v5774
      %v6337 = vmul.f32 %v2769, %v5776
      %v6338 = vmul.f32 %v2771, %v5778
      %v6339 = vmul.f32 %v1716, %v5780
      %v6340 = vmul.f32 %v1718, %v5782
      %v6341 = vmul.f32 %v2069, %v5784
      %v6342 = vmul.f32 %v2071, %v5786
      %v6343 = vmul.f32 %v2422, %v5788
      %v6344 = vmul.f32 %v2424, %v5790
      %v6345 = vmul.f32 %v2775, %v5792
      %v6346 = vmul.f32 %v2777, %v5794
      %v6347 = vmul.f32 %v1720, %v5796
      %v6348 = vmul.f32 %v1722, %v5798
      %v6349 = vmul.f32 %v2073, %v5800
      %v6350 = vmul.f32 %v2075, %v5802
      %v6351 = vmul.f32 %v2426, %v5804
      %v6352 = vmul.f32 %v2428, %v5806
      %v6353 = vmul.f32 %v2779, %v5808
      %v6354 = vmul.f32 %v2781, %v5810
      %v6355 = vmul.f32 %v1726, %v5812
      %v6356 = vmul.f32 %v1728, %v5814
      %v6357 = vmul.f32 %v2079, %v5816
      %v6358 = vmul.f32 %v2081, %v5818
      %v6359 = vmul.f32 %v2432, %v5820
      %v6360 = vmul.f32 %v2434, %v5822
      %v6361 = vmul.f32 %v2785, %v5824
      %v6362 = vmul.f32 %v2787, %v5826
      %v6363 = vmul.f32 %v1730, %v5828
      %v6364 = vmul.f32 %v1732, %v5830
      %v6365 = vmul.f32 %v2083, %v5832
      %v6366 = vmul.f32 %v2085, %v5834
      %v6367 = vmul.f32 %v2436, %v5836
      %v6368 = vmul.f32 %v2438, %v5838
      %v6369 = vmul.f32 %v2789, %v5840
      %v6370 = vmul.f32 %v2791, %v5842
      %v6371 = vmul.f32 %v1736, %v5844
      %v6372 = vmul.f32 %v1738, %v5846
      %v6373 = vmul.f32 %v2089, %v5848
      %v6374 = vmul.f32 %v2091, %v5850
      %v6375 = vmul.f32 %v2442, %v5852
      %v6376 = vmul.f32 %v2444, %v5854
      %v6377 = vmul.f32 %v2795, %v5856
      %v6378 = vmul.f32 %v2797, %v5858
      %v6379 = vmul.f32 %v1740, %v5860
      %v6380 = vmul.f32 %v1742, %v5862
      %v6381 = vmul.f32 %v2093, %v5864
      %v6382 = vmul.f32 %v2095, %v5866
      %v6383 = vmul.f32 %v2446, %v5868
      %v6384 = vmul.f32 %v2448, %v5870
      %v6385 = vmul.f32 %v2799, %v5872
      %v6386 = vmul.f32 %v2801, %v5874
      %6387 = vst [vmem:[%s177] sm:$0xff] %v5875
      %6388 = vst [vmem:[%s177 + $0x8] sm:$0xff] %v5876
      %6389 = vst [vmem:[%s177 + $0x10] sm:$0xff] %v5877
      %6390 = vst [vmem:[%s177 + $0x18] sm:$0xff] %v5878
      %6391 = vst [vmem:[%s177 + $0x20] sm:$0xff] %v5879
      %6392 = vst [vmem:[%s177 + $0x28] sm:$0xff] %v5880
      %6393 = vst [vmem:[%s177 + $0x30] sm:$0xff] %v5881
      %6394 = vst [vmem:[%s177 + $0x38] sm:$0xff] %v5882
      %6395 = vst [vmem:[%s177 + $0x40] sm:$0xff] %v5883
      %6396 = vst [vmem:[%s177 + $0x48] sm:$0xff] %v5884
      %6397 = vst [vmem:[%s177 + $0x50] sm:$0xff] %v5885
      %6398 = vst [vmem:[%s177 + $0x58] sm:$0xff] %v5886
      %6399 = vst [vmem:[%s177 + $0x60] sm:$0xff] %v5887
      %6400 = vst [vmem:[%s177 + $0x68] sm:$0xff] %v5888
      %6401 = vst [vmem:[%s177 + $0x70] sm:$0xff] %v5889
      %6402 = vst [vmem:[%s177 + $0x78] sm:$0xff] %v5890
      %6403 = vst [vmem:[%s177 + $0x80] sm:$0xff] %v5891
      %6404 = vst [vmem:[%s177 + $0x88] sm:$0xff] %v5892
      %6405 = vst [vmem:[%s177 + $0x90] sm:$0xff] %v5893
      %6406 = vst [vmem:[%s177 + $0x98] sm:$0xff] %v5894
      %6407 = vst [vmem:[%s177 + $0xa0] sm:$0xff] %v5895
      %6408 = vst [vmem:[%s177 + $0xa8] sm:$0xff] %v5896
      %6409 = vst [vmem:[%s177 + $0xb0] sm:$0xff] %v5897
      %6410 = vst [vmem:[%s177 + $0xb8] sm:$0xff] %v5898
      %6411 = vst [vmem:[%s177 + $0xc0] sm:$0xff] %v5899
      %6412 = vst [vmem:[%s177 + $0xc8] sm:$0xff] %v5900
      %6413 = vst [vmem:[%s177 + $0xd0] sm:$0xff] %v5901
      %6414 = vst [vmem:[%s177 + $0xd8] sm:$0xff] %v5902
      %6415 = vst [vmem:[%s177 + $0xe0] sm:$0xff] %v5903
      %6416 = vst [vmem:[%s177 + $0xe8] sm:$0xff] %v5904
      %6417 = vst [vmem:[%s177 + $0xf0] sm:$0xff] %v5905
      %6418 = vst [vmem:[%s177 + $0xf8] sm:$0xff] %v5906
      %6419 = vst [vmem:[%s177 + $0x100] sm:$0xff] %v5907
      %6420 = vst [vmem:[%s177 + $0x108] sm:$0xff] %v5908
      %6421 = vst [vmem:[%s177 + $0x110] sm:$0xff] %v5909
      %6422 = vst [vmem:[%s177 + $0x118] sm:$0xff] %v5910
      %6423 = vst [vmem:[%s177 + $0x120] sm:$0xff] %v5911
      %6424 = vst [vmem:[%s177 + $0x128] sm:$0xff] %v5912
      %6425 = vst [vmem:[%s177 + $0x130] sm:$0xff] %v5913
      %6426 = vst [vmem:[%s177 + $0x138] sm:$0xff] %v5914
      %6427 = vst [vmem:[%s177 + $0x140] sm:$0xff] %v5915
      %6428 = vst [vmem:[%s177 + $0x148] sm:$0xff] %v5916
      %6429 = vst [vmem:[%s177 + $0x150] sm:$0xff] %v5917
      %6430 = vst [vmem:[%s177 + $0x158] sm:$0xff] %v5918
      %6431 = vst [vmem:[%s177 + $0x160] sm:$0xff] %v5919
      %6432 = vst [vmem:[%s177 + $0x168] sm:$0xff] %v5920
      %6433 = vst [vmem:[%s177 + $0x170] sm:$0xff] %v5921
      %6434 = vst [vmem:[%s177 + $0x178] sm:$0xff] %v5922
      %6435 = vst [vmem:[%s177 + $0x180] sm:$0xff] %v5923
      %6436 = vst [vmem:[%s177 + $0x188] sm:$0xff] %v5924
      %6437 = vst [vmem:[%s177 + $0x190] sm:$0xff] %v5925
      %6438 = vst [vmem:[%s177 + $0x198] sm:$0xff] %v5926
      %6439 = vst [vmem:[%s177 + $0x1a0] sm:$0xff] %v5927
      %6440 = vst [vmem:[%s177 + $0x1a8] sm:$0xff] %v5928
      %6441 = vst [vmem:[%s177 + $0x1b0] sm:$0xff] %v5929
      %6442 = vst [vmem:[%s177 + $0x1b8] sm:$0xff] %v5930
      %6443 = vst [vmem:[%s177 + $0x1c0] sm:$0xff] %v5931
      %6444 = vst [vmem:[%s177 + $0x1c8] sm:$0xff] %v5932
      %6445 = vst [vmem:[%s177 + $0x1d0] sm:$0xff] %v5933
      %6446 = vst [vmem:[%s177 + $0x1d8] sm:$0xff] %v5934
      %6447 = vst [vmem:[%s177 + $0x1e0] sm:$0xff] %v5935
      %6448 = vst [vmem:[%s177 + $0x1e8] sm:$0xff] %v5936
      %6449 = vst [vmem:[%s177 + $0x1f0] sm:$0xff] %v5937
      %6450 = vst [vmem:[%s177 + $0x1f8] sm:$0xff] %v5938
      %6451 = vst [vmem:[%s177 + $0x200] sm:$0xff] %v5939
      %6452 = vst [vmem:[%s177 + $0x208] sm:$0xff] %v5940
      %6453 = vst [vmem:[%s177 + $0x210] sm:$0xff] %v5941
      %6454 = vst [vmem:[%s177 + $0x218] sm:$0xff] %v5942
      %6455 = vst [vmem:[%s177 + $0x220] sm:$0xff] %v5943
      %6456 = vst [vmem:[%s177 + $0x228] sm:$0xff] %v5944
      %6457 = vst [vmem:[%s177 + $0x230] sm:$0xff] %v5945
      %6458 = vst [vmem:[%s177 + $0x238] sm:$0xff] %v5946
      %6459 = vst [vmem:[%s177 + $0x240] sm:$0xff] %v5947
      %6460 = vst [vmem:[%s177 + $0x248] sm:$0xff] %v5948
      %6461 = vst [vmem:[%s177 + $0x250] sm:$0xff] %v5949
      %6462 = vst [vmem:[%s177 + $0x258] sm:$0xff] %v5950
      %6463 = vst [vmem:[%s177 + $0x260] sm:$0xff] %v5951
      %6464 = vst [vmem:[%s177 + $0x268] sm:$0xff] %v5952
      %6465 = vst [vmem:[%s177 + $0x270] sm:$0xff] %v5953
      %6466 = vst [vmem:[%s177 + $0x278] sm:$0xff] %v5954
      %6467 = vst [vmem:[%s177 + $0x280] sm:$0xff] %v5955
      %6468 = vst [vmem:[%s177 + $0x288] sm:$0xff] %v5956
      %6469 = vst [vmem:[%s177 + $0x290] sm:$0xff] %v5957
      %6470 = vst [vmem:[%s177 + $0x298] sm:$0xff] %v5958
      %6471 = vst [vmem:[%s177 + $0x2a0] sm:$0xff] %v5959
      %6472 = vst [vmem:[%s177 + $0x2a8] sm:$0xff] %v5960
      %6473 = vst [vmem:[%s177 + $0x2b0] sm:$0xff] %v5961
      %6474 = vst [vmem:[%s177 + $0x2b8] sm:$0xff] %v5962
      %6475 = vst [vmem:[%s177 + $0x2c0] sm:$0xff] %v5963
      %6476 = vst [vmem:[%s177 + $0x2c8] sm:$0xff] %v5964
      %6477 = vst [vmem:[%s177 + $0x2d0] sm:$0xff] %v5965
      %6478 = vst [vmem:[%s177 + $0x2d8] sm:$0xff] %v5966
      %6479 = vst [vmem:[%s177 + $0x2e0] sm:$0xff] %v5967
      %6480 = vst [vmem:[%s177 + $0x2e8] sm:$0xff] %v5968
      %6481 = vst [vmem:[%s177 + $0x2f0] sm:$0xff] %v5969
      %6482 = vst [vmem:[%s177 + $0x2f8] sm:$0xff] %v5970
      %6483 = vst [vmem:[%s177 + $0x300] sm:$0xff] %v5971
      %6484 = vst [vmem:[%s177 + $0x308] sm:$0xff] %v5972
      %6485 = vst [vmem:[%s177 + $0x310] sm:$0xff] %v5973
      %6486 = vst [vmem:[%s177 + $0x318] sm:$0xff] %v5974
      %6487 = vst [vmem:[%s177 + $0x320] sm:$0xff] %v5975
      %6488 = vst [vmem:[%s177 + $0x328] sm:$0xff] %v5976
      %6489 = vst [vmem:[%s177 + $0x330] sm:$0xff] %v5977
      %6490 = vst [vmem:[%s177 + $0x338] sm:$0xff] %v5978
      %6491 = vst [vmem:[%s177 + $0x340] sm:$0xff] %v5979
      %6492 = vst [vmem:[%s177 + $0x348] sm:$0xff] %v5980
      %6493 = vst [vmem:[%s177 + $0x350] sm:$0xff] %v5981
      %6494 = vst [vmem:[%s177 + $0x358] sm:$0xff] %v5982
      %6495 = vst [vmem:[%s177 + $0x360] sm:$0xff] %v5983
      %6496 = vst [vmem:[%s177 + $0x368] sm:$0xff] %v5984
      %6497 = vst [vmem:[%s177 + $0x370] sm:$0xff] %v5985
      %6498 = vst [vmem:[%s177 + $0x378] sm:$0xff] %v5986
      %6499 = vst [vmem:[%s177 + $0x380] sm:$0xff] %v5987
      %6500 = vst [vmem:[%s177 + $0x388] sm:$0xff] %v5988
      %6501 = vst [vmem:[%s177 + $0x390] sm:$0xff] %v5989
      %6502 = vst [vmem:[%s177 + $0x398] sm:$0xff] %v5990
      %6503 = vst [vmem:[%s177 + $0x3a0] sm:$0xff] %v5991
      %6504 = vst [vmem:[%s177 + $0x3a8] sm:$0xff] %v5992
      %6505 = vst [vmem:[%s177 + $0x3b0] sm:$0xff] %v5993
      %6506 = vst [vmem:[%s177 + $0x3b8] sm:$0xff] %v5994
      %6507 = vst [vmem:[%s177 + $0x3c0] sm:$0xff] %v5995
      %6508 = vst [vmem:[%s177 + $0x3c8] sm:$0xff] %v5996
      %6509 = vst [vmem:[%s177 + $0x3d0] sm:$0xff] %v5997
      %6510 = vst [vmem:[%s177 + $0x3d8] sm:$0xff] %v5998
      %6511 = vst [vmem:[%s177 + $0x3e0] sm:$0xff] %v5999
      %6512 = vst [vmem:[%s177 + $0x3e8] sm:$0xff] %v6000
      %6513 = vst [vmem:[%s177 + $0x3f0] sm:$0xff] %v6001
      %6514 = vst [vmem:[%s177 + $0x3f8] sm:$0xff] %v6002
      %6515 = vst [vmem:[%s177 + $0x400] sm:$0xff] %v6003
      %6516 = vst [vmem:[%s177 + $0x408] sm:$0xff] %v6004
      %6517 = vst [vmem:[%s177 + $0x410] sm:$0xff] %v6005
      %6518 = vst [vmem:[%s177 + $0x418] sm:$0xff] %v6006
      %6519 = vst [vmem:[%s177 + $0x420] sm:$0xff] %v6007
      %6520 = vst [vmem:[%s177 + $0x428] sm:$0xff] %v6008
      %6521 = vst [vmem:[%s177 + $0x430] sm:$0xff] %v6009
      %6522 = vst [vmem:[%s177 + $0x438] sm:$0xff] %v6010
      %6523 = vst [vmem:[%s177 + $0x440] sm:$0xff] %v6011
      %6524 = vst [vmem:[%s177 + $0x448] sm:$0xff] %v6012
      %6525 = vst [vmem:[%s177 + $0x450] sm:$0xff] %v6013
      %6526 = vst [vmem:[%s177 + $0x458] sm:$0xff] %v6014
      %6527 = vst [vmem:[%s177 + $0x460] sm:$0xff] %v6015
      %6528 = vst [vmem:[%s177 + $0x468] sm:$0xff] %v6016
      %6529 = vst [vmem:[%s177 + $0x470] sm:$0xff] %v6017
      %6530 = vst [vmem:[%s177 + $0x478] sm:$0xff] %v6018
      %6531 = vst [vmem:[%s177 + $0x480] sm:$0xff] %v6019
      %6532 = vst [vmem:[%s177 + $0x488] sm:$0xff] %v6020
      %6533 = vst [vmem:[%s177 + $0x490] sm:$0xff] %v6021
      %6534 = vst [vmem:[%s177 + $0x498] sm:$0xff] %v6022
      %6535 = vst [vmem:[%s177 + $0x4a0] sm:$0xff] %v6023
      %6536 = vst [vmem:[%s177 + $0x4a8] sm:$0xff] %v6024
      %6537 = vst [vmem:[%s177 + $0x4b0] sm:$0xff] %v6025
      %6538 = vst [vmem:[%s177 + $0x4b8] sm:$0xff] %v6026
      %6539 = vst [vmem:[%s177 + $0x4c0] sm:$0xff] %v6027
      %6540 = vst [vmem:[%s177 + $0x4c8] sm:$0xff] %v6028
      %6541 = vst [vmem:[%s177 + $0x4d0] sm:$0xff] %v6029
      %6542 = vst [vmem:[%s177 + $0x4d8] sm:$0xff] %v6030
      %6543 = vst [vmem:[%s177 + $0x4e0] sm:$0xff] %v6031
      %6544 = vst [vmem:[%s177 + $0x4e8] sm:$0xff] %v6032
      %6545 = vst [vmem:[%s177 + $0x4f0] sm:$0xff] %v6033
      %6546 = vst [vmem:[%s177 + $0x4f8] sm:$0xff] %v6034
      %6547 = vst [vmem:[%s177 + $0x500] sm:$0xff] %v6035
      %6548 = vst [vmem:[%s177 + $0x508] sm:$0xff] %v6036
      %6549 = vst [vmem:[%s177 + $0x510] sm:$0xff] %v6037
      %6550 = vst [vmem:[%s177 + $0x518] sm:$0xff] %v6038
      %6551 = vst [vmem:[%s177 + $0x520] sm:$0xff] %v6039
      %6552 = vst [vmem:[%s177 + $0x528] sm:$0xff] %v6040
      %6553 = vst [vmem:[%s177 + $0x530] sm:$0xff] %v6041
      %6554 = vst [vmem:[%s177 + $0x538] sm:$0xff] %v6042
      %6555 = vst [vmem:[%s177 + $0x540] sm:$0xff] %v6043
      %6556 = vst [vmem:[%s177 + $0x548] sm:$0xff] %v6044
      %6557 = vst [vmem:[%s177 + $0x550] sm:$0xff] %v6045
      %6558 = vst [vmem:[%s177 + $0x558] sm:$0xff] %v6046
      %6559 = vst [vmem:[%s177 + $0x560] sm:$0xff] %v6047
      %6560 = vst [vmem:[%s177 + $0x568] sm:$0xff] %v6048
      %6561 = vst [vmem:[%s177 + $0x570] sm:$0xff] %v6049
      %6562 = vst [vmem:[%s177 + $0x578] sm:$0xff] %v6050
      %6563 = vst [vmem:[%s177 + $0x580] sm:$0xff] %v6051
      %6564 = vst [vmem:[%s177 + $0x588] sm:$0xff] %v6052
      %6565 = vst [vmem:[%s177 + $0x590] sm:$0xff] %v6053
      %6566 = vst [vmem:[%s177 + $0x598] sm:$0xff] %v6054
      %6567 = vst [vmem:[%s177 + $0x5a0] sm:$0xff] %v6055
      %6568 = vst [vmem:[%s177 + $0x5a8] sm:$0xff] %v6056
      %6569 = vst [vmem:[%s177 + $0x5b0] sm:$0xff] %v6057
      %6570 = vst [vmem:[%s177 + $0x5b8] sm:$0xff] %v6058
      %6571 = vst [vmem:[%s177 + $0x5c0] sm:$0xff] %v6059
      %6572 = vst [vmem:[%s177 + $0x5c8] sm:$0xff] %v6060
      %6573 = vst [vmem:[%s177 + $0x5d0] sm:$0xff] %v6061
      %6574 = vst [vmem:[%s177 + $0x5d8] sm:$0xff] %v6062
      %6575 = vst [vmem:[%s177 + $0x5e0] sm:$0xff] %v6063
      %6576 = vst [vmem:[%s177 + $0x5e8] sm:$0xff] %v6064
      %6577 = vst [vmem:[%s177 + $0x5f0] sm:$0xff] %v6065
      %6578 = vst [vmem:[%s177 + $0x5f8] sm:$0xff] %v6066
      %6579 = vst [vmem:[%s177 + $0x600] sm:$0xff] %v6067
      %6580 = vst [vmem:[%s177 + $0x608] sm:$0xff] %v6068
      %6581 = vst [vmem:[%s177 + $0x610] sm:$0xff] %v6069
      %6582 = vst [vmem:[%s177 + $0x618] sm:$0xff] %v6070
      %6583 = vst [vmem:[%s177 + $0x620] sm:$0xff] %v6071
      %6584 = vst [vmem:[%s177 + $0x628] sm:$0xff] %v6072
      %6585 = vst [vmem:[%s177 + $0x630] sm:$0xff] %v6073
      %6586 = vst [vmem:[%s177 + $0x638] sm:$0xff] %v6074
      %6587 = vst [vmem:[%s177 + $0x640] sm:$0xff] %v6075
      %6588 = vst [vmem:[%s177 + $0x648] sm:$0xff] %v6076
      %6589 = vst [vmem:[%s177 + $0x650] sm:$0xff] %v6077
      %6590 = vst [vmem:[%s177 + $0x658] sm:$0xff] %v6078
      %6591 = vst [vmem:[%s177 + $0x660] sm:$0xff] %v6079
      %6592 = vst [vmem:[%s177 + $0x668] sm:$0xff] %v6080
      %6593 = vst [vmem:[%s177 + $0x670] sm:$0xff] %v6081
      %6594 = vst [vmem:[%s177 + $0x678] sm:$0xff] %v6082
      %6595 = vst [vmem:[%s177 + $0x680] sm:$0xff] %v6083
      %6596 = vst [vmem:[%s177 + $0x688] sm:$0xff] %v6084
      %6597 = vst [vmem:[%s177 + $0x690] sm:$0xff] %v6085
      %6598 = vst [vmem:[%s177 + $0x698] sm:$0xff] %v6086
      %6599 = vst [vmem:[%s177 + $0x6a0] sm:$0xff] %v6087
      %6600 = vst [vmem:[%s177 + $0x6a8] sm:$0xff] %v6088
      %6601 = vst [vmem:[%s177 + $0x6b0] sm:$0xff] %v6089
      %6602 = vst [vmem:[%s177 + $0x6b8] sm:$0xff] %v6090
      %6603 = vst [vmem:[%s177 + $0x6c0] sm:$0xff] %v6091
      %6604 = vst [vmem:[%s177 + $0x6c8] sm:$0xff] %v6092
      %6605 = vst [vmem:[%s177 + $0x6d0] sm:$0xff] %v6093
      %6606 = vst [vmem:[%s177 + $0x6d8] sm:$0xff] %v6094
      %6607 = vst [vmem:[%s177 + $0x6e0] sm:$0xff] %v6095
      %6608 = vst [vmem:[%s177 + $0x6e8] sm:$0xff] %v6096
      %6609 = vst [vmem:[%s177 + $0x6f0] sm:$0xff] %v6097
      %6610 = vst [vmem:[%s177 + $0x6f8] sm:$0xff] %v6098
      %6611 = vst [vmem:[%s177 + $0x700] sm:$0xff] %v6099
      %6612 = vst [vmem:[%s177 + $0x708] sm:$0xff] %v6100
      %6613 = vst [vmem:[%s177 + $0x710] sm:$0xff] %v6101
      %6614 = vst [vmem:[%s177 + $0x718] sm:$0xff] %v6102
      %6615 = vst [vmem:[%s177 + $0x720] sm:$0xff] %v6103
      %6616 = vst [vmem:[%s177 + $0x728] sm:$0xff] %v6104
      %6617 = vst [vmem:[%s177 + $0x730] sm:$0xff] %v6105
      %6618 = vst [vmem:[%s177 + $0x738] sm:$0xff] %v6106
      %6619 = vst [vmem:[%s177 + $0x740] sm:$0xff] %v6107
      %6620 = vst [vmem:[%s177 + $0x748] sm:$0xff] %v6108
      %6621 = vst [vmem:[%s177 + $0x750] sm:$0xff] %v6109
      %6622 = vst [vmem:[%s177 + $0x758] sm:$0xff] %v6110
      %6623 = vst [vmem:[%s177 + $0x760] sm:$0xff] %v6111
      %6624 = vst [vmem:[%s177 + $0x768] sm:$0xff] %v6112
      %6625 = vst [vmem:[%s177 + $0x770] sm:$0xff] %v6113
      %6626 = vst [vmem:[%s177 + $0x778] sm:$0xff] %v6114
      %6627 = vst [vmem:[%s177 + $0x780] sm:$0xff] %v6115
      %6628 = vst [vmem:[%s177 + $0x788] sm:$0xff] %v6116
      %6629 = vst [vmem:[%s177 + $0x790] sm:$0xff] %v6117
      %6630 = vst [vmem:[%s177 + $0x798] sm:$0xff] %v6118
      %6631 = vst [vmem:[%s177 + $0x7a0] sm:$0xff] %v6119
      %6632 = vst [vmem:[%s177 + $0x7a8] sm:$0xff] %v6120
      %6633 = vst [vmem:[%s177 + $0x7b0] sm:$0xff] %v6121
      %6634 = vst [vmem:[%s177 + $0x7b8] sm:$0xff] %v6122
      %6635 = vst [vmem:[%s177 + $0x7c0] sm:$0xff] %v6123
      %6636 = vst [vmem:[%s177 + $0x7c8] sm:$0xff] %v6124
      %6637 = vst [vmem:[%s177 + $0x7d0] sm:$0xff] %v6125
      %6638 = vst [vmem:[%s177 + $0x7d8] sm:$0xff] %v6126
      %6639 = vst [vmem:[%s177 + $0x7e0] sm:$0xff] %v6127
      %6640 = vst [vmem:[%s177 + $0x7e8] sm:$0xff] %v6128
      %6641 = vst [vmem:[%s177 + $0x7f0] sm:$0xff] %v6129
      %6642 = vst [vmem:[%s177 + $0x7f8] sm:$0xff] %v6130
      %6643 = vst [vmem:[%s177 + $0x800] sm:$0xff] %v6131
      %6644 = vst [vmem:[%s177 + $0x808] sm:$0xff] %v6132
      %6645 = vst [vmem:[%s177 + $0x810] sm:$0xff] %v6133
      %6646 = vst [vmem:[%s177 + $0x818] sm:$0xff] %v6134
      %6647 = vst [vmem:[%s177 + $0x820] sm:$0xff] %v6135
      %6648 = vst [vmem:[%s177 + $0x828] sm:$0xff] %v6136
      %6649 = vst [vmem:[%s177 + $0x830] sm:$0xff] %v6137
      %6650 = vst [vmem:[%s177 + $0x838] sm:$0xff] %v6138
      %6651 = vst [vmem:[%s177 + $0x840] sm:$0xff] %v6139
      %6652 = vst [vmem:[%s177 + $0x848] sm:$0xff] %v6140
      %6653 = vst [vmem:[%s177 + $0x850] sm:$0xff] %v6141
      %6654 = vst [vmem:[%s177 + $0x858] sm:$0xff] %v6142
      %6655 = vst [vmem:[%s177 + $0x860] sm:$0xff] %v6143
      %6656 = vst [vmem:[%s177 + $0x868] sm:$0xff] %v6144
      %6657 = vst [vmem:[%s177 + $0x870] sm:$0xff] %v6145
      %6658 = vst [vmem:[%s177 + $0x878] sm:$0xff] %v6146
      %6659 = vst [vmem:[%s177 + $0x880] sm:$0xff] %v6147
      %6660 = vst [vmem:[%s177 + $0x888] sm:$0xff] %v6148
      %6661 = vst [vmem:[%s177 + $0x890] sm:$0xff] %v6149
      %6662 = vst [vmem:[%s177 + $0x898] sm:$0xff] %v6150
      %6663 = vst [vmem:[%s177 + $0x8a0] sm:$0xff] %v6151
      %6664 = vst [vmem:[%s177 + $0x8a8] sm:$0xff] %v6152
      %6665 = vst [vmem:[%s177 + $0x8b0] sm:$0xff] %v6153
      %6666 = vst [vmem:[%s177 + $0x8b8] sm:$0xff] %v6154
      %6667 = vst [vmem:[%s177 + $0x8c0] sm:$0xff] %v6155
      %6668 = vst [vmem:[%s177 + $0x8c8] sm:$0xff] %v6156
      %6669 = vst [vmem:[%s177 + $0x8d0] sm:$0xff] %v6157
      %6670 = vst [vmem:[%s177 + $0x8d8] sm:$0xff] %v6158
      %6671 = vst [vmem:[%s177 + $0x8e0] sm:$0xff] %v6159
      %6672 = vst [vmem:[%s177 + $0x8e8] sm:$0xff] %v6160
      %6673 = vst [vmem:[%s177 + $0x8f0] sm:$0xff] %v6161
      %6674 = vst [vmem:[%s177 + $0x8f8] sm:$0xff] %v6162
      %6675 = vst [vmem:[%s177 + $0x900] sm:$0xff] %v6163
      %6676 = vst [vmem:[%s177 + $0x908] sm:$0xff] %v6164
      %6677 = vst [vmem:[%s177 + $0x910] sm:$0xff] %v6165
      %6678 = vst [vmem:[%s177 + $0x918] sm:$0xff] %v6166
      %6679 = vst [vmem:[%s177 + $0x920] sm:$0xff] %v6167
      %6680 = vst [vmem:[%s177 + $0x928] sm:$0xff] %v6168
      %6681 = vst [vmem:[%s177 + $0x930] sm:$0xff] %v6169
      %6682 = vst [vmem:[%s177 + $0x938] sm:$0xff] %v6170
      %6683 = vst [vmem:[%s177 + $0x940] sm:$0xff] %v6171
      %6684 = vst [vmem:[%s177 + $0x948] sm:$0xff] %v6172
      %6685 = vst [vmem:[%s177 + $0x950] sm:$0xff] %v6173
      %6686 = vst [vmem:[%s177 + $0x958] sm:$0xff] %v6174
      %6687 = vst [vmem:[%s177 + $0x960] sm:$0xff] %v6175
      %6688 = vst [vmem:[%s177 + $0x968] sm:$0xff] %v6176
      %6689 = vst [vmem:[%s177 + $0x970] sm:$0xff] %v6177
      %6690 = vst [vmem:[%s177 + $0x978] sm:$0xff] %v6178
      %6691 = vst [vmem:[%s177 + $0x980] sm:$0xff] %v6179
      %6692 = vst [vmem:[%s177 + $0x988] sm:$0xff] %v6180
      %6693 = vst [vmem:[%s177 + $0x990] sm:$0xff] %v6181
      %6694 = vst [vmem:[%s177 + $0x998] sm:$0xff] %v6182
      %6695 = vst [vmem:[%s177 + $0x9a0] sm:$0xff] %v6183
      %6696 = vst [vmem:[%s177 + $0x9a8] sm:$0xff] %v6184
      %6697 = vst [vmem:[%s177 + $0x9b0] sm:$0xff] %v6185
      %6698 = vst [vmem:[%s177 + $0x9b8] sm:$0xff] %v6186
      %6699 = vst [vmem:[%s177 + $0x9c0] sm:$0xff] %v6187
      %6700 = vst [vmem:[%s177 + $0x9c8] sm:$0xff] %v6188
      %6701 = vst [vmem:[%s177 + $0x9d0] sm:$0xff] %v6189
      %6702 = vst [vmem:[%s177 + $0x9d8] sm:$0xff] %v6190
      %6703 = vst [vmem:[%s177 + $0x9e0] sm:$0xff] %v6191
      %6704 = vst [vmem:[%s177 + $0x9e8] sm:$0xff] %v6192
      %6705 = vst [vmem:[%s177 + $0x9f0] sm:$0xff] %v6193
      %6706 = vst [vmem:[%s177 + $0x9f8] sm:$0xff] %v6194
      %6707 = vst [vmem:[%s177 + $0xa00] sm:$0xff] %v6195
      %6708 = vst [vmem:[%s177 + $0xa08] sm:$0xff] %v6196
      %6709 = vst [vmem:[%s177 + $0xa10] sm:$0xff] %v6197
      %6710 = vst [vmem:[%s177 + $0xa18] sm:$0xff] %v6198
      %6711 = vst [vmem:[%s177 + $0xa20] sm:$0xff] %v6199
      %6712 = vst [vmem:[%s177 + $0xa28] sm:$0xff] %v6200
      %6713 = vst [vmem:[%s177 + $0xa30] sm:$0xff] %v6201
      %6714 = vst [vmem:[%s177 + $0xa38] sm:$0xff] %v6202
      %6715 = vst [vmem:[%s177 + $0xa40] sm:$0xff] %v6203
      %6716 = vst [vmem:[%s177 + $0xa48] sm:$0xff] %v6204
      %6717 = vst [vmem:[%s177 + $0xa50] sm:$0xff] %v6205
      %6718 = vst [vmem:[%s177 + $0xa58] sm:$0xff] %v6206
      %6719 = vst [vmem:[%s177 + $0xa60] sm:$0xff] %v6207
      %6720 = vst [vmem:[%s177 + $0xa68] sm:$0xff] %v6208
      %6721 = vst [vmem:[%s177 + $0xa70] sm:$0xff] %v6209
      %6722 = vst [vmem:[%s177 + $0xa78] sm:$0xff] %v6210
      %6723 = vst [vmem:[%s177 + $0xa80] sm:$0xff] %v6211
      %6724 = vst [vmem:[%s177 + $0xa88] sm:$0xff] %v6212
      %6725 = vst [vmem:[%s177 + $0xa90] sm:$0xff] %v6213
      %6726 = vst [vmem:[%s177 + $0xa98] sm:$0xff] %v6214
      %6727 = vst [vmem:[%s177 + $0xaa0] sm:$0xff] %v6215
      %6728 = vst [vmem:[%s177 + $0xaa8] sm:$0xff] %v6216
      %6729 = vst [vmem:[%s177 + $0xab0] sm:$0xff] %v6217
      %6730 = vst [vmem:[%s177 + $0xab8] sm:$0xff] %v6218
      %6731 = vst [vmem:[%s177 + $0xac0] sm:$0xff] %v6219
      %6732 = vst [vmem:[%s177 + $0xac8] sm:$0xff] %v6220
      %6733 = vst [vmem:[%s177 + $0xad0] sm:$0xff] %v6221
      %6734 = vst [vmem:[%s177 + $0xad8] sm:$0xff] %v6222
      %6735 = vst [vmem:[%s177 + $0xae0] sm:$0xff] %v6223
      %6736 = vst [vmem:[%s177 + $0xae8] sm:$0xff] %v6224
      %6737 = vst [vmem:[%s177 + $0xaf0] sm:$0xff] %v6225
      %6738 = vst [vmem:[%s177 + $0xaf8] sm:$0xff] %v6226
      %6739 = vst [vmem:[%s177 + $0xb00] sm:$0xff] %v6227
      %6740 = vst [vmem:[%s177 + $0xb08] sm:$0xff] %v6228
      %6741 = vst [vmem:[%s177 + $0xb10] sm:$0xff] %v6229
      %6742 = vst [vmem:[%s177 + $0xb18] sm:$0xff] %v6230
      %6743 = vst [vmem:[%s177 + $0xb20] sm:$0xff] %v6231
      %6744 = vst [vmem:[%s177 + $0xb28] sm:$0xff] %v6232
      %6745 = vst [vmem:[%s177 + $0xb30] sm:$0xff] %v6233
      %6746 = vst [vmem:[%s177 + $0xb38] sm:$0xff] %v6234
      %6747 = vst [vmem:[%s177 + $0xb40] sm:$0xff] %v6235
      %6748 = vst [vmem:[%s177 + $0xb48] sm:$0xff] %v6236
      %6749 = vst [vmem:[%s177 + $0xb50] sm:$0xff] %v6237
      %6750 = vst [vmem:[%s177 + $0xb58] sm:$0xff] %v6238
      %6751 = vst [vmem:[%s177 + $0xb60] sm:$0xff] %v6239
      %6752 = vst [vmem:[%s177 + $0xb68] sm:$0xff] %v6240
      %6753 = vst [vmem:[%s177 + $0xb70] sm:$0xff] %v6241
      %6754 = vst [vmem:[%s177 + $0xb78] sm:$0xff] %v6242
      %6755 = vst [vmem:[%s177 + $0xb80] sm:$0xff] %v6243
      %6756 = vst [vmem:[%s177 + $0xb88] sm:$0xff] %v6244
      %6757 = vst [vmem:[%s177 + $0xb90] sm:$0xff] %v6245
      %6758 = vst [vmem:[%s177 + $0xb98] sm:$0xff] %v6246
      %6759 = vst [vmem:[%s177 + $0xba0] sm:$0xff] %v6247
      %6760 = vst [vmem:[%s177 + $0xba8] sm:$0xff] %v6248
      %6761 = vst [vmem:[%s177 + $0xbb0] sm:$0xff] %v6249
      %6762 = vst [vmem:[%s177 + $0xbb8] sm:$0xff] %v6250
      %6763 = vst [vmem:[%s177 + $0xbc0] sm:$0xff] %v6251
      %6764 = vst [vmem:[%s177 + $0xbc8] sm:$0xff] %v6252
      %6765 = vst [vmem:[%s177 + $0xbd0] sm:$0xff] %v6253
      %6766 = vst [vmem:[%s177 + $0xbd8] sm:$0xff] %v6254
      %6767 = vst [vmem:[%s177 + $0xbe0] sm:$0xff] %v6255
      %6768 = vst [vmem:[%s177 + $0xbe8] sm:$0xff] %v6256
      %6769 = vst [vmem:[%s177 + $0xbf0] sm:$0xff] %v6257
      %6770 = vst [vmem:[%s177 + $0xbf8] sm:$0xff] %v6258
      %6771 = vst [vmem:[%s177 + $0xc00] sm:$0xff] %v6259
      %6772 = vst [vmem:[%s177 + $0xc08] sm:$0xff] %v6260
      %6773 = vst [vmem:[%s177 + $0xc10] sm:$0xff] %v6261
      %6774 = vst [vmem:[%s177 + $0xc18] sm:$0xff] %v6262
      %6775 = vst [vmem:[%s177 + $0xc20] sm:$0xff] %v6263
      %6776 = vst [vmem:[%s177 + $0xc28] sm:$0xff] %v6264
      %6777 = vst [vmem:[%s177 + $0xc30] sm:$0xff] %v6265
      %6778 = vst [vmem:[%s177 + $0xc38] sm:$0xff] %v6266
      %6779 = vst [vmem:[%s177 + $0xc40] sm:$0xff] %v6267
      %6780 = vst [vmem:[%s177 + $0xc48] sm:$0xff] %v6268
      %6781 = vst [vmem:[%s177 + $0xc50] sm:$0xff] %v6269
      %6782 = vst [vmem:[%s177 + $0xc58] sm:$0xff] %v6270
      %6783 = vst [vmem:[%s177 + $0xc60] sm:$0xff] %v6271
      %6784 = vst [vmem:[%s177 + $0xc68] sm:$0xff] %v6272
      %6785 = vst [vmem:[%s177 + $0xc70] sm:$0xff] %v6273
      %6786 = vst [vmem:[%s177 + $0xc78] sm:$0xff] %v6274
      %6787 = vst [vmem:[%s177 + $0xc80] sm:$0xff] %v6275
      %6788 = vst [vmem:[%s177 + $0xc88] sm:$0xff] %v6276
      %6789 = vst [vmem:[%s177 + $0xc90] sm:$0xff] %v6277
      %6790 = vst [vmem:[%s177 + $0xc98] sm:$0xff] %v6278
      %6791 = vst [vmem:[%s177 + $0xca0] sm:$0xff] %v6279
      %6792 = vst [vmem:[%s177 + $0xca8] sm:$0xff] %v6280
      %6793 = vst [vmem:[%s177 + $0xcb0] sm:$0xff] %v6281
      %6794 = vst [vmem:[%s177 + $0xcb8] sm:$0xff] %v6282
      %6795 = vst [vmem:[%s177 + $0xcc0] sm:$0xff] %v6283
      %6796 = vst [vmem:[%s177 + $0xcc8] sm:$0xff] %v6284
      %6797 = vst [vmem:[%s177 + $0xcd0] sm:$0xff] %v6285
      %6798 = vst [vmem:[%s177 + $0xcd8] sm:$0xff] %v6286
      %6799 = vst [vmem:[%s177 + $0xce0] sm:$0xff] %v6287
      %6800 = vst [vmem:[%s177 + $0xce8] sm:$0xff] %v6288
      %6801 = vst [vmem:[%s177 + $0xcf0] sm:$0xff] %v6289
      %6802 = vst [vmem:[%s177 + $0xcf8] sm:$0xff] %v6290
      %6803 = vst [vmem:[%s177 + $0xd00] sm:$0xff] %v6291
      %6804 = vst [vmem:[%s177 + $0xd08] sm:$0xff] %v6292
      %6805 = vst [vmem:[%s177 + $0xd10] sm:$0xff] %v6293
      %6806 = vst [vmem:[%s177 + $0xd18] sm:$0xff] %v6294
      %6807 = vst [vmem:[%s177 + $0xd20] sm:$0xff] %v6295
      %6808 = vst [vmem:[%s177 + $0xd28] sm:$0xff] %v6296
      %6809 = vst [vmem:[%s177 + $0xd30] sm:$0xff] %v6297
      %6810 = vst [vmem:[%s177 + $0xd38] sm:$0xff] %v6298
      %6811 = vst [vmem:[%s177 + $0xd40] sm:$0xff] %v6299
      %6812 = vst [vmem:[%s177 + $0xd48] sm:$0xff] %v6300
      %6813 = vst [vmem:[%s177 + $0xd50] sm:$0xff] %v6301
      %6814 = vst [vmem:[%s177 + $0xd58] sm:$0xff] %v6302
      %6815 = vst [vmem:[%s177 + $0xd60] sm:$0xff] %v6303
      %6816 = vst [vmem:[%s177 + $0xd68] sm:$0xff] %v6304
      %6817 = vst [vmem:[%s177 + $0xd70] sm:$0xff] %v6305
      %6818 = vst [vmem:[%s177 + $0xd78] sm:$0xff] %v6306
      %6819 = vst [vmem:[%s177 + $0xd80] sm:$0xff] %v6307
      %6820 = vst [vmem:[%s177 + $0xd88] sm:$0xff] %v6308
      %6821 = vst [vmem:[%s177 + $0xd90] sm:$0xff] %v6309
      %6822 = vst [vmem:[%s177 + $0xd98] sm:$0xff] %v6310
      %6823 = vst [vmem:[%s177 + $0xda0] sm:$0xff] %v6311
      %6824 = vst [vmem:[%s177 + $0xda8] sm:$0xff] %v6312
      %6825 = vst [vmem:[%s177 + $0xdb0] sm:$0xff] %v6313
      %6826 = vst [vmem:[%s177 + $0xdb8] sm:$0xff] %v6314
      %6827 = vst [vmem:[%s177 + $0xdc0] sm:$0xff] %v6315
      %6828 = vst [vmem:[%s177 + $0xdc8] sm:$0xff] %v6316
      %6829 = vst [vmem:[%s177 + $0xdd0] sm:$0xff] %v6317
      %6830 = vst [vmem:[%s177 + $0xdd8] sm:$0xff] %v6318
      %6831 = vst [vmem:[%s177 + $0xde0] sm:$0xff] %v6319
      %6832 = vst [vmem:[%s177 + $0xde8] sm:$0xff] %v6320
      %6833 = vst [vmem:[%s177 + $0xdf0] sm:$0xff] %v6321
      %6834 = vst [vmem:[%s177 + $0xdf8] sm:$0xff] %v6322
      %6835 = vst [vmem:[%s177 + $0xe00] sm:$0xff] %v6323
      %6836 = vst [vmem:[%s177 + $0xe08] sm:$0xff] %v6324
      %6837 = vst [vmem:[%s177 + $0xe10] sm:$0xff] %v6325
      %6838 = vst [vmem:[%s177 + $0xe18] sm:$0xff] %v6326
      %6839 = vst [vmem:[%s177 + $0xe20] sm:$0xff] %v6327
      %6840 = vst [vmem:[%s177 + $0xe28] sm:$0xff] %v6328
      %6841 = vst [vmem:[%s177 + $0xe30] sm:$0xff] %v6329
      %6842 = vst [vmem:[%s177 + $0xe38] sm:$0xff] %v6330
      %6843 = vst [vmem:[%s177 + $0xe40] sm:$0xff] %v6331
      %6844 = vst [vmem:[%s177 + $0xe48] sm:$0xff] %v6332
      %6845 = vst [vmem:[%s177 + $0xe50] sm:$0xff] %v6333
      %6846 = vst [vmem:[%s177 + $0xe58] sm:$0xff] %v6334
      %6847 = vst [vmem:[%s177 + $0xe60] sm:$0xff] %v6335
      %6848 = vst [vmem:[%s177 + $0xe68] sm:$0xff] %v6336
      %6849 = vst [vmem:[%s177 + $0xe70] sm:$0xff] %v6337
      %6850 = vst [vmem:[%s177 + $0xe78] sm:$0xff] %v6338
      %6851 = vst [vmem:[%s177 + $0xe80] sm:$0xff] %v6339
      %6852 = vst [vmem:[%s177 + $0xe88] sm:$0xff] %v6340
      %6853 = vst [vmem:[%s177 + $0xe90] sm:$0xff] %v6341
      %6854 = vst [vmem:[%s177 + $0xe98] sm:$0xff] %v6342
      %6855 = vst [vmem:[%s177 + $0xea0] sm:$0xff] %v6343
      %6856 = vst [vmem:[%s177 + $0xea8] sm:$0xff] %v6344
      %6857 = vst [vmem:[%s177 + $0xeb0] sm:$0xff] %v6345
      %6858 = vst [vmem:[%s177 + $0xeb8] sm:$0xff] %v6346
      %6859 = vst [vmem:[%s177 + $0xec0] sm:$0xff] %v6347
      %6860 = vst [vmem:[%s177 + $0xec8] sm:$0xff] %v6348
      %6861 = vst [vmem:[%s177 + $0xed0] sm:$0xff] %v6349
      %6862 = vst [vmem:[%s177 + $0xed8] sm:$0xff] %v6350
      %6863 = vst [vmem:[%s177 + $0xee0] sm:$0xff] %v6351
      %6864 = vst [vmem:[%s177 + $0xee8] sm:$0xff] %v6352
      %6865 = vst [vmem:[%s177 + $0xef0] sm:$0xff] %v6353
      %6866 = vst [vmem:[%s177 + $0xef8] sm:$0xff] %v6354
      %6867 = vst [vmem:[%s177 + $0xf00] sm:$0xff] %v6355
      %6868 = vst [vmem:[%s177 + $0xf08] sm:$0xff] %v6356
      %6869 = vst [vmem:[%s177 + $0xf10] sm:$0xff] %v6357
      %6870 = vst [vmem:[%s177 + $0xf18] sm:$0xff] %v6358
      %6871 = vst [vmem:[%s177 + $0xf20] sm:$0xff] %v6359
      %6872 = vst [vmem:[%s177 + $0xf28] sm:$0xff] %v6360
      %6873 = vst [vmem:[%s177 + $0xf30] sm:$0xff] %v6361
      %6874 = vst [vmem:[%s177 + $0xf38] sm:$0xff] %v6362
      %6875 = vst [vmem:[%s177 + $0xf40] sm:$0xff] %v6363
      %6876 = vst [vmem:[%s177 + $0xf48] sm:$0xff] %v6364
      %6877 = vst [vmem:[%s177 + $0xf50] sm:$0xff] %v6365
      %6878 = vst [vmem:[%s177 + $0xf58] sm:$0xff] %v6366
      %6879 = vst [vmem:[%s177 + $0xf60] sm:$0xff] %v6367
      %6880 = vst [vmem:[%s177 + $0xf68] sm:$0xff] %v6368
      %6881 = vst [vmem:[%s177 + $0xf70] sm:$0xff] %v6369
      %6882 = vst [vmem:[%s177 + $0xf78] sm:$0xff] %v6370
      %6883 = vst [vmem:[%s177 + $0xf80] sm:$0xff] %v6371
      %6884 = vst [vmem:[%s177 + $0xf88] sm:$0xff] %v6372
      %6885 = vst [vmem:[%s177 + $0xf90] sm:$0xff] %v6373
      %6886 = vst [vmem:[%s177 + $0xf98] sm:$0xff] %v6374
      %6887 = vst [vmem:[%s177 + $0xfa0] sm:$0xff] %v6375
      %6888 = vst [vmem:[%s177 + $0xfa8] sm:$0xff] %v6376
      %6889 = vst [vmem:[%s177 + $0xfb0] sm:$0xff] %v6377
      %6890 = vst [vmem:[%s177 + $0xfb8] sm:$0xff] %v6378
      %6891 = vst [vmem:[%s177 + $0xfc0] sm:$0xff] %v6379
      %6892 = vst [vmem:[%s177 + $0xfc8] sm:$0xff] %v6380
      %6893 = vst [vmem:[%s177 + $0xfd0] sm:$0xff] %v6381
      %6894 = vst [vmem:[%s177 + $0xfd8] sm:$0xff] %v6382
      %6895 = vst [vmem:[%s177 + $0xfe0] sm:$0xff] %v6383
      %6896 = vst [vmem:[%s177 + $0xfe8] sm:$0xff] %v6384
      %6897 = vst [vmem:[%s177 + $0xff0] sm:$0xff] %v6385
      %6898 = vst [vmem:[%s177 + $0xff8] sm:$0xff] %v6386
      %s6899 = smul.u32 64, %s14
      %p6900 = scmp.lt.s32.totalorder %s6899, 255
      %s6901 = scalar_select %p6900, %s6899, 255
      %s6902 = smul.addr %s6901, 8
      %s6903 = smul.addr %s6902, 8
      %s6904 = scalar_lea.vmem %s3, %s6903
      // Predicated region
      $region33: #{conv_transpose3d_silu.1} parent=31 // pred_check
        %p6905 = pneg %p100
      $region34: #{conv_transpose3d_silu.1} parent=31 // pred_check_branch
        %6907 = sbr.rel (%p6905) target = $region36
      $region35: #{conv_transpose3d_silu.1} parent=31 // pred_region
        %s6908 = smul.u32 64, %s14
      $region36: #{conv_transpose3d_silu.1} parent=31 // pred_fallthru
        _
    $region32: #{conv_transpose3d_silu.1} parent=5 // pred_fallthru
      _
    %p6909 = scmp.le.s32.totalorder 2, %s9
    // Predicated region
    $region37: #{conv_transpose3d_silu.1} parent=5 // pred_check
      %p6910 = pneg %p6909
    $region38: #{conv_transpose3d_silu.1} parent=5 // pred_check_branch
      %6912 = sbr.rel (%p6910) target = $region40
    $region39: #{conv_transpose3d_silu.1} parent=5 // pred_region
      %s6913 = ssub.s32 %s9, 2
      // Predicated region
      $region41: #{conv_transpose3d_silu.1} parent=39 // pred_check
        %p6914 = pneg %p106
      $region42: #{conv_transpose3d_silu.1} parent=39 // pred_check_branch
        %6916 = sbr.rel (%p6914) target = $region44
      $region43: #{conv_transpose3d_silu.1} parent=39 // pred_region
        %s6917 = smul.u32 64, %s15
        %p6918 = scmp.lt.s32.totalorder %s6917, 255
        %s6919 = scalar_select %p6918, %s6917, 255
        %s6920 = smul.addr %s6919, 8
        %s6921 = smul.addr %s6920, 8
        %s6922 = scalar_lea.vmem %s3, %s6921
      $region44: #{conv_transpose3d_silu.1} parent=39 // pred_fallthru
        _
    $region40: #{conv_transpose3d_silu.1} parent=5 // pred_fallthru
      _
  $region6: #{conv_transpose3d_silu.1} parent=0 // loop_footer
    %s13 = sadd.s32 1, %s9
  $region7: #{conv_transpose3d_silu.1} parent=0 // loop_footer_branch
    %8 = sbr.rel target = $region3
  $region8: #{conv_transpose3d_silu.1} parent=0 // loop_exit
    _

</llo_original>
